<compile_context>
chip_gen: v6e
topology: v6e:2x2x1
jax: 0.10.0
libtpu: 0.0.40
codegen_flags: <defaults>
</compile_context>

<pallas_src>
import numpy as np

import jax
import jax.numpy as jnp
from jax.experimental import pallas as pl
from jax.experimental.pallas import tpu as pltpu

EPS = 1e-5                    # nn.BatchNorm2d default eps
IN_CH, IN_HW = 3, 10          # encoder input is 3 x 10 x 10  (Flatten -> 2*2*64 = 256)
CONV_CFG = ((3, 16, 3), (16, 32, 5), (32, 64, 3))   # (Cin, Cout, K) per Conv2d


def _layer_dims(h0, w0):
    """Per conv layer: (H_in, W_in, Cin, K, OH, OW, Cout) for stride-1 VALID convs."""
    dims, h, w = [], h0, w0
    for cin, cout, k in CONV_CFG:
        oh, ow = h - k + 1, w - k + 1
        dims.append((h, w, cin, k, oh, ow, cout))
        h, w = oh, ow
    return dims


# ---------------------------------------------------------------------------
# Host-side weight preprocessing (done once at init; pure numpy)
# ---------------------------------------------------------------------------
def _conv_band(w_oihw, w_in, ow):
    """Banded conv weight: band[kh, w*Cin+ci, o*Cout+co] = W[co, ci, kh, w-o]."""
    w_np = np.asarray(w_oihw, dtype=np.float32)
    cout, cin, k_h, k_w = w_np.shape
    band = np.zeros((k_h, w_in * cin, ow * cout), dtype=np.float32)
    for kh in range(k_h):
        for o in range(ow):
            for kw in range(k_w):
                w = o + kw
                band[kh, w * cin:(w + 1) * cin, o * cout:(o + 1) * cout] = w_np[:, :, kh, kw].T
    return jnp.asarray(band)


def _lin1_band(l1_w_in_out, c3, oh3, ow3):
    """Linear(2*2*64 -> 128) viewed as a 2x2 valid conv over the (B*OH3, OW3*C3)
    activation.  Rows of l1_w are in PyTorch's NCHW-flatten order (c, h, w)."""
    w_np = np.asarray(l1_w_in_out, dtype=np.float32)          # (OH3*OW3*C3, 128)
    band = np.zeros((oh3, ow3 * c3, w_np.shape[1]), dtype=np.float32)
    for kh in range(oh3):
        for w in range(ow3):
            for ci in range(c3):
                band[kh, w * c3 + ci, :] = w_np[(ci * oh3 + kh) * ow3 + w, :]
    return jnp.asarray(band)


def _group_sum_matrix(c, ow):
    """(OW*C, C) 0/1 matrix: sums the OW lane-groups of a (1, OW*C) row into (1, C)."""
    return jnp.asarray(np.tile(np.eye(c, dtype=np.float32), (ow, 1)))


def _replicate_matrix(c, ow):
    """(C, OW*C) 0/1 matrix: replicates per-channel values across the OW lane groups."""
    return jnp.asarray(np.tile(np.eye(c, dtype=np.float32), (1, ow)))


def prepare_kernel_params(params, h0=IN_HW, w0=IN_HW):
    """Convert PyTorch-layout parameters into the fused kernel's operand list."""
    dims = _layer_dims(h0, w0)
    ops = []
    for li, (h, w, cin, k, oh, ow, cout) in enumerate(dims, start=1):
        bias_t = np.tile(np.asarray(params[f"c{li}_b"], dtype=np.float32), ow)[None, :]
        ops += [
            _conv_band(params[f"c{li}_w"], w, ow),             # (K, W*Cin, OW*Cout)
            jnp.asarray(bias_t),                               # (1, OW*Cout)
            jnp.asarray(params[f"bn{li}_g"], jnp.float32).reshape(1, cout),
            jnp.asarray(params[f"bn{li}_b"], jnp.float32).reshape(1, cout),
            _group_sum_matrix(cout, ow),                       # (OW*Cout, Cout)
            _replicate_matrix(cout, ow),                       # (Cout, OW*Cout)
        ]
    oh3, ow3, c3 = dims[-1][4], dims[-1][5], dims[-1][6]
    ops += [
        _lin1_band(params["l1_w"], c3, oh3, ow3),              # (OH3, OW3*C3, 128)
        jnp.asarray(params["l1_b"], jnp.float32).reshape(1, -1),
        jnp.asarray(params["l2_w"], jnp.float32),
        jnp.asarray(params["l2_b"], jnp.float32).reshape(1, -1),
    ]
    return ops, dims


# ---------------------------------------------------------------------------
# The fused kernel
# ---------------------------------------------------------------------------
def make_encoder_kernel(batch, dims):
    """Build the fused encoder kernel for a fixed batch size / geometry."""
    n_conv = len(dims)
    lin_kh = dims[-1][4]                     # spatial height of the conv3 output (=2)
    n_inputs = 1 + 6 * n_conv + 4            # x + per-conv params + linear params

    def kernel(*refs):
        # refs layout (positional):
        #   refs[0]                       x            (B*H0, W0*Cin0)
        #   refs[1+6l : 7+6l], l=0..2     conv layer l: band, bias_t, gamma, beta, red, rep
        #   refs[1+6*n_conv : n_inputs]   l1w_band, l1_bias, l2_w, l2_bias
        #   refs[n_inputs]                output       (B, encoded_dim)
        #   refs[n_inputs+1 :]            im2col scratch (one per conv + one for linear-1)
        x_ref = refs[0]
        l1w_ref, l1b_ref, l2w_ref, l2b_ref = refs[1 + 6 * n_conv: n_inputs]
        o_ref = refs[n_inputs]
        scratch = refs[n_inputs + 1:]

        act = x_ref[...]                                       # (B*H0, W0*Cin0)

        for li, (H, W, Cin, K, OH, OW, C) in enumerate(dims):
            band_ref, cb_ref, g_ref, be_ref, red_ref, rep_ref = refs[1 + 6 * li: 7 + 6 * li]
            im_ref = scratch[li]                               # (K, B*OH, W*Cin)

            # --- in-kernel "im2col": only KH row-shifted copies (no patch blow-up)
            for kh in range(K):
                for b in range(batch):
                    im_ref[kh, b * OH:(b + 1) * OH, :] = act[b * H + kh: b * H + kh + OH, :]

            # --- banded conv: K accumulated (B*OH, W*Cin) @ (W*Cin, OW*Cout) matmuls
            y = jnp.dot(im_ref[0], band_ref[0], preferred_element_type=jnp.float32)
            for kh in range(1, K):
                y = y + jnp.dot(im_ref[kh], band_ref[kh], preferred_element_type=jnp.float32)

            # --- conv bias + ReLU (bias pre-tiled to (1, OW*C) at init)
            y = jnp.maximum(y + cb_ref[...], 0.0)

            # --- BatchNorm2d, training-mode batch stats, one pass
            s1 = jnp.sum(y, axis=0, keepdims=True)             # (1, OW*C)
            s2 = jnp.sum(y * y, axis=0, keepdims=True)         # (1, OW*C)
            s1c = jnp.dot(s1, red_ref[...], preferred_element_type=jnp.float32)  # (1, C)
            s2c = jnp.dot(s2, red_ref[...], preferred_element_type=jnp.float32)  # (1, C)
            inv_n = 1.0 / float(batch * OH * OW)
            mean = s1c * inv_n
            var = s2c * inv_n - mean * mean                    # biased variance (BN norm)
            scale = g_ref[...] * jax.lax.rsqrt(var + EPS)      # (1, C)
            shift = be_ref[...] - mean * scale                 # (1, C)
            # replicate per-channel scale/shift across the OW lane groups
            scale_t = jnp.dot(scale, rep_ref[...], preferred_element_type=jnp.float32)
            shift_t = jnp.dot(shift, rep_ref[...], preferred_element_type=jnp.float32)
            act = y * scale_t + shift_t                        # (B*OH, OW*C), 128 lanes

        # --- Flatten + Linear(2*2*64 -> 128) as a 2x2 "valid conv": the banded l1
        #     weight already encodes PyTorch's NCHW flatten order, so no transpose.
        im4 = scratch[n_conv]                                  # (2, B, 128)
        for kh in range(lin_kh):
            for b in range(batch):
                im4[kh, b:b + 1, :] = act[b * lin_kh + kh: b * lin_kh + kh + 1, :]
        h1 = jnp.dot(im4[0], l1w_ref[0], preferred_element_type=jnp.float32)
        for kh in range(1, lin_kh):
            h1 = h1 + jnp.dot(im4[kh], l1w_ref[kh], preferred_element_type=jnp.float32)
        h1 = jnp.maximum(h1 + l1b_ref[...], 0.0)               # (B, 128)

        # --- Linear(128 -> encoded_space_dim)
        o_ref[...] = jnp.dot(h1, l2w_ref[...], preferred_element_type=jnp.float32) + l2b_ref[...]

    return kernel


def build_encoder(params, batch, encoded_dim, h0=IN_HW, w0=IN_HW):
    """Returns a jitted forward(x_nchw) -> (batch, encoded_dim) using one fused kernel."""
    ops, dims = prepare_kernel_params(params, h0, w0)
    kernel = make_encoder_kernel(batch, dims)

    # im2col scratch: (K, B*OH, W*Cin) per conv layer, plus (2, B, 128) for the
    # 2x2-conv view of Linear(256, 128).  Weights + activations total < 1 MiB,
    # well inside even v5e's 16 MiB scoped-VMEM default.
    scratch = [pltpu.VMEM((k, batch * oh, w * cin), jnp.float32)
               for (h, w, cin, k, oh, ow, cout) in dims]
    oh3, ow3, c3 = dims[-1][4], dims[-1][5], dims[-1][6]
    scratch.append(pltpu.VMEM((oh3, batch, ow3 * c3), jnp.float32))

    n_in = 1 + len(ops)
    fused = pl.pallas_call(
        kernel,
        out_shape=jax.ShapeDtypeStruct((batch, encoded_dim), jnp.float32),
        in_specs=[pl.BlockSpec(memory_space=pltpu.MemorySpace.VMEM)] * n_in,
        out_specs=pl.BlockSpec(memory_space=pltpu.MemorySpace.VMEM),
        scratch_shapes=scratch,
    )

    @jax.jit
    def forward(x_nchw):
        b, c, h, w = x_nchw.shape
        # NCHW -> lane-major (B*H, W*C); the only op outside the fused kernel.
        x2d = jnp.transpose(x_nchw.astype(jnp.float32), (0, 2, 3, 1)).reshape(b * h, w * c)
        return fused(x2d, *ops)

    return forward


# ---------------------------------------------------------------------------
# Parameters (PyTorch-matching shapes) and a pure-JAX reference for checking
# ---------------------------------------------------------------------------
def init_params(key, encoded_space_dim):
    """Deterministic synthetic parameters with PyTorch-matching shapes/semantics."""
    keys = jax.random.split(key, 10)

    def conv_w(k, cout, cin, ks):
        fan_in = cin * ks * ks
        return jax.random.normal(k, (cout, cin, ks, ks), jnp.float32) / jnp.sqrt(fan_in)

    def lin_w(k, fin, fout):
        # stored (in, out); PyTorch stores (out, in) and applies x @ W.T
        return jax.random.normal(k, (fin, fout), jnp.float32) / jnp.sqrt(fin)

    return {
        "c1_w": conv_w(keys[0], 16, 3, 3),
        "c1_b": jax.random.normal(keys[1], (16,), jnp.float32) * 0.01,
        "bn1_g": jnp.ones((16,), jnp.float32),
        "bn1_b": jnp.zeros((16,), jnp.float32),
        "c2_w": conv_w(keys[2], 32, 16, 5),
        "c2_b": jax.random.normal(keys[3], (32,), jnp.float32) * 0.01,
        "bn2_g": jnp.ones((32,), jnp.float32),
        "bn2_b": jnp.zeros((32,), jnp.float32),
        "c3_w": conv_w(keys[4], 64, 32, 3),
        "c3_b": jax.random.normal(keys[5], (64,), jnp.float32) * 0.01,
        "bn3_g": jnp.ones((64,), jnp.float32),
        "bn3_b": jnp.zeros((64,), jnp.float32),
        "l1_w": lin_w(keys[6], 2 * 2 * 64, 128),
        "l1_b": jax.random.normal(keys[7], (128,), jnp.float32) * 0.01,
        "l2_w": lin_w(keys[8], 128, encoded_space_dim),
        "l2_b": jax.random.normal(keys[9], (encoded_space_dim,), jnp.float32) * 0.01,
    }


def encoder_reference(params, x_nchw):
    """Pure-JAX reference of the PyTorch forward (training-mode BatchNorm)."""
    hi = jax.lax.Precision.HIGHEST
    x = x_nchw.astype(jnp.float32)
    for li in (1, 2, 3):
        x = jax.lax.conv_general_dilated(
            x, params[f"c{li}_w"], window_strides=(1, 1), padding="VALID",
            dimension_numbers=("NCHW", "OIHW", "NCHW"), precision=hi)
        x = jnp.maximum(x + params[f"c{li}_b"][None, :, None, None], 0.0)
        mean = jnp.mean(x, axis=(0, 2, 3), keepdims=True)
        var = jnp.mean(jnp.square(x - mean), axis=(0, 2, 3), keepdims=True)
        x = (x - mean) * jax.lax.rsqrt(var + EPS)
        x = x * params[f"bn{li}_g"][None, :, None, None] + params[f"bn{li}_b"][None, :, None, None]
    x = x.reshape(x.shape[0], -1)                              # Flatten(start_dim=1), NCHW
    x = jnp.maximum(jnp.dot(x, params["l1_w"], precision=hi) + params["l1_b"], 0.0)
    return jnp.dot(x, params["l2_w"], precision=hi) + params["l2_b"]


# ---------------------------------------------------------------------------
if __name__ == "__main__":
    encoded_space_dim = 32
    batch = 2
    key = jax.random.PRNGKey(0)
    k_params, k_x = jax.random.split(key)

    params = init_params(k_params, encoded_space_dim)
    # Input spatial must be 10x10 so the conv stack ends at 2x2x64 (Flatten -> 256).
    x = jax.random.normal(k_x, (batch, IN_CH, IN_HW, IN_HW), jnp.float32)

    forward = build_encoder(params, batch, encoded_space_dim)
    out = jax.block_until_ready(forward(x))
    assert out.shape == (batch, encoded_space_dim), out.shape

    # Correctness vs. a pure-JAX reference of the PyTorch forward.
    ref = jax.block_until_ready(encoder_reference(params, x))
    max_err = float(jnp.max(jnp.abs(out - ref)))
    assert max_err < 2e-2, f"kernel/reference mismatch: max abs err = {max_err}"

    print("KERNEL_OK")
</pallas_src>

<mosaic_0001>
module attributes {stable_mosaic.version = 11 : i64} {
  func.func @kernel(%arg0: memref<20x30xf32, #tpu.memory_space<vmem>>, %arg1: memref<3x30x128xf32, #tpu.memory_space<vmem>>, %arg2: memref<1x128xf32, #tpu.memory_space<vmem>>, %arg3: memref<1x16xf32, #tpu.memory_space<vmem>>, %arg4: memref<1x16xf32, #tpu.memory_space<vmem>>, %arg5: memref<128x16xf32, #tpu.memory_space<vmem>>, %arg6: memref<16x128xf32, #tpu.memory_space<vmem>>, %arg7: memref<5x128x128xf32, #tpu.memory_space<vmem>>, %arg8: memref<1x128xf32, #tpu.memory_space<vmem>>, %arg9: memref<1x32xf32, #tpu.memory_space<vmem>>, %arg10: memref<1x32xf32, #tpu.memory_space<vmem>>, %arg11: memref<128x32xf32, #tpu.memory_space<vmem>>, %arg12: memref<32x128xf32, #tpu.memory_space<vmem>>, %arg13: memref<3x128x128xf32, #tpu.memory_space<vmem>>, %arg14: memref<1x128xf32, #tpu.memory_space<vmem>>, %arg15: memref<1x64xf32, #tpu.memory_space<vmem>>, %arg16: memref<1x64xf32, #tpu.memory_space<vmem>>, %arg17: memref<128x64xf32, #tpu.memory_space<vmem>>, %arg18: memref<64x128xf32, #tpu.memory_space<vmem>>, %arg19: memref<2x128x128xf32, #tpu.memory_space<vmem>>, %arg20: memref<1x128xf32, #tpu.memory_space<vmem>>, %arg21: memref<128x32xf32, #tpu.memory_space<vmem>>, %arg22: memref<1x32xf32, #tpu.memory_space<vmem>>, %arg23: memref<2x32xf32, #tpu.memory_space<vmem>>, %arg24: memref<3x16x30xf32, #tpu.memory_space<vmem>>, %arg25: memref<5x8x128xf32, #tpu.memory_space<vmem>>, %arg26: memref<3x4x128xf32, #tpu.memory_space<vmem>>, %arg27: memref<2x2x128xf32, #tpu.memory_space<vmem>>) attributes {dimension_semantics = [], scalar_prefetch = 0 : i64, scratch_operands = 4 : i64, tpu.core_type = #tpu.core_type<tc>} {
    %c0 = arith.constant 0 : index
    %c0_0 = arith.constant 0 : index
    %0 = vector.load %arg0[%c0, %c0_0] : memref<20x30xf32, #tpu.memory_space<vmem>>, vector<20x30xf32>
    %1 = vector.extract_strided_slice %0 {offsets = [0, 0], sizes = [8, 30], strides = [1, 1]} : vector<20x30xf32> to vector<8x30xf32>
    %c0_1 = arith.constant 0 : index
    %c0_2 = arith.constant 0 : index
    %c0_3 = arith.constant 0 : index
    %2 = vector.load %arg24[%c0_1, %c0_2, %c0_3] : memref<3x16x30xf32, #tpu.memory_space<vmem>>, vector<1x8x30xf32>
    %3 = vector.shape_cast %2 : vector<1x8x30xf32> to vector<8x30xf32>
    %4 = vector.shape_cast %1 : vector<8x30xf32> to vector<1x8x30xf32>
    tpu.vector_store %arg24[%c0_1, %c0_2, %c0_3], %4 {strides = array<i32>} : memref<3x16x30xf32, #tpu.memory_space<vmem>>, vector<1x8x30xf32>,
    %5 = vector.extract_strided_slice %0 {offsets = [10, 0], sizes = [8, 30], strides = [1, 1]} : vector<20x30xf32> to vector<8x30xf32>
    %c0_4 = arith.constant 0 : index
    %c8 = arith.constant 8 : index
    %c0_5 = arith.constant 0 : index
    %6 = vector.load %arg24[%c0_4, %c8, %c0_5] : memref<3x16x30xf32, #tpu.memory_space<vmem>>, vector<1x8x30xf32>
    %7 = vector.shape_cast %6 : vector<1x8x30xf32> to vector<8x30xf32>
    %8 = vector.shape_cast %5 : vector<8x30xf32> to vector<1x8x30xf32>
    tpu.vector_store %arg24[%c0_4, %c8, %c0_5], %8 {strides = array<i32>} : memref<3x16x30xf32, #tpu.memory_space<vmem>>, vector<1x8x30xf32>,
    %9 = vector.extract_strided_slice %0 {offsets = [1, 0], sizes = [8, 30], strides = [1, 1]} : vector<20x30xf32> to vector<8x30xf32>
    %c1 = arith.constant 1 : index
    %c0_6 = arith.constant 0 : index
    %c0_7 = arith.constant 0 : index
    %10 = vector.load %arg24[%c1, %c0_6, %c0_7] : memref<3x16x30xf32, #tpu.memory_space<vmem>>, vector<1x8x30xf32>
    %11 = vector.shape_cast %10 : vector<1x8x30xf32> to vector<8x30xf32>
    %12 = vector.shape_cast %9 : vector<8x30xf32> to vector<1x8x30xf32>
    tpu.vector_store %arg24[%c1, %c0_6, %c0_7], %12 {strides = array<i32>} : memref<3x16x30xf32, #tpu.memory_space<vmem>>, vector<1x8x30xf32>,
    %13 = vector.extract_strided_slice %0 {offsets = [11, 0], sizes = [8, 30], strides = [1, 1]} : vector<20x30xf32> to vector<8x30xf32>
    %c1_8 = arith.constant 1 : index
    %c8_9 = arith.constant 8 : index
    %c0_10 = arith.constant 0 : index
    %14 = vector.load %arg24[%c1_8, %c8_9, %c0_10] : memref<3x16x30xf32, #tpu.memory_space<vmem>>, vector<1x8x30xf32>
    %15 = vector.shape_cast %14 : vector<1x8x30xf32> to vector<8x30xf32>
    %16 = vector.shape_cast %13 : vector<8x30xf32> to vector<1x8x30xf32>
    tpu.vector_store %arg24[%c1_8, %c8_9, %c0_10], %16 {strides = array<i32>} : memref<3x16x30xf32, #tpu.memory_space<vmem>>, vector<1x8x30xf32>,
    %17 = vector.extract_strided_slice %0 {offsets = [2, 0], sizes = [8, 30], strides = [1, 1]} : vector<20x30xf32> to vector<8x30xf32>
    %c2 = arith.constant 2 : index
    %c0_11 = arith.constant 0 : index
    %c0_12 = arith.constant 0 : index
    %18 = vector.load %arg24[%c2, %c0_11, %c0_12] : memref<3x16x30xf32, #tpu.memory_space<vmem>>, vector<1x8x30xf32>
    %19 = vector.shape_cast %18 : vector<1x8x30xf32> to vector<8x30xf32>
    %20 = vector.shape_cast %17 : vector<8x30xf32> to vector<1x8x30xf32>
    tpu.vector_store %arg24[%c2, %c0_11, %c0_12], %20 {strides = array<i32>} : memref<3x16x30xf32, #tpu.memory_space<vmem>>, vector<1x8x30xf32>,
    %21 = vector.extract_strided_slice %0 {offsets = [12, 0], sizes = [8, 30], strides = [1, 1]} : vector<20x30xf32> to vector<8x30xf32>
    %c2_13 = arith.constant 2 : index
    %c8_14 = arith.constant 8 : index
    %c0_15 = arith.constant 0 : index
    %22 = vector.load %arg24[%c2_13, %c8_14, %c0_15] : memref<3x16x30xf32, #tpu.memory_space<vmem>>, vector<1x8x30xf32>
    %23 = vector.shape_cast %22 : vector<1x8x30xf32> to vector<8x30xf32>
    %24 = vector.shape_cast %21 : vector<8x30xf32> to vector<1x8x30xf32>
    tpu.vector_store %arg24[%c2_13, %c8_14, %c0_15], %24 {strides = array<i32>} : memref<3x16x30xf32, #tpu.memory_space<vmem>>, vector<1x8x30xf32>,
    %c0_16 = arith.constant 0 : index
    %c0_17 = arith.constant 0 : index
    %c0_18 = arith.constant 0 : index
    %25 = vector.load %arg24[%c0_16, %c0_17, %c0_18] : memref<3x16x30xf32, #tpu.memory_space<vmem>>, vector<1x16x30xf32>
    %26 = vector.shape_cast %25 : vector<1x16x30xf32> to vector<16x30xf32>
    %c0_19 = arith.constant 0 : index
    %c0_20 = arith.constant 0 : index
    %c0_21 = arith.constant 0 : index
    %27 = vector.load %arg1[%c0_19, %c0_20, %c0_21] : memref<3x30x128xf32, #tpu.memory_space<vmem>>, vector<1x30x128xf32>
    %28 = vector.shape_cast %27 : vector<1x30x128xf32> to vector<30x128xf32>
    %cst = arith.constant dense<0.000000e+00> : vector<16x128xf32>
    %29 = tpu.matmul %26, %28, %cst {dimension_numbers = #tpu.dot_dimension_numbers<[1], [0], [0], [1], [0, 0, 1, 1], [], []>} : vector<16x30xf32>, vector<30x128xf32>, vector<16x128xf32> -> vector<16x128xf32>
    %c1_22 = arith.constant 1 : index
    %c0_23 = arith.constant 0 : index
    %c0_24 = arith.constant 0 : index
    %30 = vector.load %arg24[%c1_22, %c0_23, %c0_24] : memref<3x16x30xf32, #tpu.memory_space<vmem>>, vector<1x16x30xf32>
    %31 = vector.shape_cast %30 : vector<1x16x30xf32> to vector<16x30xf32>
    %c1_25 = arith.constant 1 : index
    %c0_26 = arith.constant 0 : index
    %c0_27 = arith.constant 0 : index
    %32 = vector.load %arg1[%c1_25, %c0_26, %c0_27] : memref<3x30x128xf32, #tpu.memory_space<vmem>>, vector<1x30x128xf32>
    %33 = vector.shape_cast %32 : vector<1x30x128xf32> to vector<30x128xf32>
    %cst_28 = arith.constant dense<0.000000e+00> : vector<16x128xf32>
    %34 = tpu.matmul %31, %33, %cst_28 {dimension_numbers = #tpu.dot_dimension_numbers<[1], [0], [0], [1], [0, 0, 1, 1], [], []>} : vector<16x30xf32>, vector<30x128xf32>, vector<16x128xf32> -> vector<16x128xf32>
    %35 = arith.addf %29, %34 : vector<16x128xf32>
    %c2_29 = arith.constant 2 : index
    %c0_30 = arith.constant 0 : index
    %c0_31 = arith.constant 0 : index
    %36 = vector.load %arg24[%c2_29, %c0_30, %c0_31] : memref<3x16x30xf32, #tpu.memory_space<vmem>>, vector<1x16x30xf32>
    %37 = vector.shape_cast %36 : vector<1x16x30xf32> to vector<16x30xf32>
    %c2_32 = arith.constant 2 : index
    %c0_33 = arith.constant 0 : index
    %c0_34 = arith.constant 0 : index
    %38 = vector.load %arg1[%c2_32, %c0_33, %c0_34] : memref<3x30x128xf32, #tpu.memory_space<vmem>>, vector<1x30x128xf32>
    %39 = vector.shape_cast %38 : vector<1x30x128xf32> to vector<30x128xf32>
    %cst_35 = arith.constant dense<0.000000e+00> : vector<16x128xf32>
    %40 = tpu.matmul %37, %39, %cst_35 {dimension_numbers = #tpu.dot_dimension_numbers<[1], [0], [0], [1], [0, 0, 1, 1], [], []>} : vector<16x30xf32>, vector<30x128xf32>, vector<16x128xf32> -> vector<16x128xf32>
    %41 = arith.addf %35, %40 : vector<16x128xf32>
    %c0_36 = arith.constant 0 : index
    %c0_37 = arith.constant 0 : index
    %42 = vector.load %arg2[%c0_36, %c0_37] : memref<1x128xf32, #tpu.memory_space<vmem>>, vector<1x128xf32>
    %43 = vector.broadcast %42 : vector<1x128xf32> to vector<16x128xf32>
    %44 = arith.addf %41, %43 : vector<16x128xf32>
    %cst_38 = arith.constant 0.000000e+00 : f32
    %45 = vector.broadcast %cst_38 : f32 to vector<16x128xf32>
    %46 = arith.maximumf %44, %45 : vector<16x128xf32>
    %cst_39 = arith.constant dense<0.000000e+00> : vector<128xf32>
    %47 = vector.multi_reduction <add>, %46, %cst_39 [0] : vector<16x128xf32> to vector<128xf32>
    %48 = vector.shape_cast %47 : vector<128xf32> to vector<1x128xf32>
    %49 = arith.mulf %46, %46 : vector<16x128xf32>
    %cst_40 = arith.constant dense<0.000000e+00> : vector<128xf32>
    %50 = vector.multi_reduction <add>, %49, %cst_40 [0] : vector<16x128xf32> to vector<128xf32>
    %51 = vector.shape_cast %50 : vector<128xf32> to vector<1x128xf32>
    %c0_41 = arith.constant 0 : index
    %c0_42 = arith.constant 0 : index
    %52 = vector.load %arg5[%c0_41, %c0_42] : memref<128x16xf32, #tpu.memory_space<vmem>>, vector<128x16xf32>
    %cst_43 = arith.constant dense<0.000000e+00> : vector<1x16xf32>
    %53 = tpu.matmul %48, %52, %cst_43 {dimension_numbers = #tpu.dot_dimension_numbers<[1], [0], [0], [1], [0, 0, 1, 1], [], []>} : vector<1x128xf32>, vector<128x16xf32>, vector<1x16xf32> -> vector<1x16xf32>
    %c0_44 = arith.constant 0 : index
    %c0_45 = arith.constant 0 : index
    %54 = vector.load %arg5[%c0_44, %c0_45] : memref<128x16xf32, #tpu.memory_space<vmem>>, vector<128x16xf32>
    %cst_46 = arith.constant dense<0.000000e+00> : vector<1x16xf32>
    %55 = tpu.matmul %51, %54, %cst_46 {dimension_numbers = #tpu.dot_dimension_numbers<[1], [0], [0], [1], [0, 0, 1, 1], [], []>} : vector<1x128xf32>, vector<128x16xf32>, vector<1x16xf32> -> vector<1x16xf32>
    %cst_47 = arith.constant 7.812500e-03 : f32
    %56 = vector.broadcast %cst_47 : f32 to vector<1x16xf32>
    %57 = arith.mulf %53, %56 : vector<1x16xf32>
    %cst_48 = arith.constant 7.812500e-03 : f32
    %58 = vector.broadcast %cst_48 : f32 to vector<1x16xf32>
    %59 = arith.mulf %55, %58 : vector<1x16xf32>
    %60 = arith.mulf %57, %57 : vector<1x16xf32>
    %61 = arith.subf %59, %60 : vector<1x16xf32>
    %c0_49 = arith.constant 0 : index
    %c0_50 = arith.constant 0 : index
    %62 = vector.load %arg3[%c0_49, %c0_50] : memref<1x16xf32, #tpu.memory_space<vmem>>, vector<1x16xf32>
    %cst_51 = arith.constant 9.99999974E-6 : f32
    %63 = vector.broadcast %cst_51 : f32 to vector<1x16xf32>
    %64 = arith.addf %61, %63 : vector<1x16xf32>
    %65 = math.rsqrt %64 : vector<1x16xf32>
    %66 = arith.mulf %62, %65 : vector<1x16xf32>
    %c0_52 = arith.constant 0 : index
    %c0_53 = arith.constant 0 : index
    %67 = vector.load %arg4[%c0_52, %c0_53] : memref<1x16xf32, #tpu.memory_space<vmem>>, vector<1x16xf32>
    %68 = arith.mulf %57, %66 : vector<1x16xf32>
    %69 = arith.subf %67, %68 : vector<1x16xf32>
    %c0_54 = arith.constant 0 : index
    %c0_55 = arith.constant 0 : index
    %70 = vector.load %arg6[%c0_54, %c0_55] : memref<16x128xf32, #tpu.memory_space<vmem>>, vector<16x128xf32>
    %cst_56 = arith.constant dense<0.000000e+00> : vector<1x128xf32>
    %71 = tpu.matmul %66, %70, %cst_56 {dimension_numbers = #tpu.dot_dimension_numbers<[1], [0], [0], [1], [0, 0, 1, 1], [], []>} : vector<1x16xf32>, vector<16x128xf32>, vector<1x128xf32> -> vector<1x128xf32>
    %c0_57 = arith.constant 0 : index
    %c0_58 = arith.constant 0 : index
    %72 = vector.load %arg6[%c0_57, %c0_58] : memref<16x128xf32, #tpu.memory_space<vmem>>, vector<16x128xf32>
    %cst_59 = arith.constant dense<0.000000e+00> : vector<1x128xf32>
    %73 = tpu.matmul %69, %72, %cst_59 {dimension_numbers = #tpu.dot_dimension_numbers<[1], [0], [0], [1], [0, 0, 1, 1], [], []>} : vector<1x16xf32>, vector<16x128xf32>, vector<1x128xf32> -> vector<1x128xf32>
    %74 = vector.broadcast %71 : vector<1x128xf32> to vector<16x128xf32>
    %75 = arith.mulf %46, %74 : vector<16x128xf32>
    %76 = vector.broadcast %73 : vector<1x128xf32> to vector<16x128xf32>
    %77 = arith.addf %75, %76 : vector<16x128xf32>
    %78 = vector.extract_strided_slice %77 {offsets = [0, 0], sizes = [4, 128], strides = [1, 1]} : vector<16x128xf32> to vector<4x128xf32>
    %c0_60 = arith.constant 0 : index
    %c0_61 = arith.constant 0 : index
    %c0_62 = arith.constant 0 : index
    %79 = vector.load %arg25[%c0_60, %c0_61, %c0_62] : memref<5x8x128xf32, #tpu.memory_space<vmem>>, vector<1x4x128xf32>
    %80 = vector.shape_cast %79 : vector<1x4x128xf32> to vector<4x128xf32>
    %81 = vector.shape_cast %78 : vector<4x128xf32> to vector<1x4x128xf32>
    tpu.vector_store %arg25[%c0_60, %c0_61, %c0_62], %81 {strides = array<i32>} : memref<5x8x128xf32, #tpu.memory_space<vmem>>, vector<1x4x128xf32>,
    %82 = vector.extract_strided_slice %77 {offsets = [8, 0], sizes = [4, 128], strides = [1, 1]} : vector<16x128xf32> to vector<4x128xf32>
    %c0_63 = arith.constant 0 : index
    %c4 = arith.constant 4 : index
    %c0_64 = arith.constant 0 : index
    %83 = vector.load %arg25[%c0_63, %c4, %c0_64] : memref<5x8x128xf32, #tpu.memory_space<vmem>>, vector<1x4x128xf32>
    %84 = vector.shape_cast %83 : vector<1x4x128xf32> to vector<4x128xf32>
    %85 = vector.shape_cast %82 : vector<4x128xf32> to vector<1x4x128xf32>
    tpu.vector_store %arg25[%c0_63, %c4, %c0_64], %85 {strides = array<i32>} : memref<5x8x128xf32, #tpu.memory_space<vmem>>, vector<1x4x128xf32>,
    %86 = vector.extract_strided_slice %77 {offsets = [1, 0], sizes = [4, 128], strides = [1, 1]} : vector<16x128xf32> to vector<4x128xf32>
    %c1_65 = arith.constant 1 : index
    %c0_66 = arith.constant 0 : index
    %c0_67 = arith.constant 0 : index
    %87 = vector.load %arg25[%c1_65, %c0_66, %c0_67] : memref<5x8x128xf32, #tpu.memory_space<vmem>>, vector<1x4x128xf32>
    %88 = vector.shape_cast %87 : vector<1x4x128xf32> to vector<4x128xf32>
    %89 = vector.shape_cast %86 : vector<4x128xf32> to vector<1x4x128xf32>
    tpu.vector_store %arg25[%c1_65, %c0_66, %c0_67], %89 {strides = array<i32>} : memref<5x8x128xf32, #tpu.memory_space<vmem>>, vector<1x4x128xf32>,
    %90 = vector.extract_strided_slice %77 {offsets = [9, 0], sizes = [4, 128], strides = [1, 1]} : vector<16x128xf32> to vector<4x128xf32>
    %c1_68 = arith.constant 1 : index
    %c4_69 = arith.constant 4 : index
    %c0_70 = arith.constant 0 : index
    %91 = vector.load %arg25[%c1_68, %c4_69, %c0_70] : memref<5x8x128xf32, #tpu.memory_space<vmem>>, vector<1x4x128xf32>
    %92 = vector.shape_cast %91 : vector<1x4x128xf32> to vector<4x128xf32>
    %93 = vector.shape_cast %90 : vector<4x128xf32> to vector<1x4x128xf32>
    tpu.vector_store %arg25[%c1_68, %c4_69, %c0_70], %93 {strides = array<i32>} : memref<5x8x128xf32, #tpu.memory_space<vmem>>, vector<1x4x128xf32>,
    %94 = vector.extract_strided_slice %77 {offsets = [2, 0], sizes = [4, 128], strides = [1, 1]} : vector<16x128xf32> to vector<4x128xf32>
    %c2_71 = arith.constant 2 : index
    %c0_72 = arith.constant 0 : index
    %c0_73 = arith.constant 0 : index
    %95 = vector.load %arg25[%c2_71, %c0_72, %c0_73] : memref<5x8x128xf32, #tpu.memory_space<vmem>>, vector<1x4x128xf32>
    %96 = vector.shape_cast %95 : vector<1x4x128xf32> to vector<4x128xf32>
    %97 = vector.shape_cast %94 : vector<4x128xf32> to vector<1x4x128xf32>
    tpu.vector_store %arg25[%c2_71, %c0_72, %c0_73], %97 {strides = array<i32>} : memref<5x8x128xf32, #tpu.memory_space<vmem>>, vector<1x4x128xf32>,
    %98 = vector.extract_strided_slice %77 {offsets = [10, 0], sizes = [4, 128], strides = [1, 1]} : vector<16x128xf32> to vector<4x128xf32>
    %c2_74 = arith.constant 2 : index
    %c4_75 = arith.constant 4 : index
    %c0_76 = arith.constant 0 : index
    %99 = vector.load %arg25[%c2_74, %c4_75, %c0_76] : memref<5x8x128xf32, #tpu.memory_space<vmem>>, vector<1x4x128xf32>
    %100 = vector.shape_cast %99 : vector<1x4x128xf32> to vector<4x128xf32>
    %101 = vector.shape_cast %98 : vector<4x128xf32> to vector<1x4x128xf32>
    tpu.vector_store %arg25[%c2_74, %c4_75, %c0_76], %101 {strides = array<i32>} : memref<5x8x128xf32, #tpu.memory_space<vmem>>, vector<1x4x128xf32>,
    %102 = vector.extract_strided_slice %77 {offsets = [3, 0], sizes = [4, 128], strides = [1, 1]} : vector<16x128xf32> to vector<4x128xf32>
    %c3 = arith.constant 3 : index
    %c0_77 = arith.constant 0 : index
    %c0_78 = arith.constant 0 : index
    %103 = vector.load %arg25[%c3, %c0_77, %c0_78] : memref<5x8x128xf32, #tpu.memory_space<vmem>>, vector<1x4x128xf32>
    %104 = vector.shape_cast %103 : vector<1x4x128xf32> to vector<4x128xf32>
    %105 = vector.shape_cast %102 : vector<4x128xf32> to vector<1x4x128xf32>
    tpu.vector_store %arg25[%c3, %c0_77, %c0_78], %105 {strides = array<i32>} : memref<5x8x128xf32, #tpu.memory_space<vmem>>, vector<1x4x128xf32>,
    %106 = vector.extract_strided_slice %77 {offsets = [11, 0], sizes = [4, 128], strides = [1, 1]} : vector<16x128xf32> to vector<4x128xf32>
    %c3_79 = arith.constant 3 : index
    %c4_80 = arith.constant 4 : index
    %c0_81 = arith.constant 0 : index
    %107 = vector.load %arg25[%c3_79, %c4_80, %c0_81] : memref<5x8x128xf32, #tpu.memory_space<vmem>>, vector<1x4x128xf32>
    %108 = vector.shape_cast %107 : vector<1x4x128xf32> to vector<4x128xf32>
    %109 = vector.shape_cast %106 : vector<4x128xf32> to vector<1x4x128xf32>
    tpu.vector_store %arg25[%c3_79, %c4_80, %c0_81], %109 {strides = array<i32>} : memref<5x8x128xf32, #tpu.memory_space<vmem>>, vector<1x4x128xf32>,
    %110 = vector.extract_strided_slice %77 {offsets = [4, 0], sizes = [4, 128], strides = [1, 1]} : vector<16x128xf32> to vector<4x128xf32>
    %c4_82 = arith.constant 4 : index
    %c0_83 = arith.constant 0 : index
    %c0_84 = arith.constant 0 : index
    %111 = vector.load %arg25[%c4_82, %c0_83, %c0_84] : memref<5x8x128xf32, #tpu.memory_space<vmem>>, vector<1x4x128xf32>
    %112 = vector.shape_cast %111 : vector<1x4x128xf32> to vector<4x128xf32>
    %113 = vector.shape_cast %110 : vector<4x128xf32> to vector<1x4x128xf32>
    tpu.vector_store %arg25[%c4_82, %c0_83, %c0_84], %113 {strides = array<i32>} : memref<5x8x128xf32, #tpu.memory_space<vmem>>, vector<1x4x128xf32>,
    %114 = vector.extract_strided_slice %77 {offsets = [12, 0], sizes = [4, 128], strides = [1, 1]} : vector<16x128xf32> to vector<4x128xf32>
    %c4_85 = arith.constant 4 : index
    %c4_86 = arith.constant 4 : index
    %c0_87 = arith.constant 0 : index
    %115 = vector.load %arg25[%c4_85, %c4_86, %c0_87] : memref<5x8x128xf32, #tpu.memory_space<vmem>>, vector<1x4x128xf32>
    %116 = vector.shape_cast %115 : vector<1x4x128xf32> to vector<4x128xf32>
    %117 = vector.shape_cast %114 : vector<4x128xf32> to vector<1x4x128xf32>
    tpu.vector_store %arg25[%c4_85, %c4_86, %c0_87], %117 {strides = array<i32>} : memref<5x8x128xf32, #tpu.memory_space<vmem>>, vector<1x4x128xf32>,
    %c0_88 = arith.constant 0 : index
    %c0_89 = arith.constant 0 : index
    %c0_90 = arith.constant 0 : index
    %118 = vector.load %arg25[%c0_88, %c0_89, %c0_90] : memref<5x8x128xf32, #tpu.memory_space<vmem>>, vector<1x8x128xf32>
    %119 = vector.shape_cast %118 : vector<1x8x128xf32> to vector<8x128xf32>
    %c0_91 = arith.constant 0 : index
    %c0_92 = arith.constant 0 : index
    %c0_93 = arith.constant 0 : index
    %120 = vector.load %arg7[%c0_91, %c0_92, %c0_93] : memref<5x128x128xf32, #tpu.memory_space<vmem>>, vector<1x128x128xf32>
    %121 = vector.shape_cast %120 : vector<1x128x128xf32> to vector<128x128xf32>
    %cst_94 = arith.constant dense<0.000000e+00> : vector<8x128xf32>
    %122 = tpu.matmul %119, %121, %cst_94 {dimension_numbers = #tpu.dot_dimension_numbers<[1], [0], [0], [1], [0, 0, 1, 1], [], []>} : vector<8x128xf32>, vector<128x128xf32>, vector<8x128xf32> -> vector<8x128xf32>
    %c1_95 = arith.constant 1 : index
    %c0_96 = arith.constant 0 : index
    %c0_97 = arith.constant 0 : index
    %123 = vector.load %arg25[%c1_95, %c0_96, %c0_97] : memref<5x8x128xf32, #tpu.memory_space<vmem>>, vector<1x8x128xf32>
    %124 = vector.shape_cast %123 : vector<1x8x128xf32> to vector<8x128xf32>
    %c1_98 = arith.constant 1 : index
    %c0_99 = arith.constant 0 : index
    %c0_100 = arith.constant 0 : index
    %125 = vector.load %arg7[%c1_98, %c0_99, %c0_100] : memref<5x128x128xf32, #tpu.memory_space<vmem>>, vector<1x128x128xf32>
    %126 = vector.shape_cast %125 : vector<1x128x128xf32> to vector<128x128xf32>
    %cst_101 = arith.constant dense<0.000000e+00> : vector<8x128xf32>
    %127 = tpu.matmul %124, %126, %cst_101 {dimension_numbers = #tpu.dot_dimension_numbers<[1], [0], [0], [1], [0, 0, 1, 1], [], []>} : vector<8x128xf32>, vector<128x128xf32>, vector<8x128xf32> -> vector<8x128xf32>
    %128 = arith.addf %122, %127 : vector<8x128xf32>
    %c2_102 = arith.constant 2 : index
    %c0_103 = arith.constant 0 : index
    %c0_104 = arith.constant 0 : index
    %129 = vector.load %arg25[%c2_102, %c0_103, %c0_104] : memref<5x8x128xf32, #tpu.memory_space<vmem>>, vector<1x8x128xf32>
    %130 = vector.shape_cast %129 : vector<1x8x128xf32> to vector<8x128xf32>
    %c2_105 = arith.constant 2 : index
    %c0_106 = arith.constant 0 : index
    %c0_107 = arith.constant 0 : index
    %131 = vector.load %arg7[%c2_105, %c0_106, %c0_107] : memref<5x128x128xf32, #tpu.memory_space<vmem>>, vector<1x128x128xf32>
    %132 = vector.shape_cast %131 : vector<1x128x128xf32> to vector<128x128xf32>
    %cst_108 = arith.constant dense<0.000000e+00> : vector<8x128xf32>
    %133 = tpu.matmul %130, %132, %cst_108 {dimension_numbers = #tpu.dot_dimension_numbers<[1], [0], [0], [1], [0, 0, 1, 1], [], []>} : vector<8x128xf32>, vector<128x128xf32>, vector<8x128xf32> -> vector<8x128xf32>
    %134 = arith.addf %128, %133 : vector<8x128xf32>
    %c3_109 = arith.constant 3 : index
    %c0_110 = arith.constant 0 : index
    %c0_111 = arith.constant 0 : index
    %135 = vector.load %arg25[%c3_109, %c0_110, %c0_111] : memref<5x8x128xf32, #tpu.memory_space<vmem>>, vector<1x8x128xf32>
    %136 = vector.shape_cast %135 : vector<1x8x128xf32> to vector<8x128xf32>
    %c3_112 = arith.constant 3 : index
    %c0_113 = arith.constant 0 : index
    %c0_114 = arith.constant 0 : index
    %137 = vector.load %arg7[%c3_112, %c0_113, %c0_114] : memref<5x128x128xf32, #tpu.memory_space<vmem>>, vector<1x128x128xf32>
    %138 = vector.shape_cast %137 : vector<1x128x128xf32> to vector<128x128xf32>
    %cst_115 = arith.constant dense<0.000000e+00> : vector<8x128xf32>
    %139 = tpu.matmul %136, %138, %cst_115 {dimension_numbers = #tpu.dot_dimension_numbers<[1], [0], [0], [1], [0, 0, 1, 1], [], []>} : vector<8x128xf32>, vector<128x128xf32>, vector<8x128xf32> -> vector<8x128xf32>
    %140 = arith.addf %134, %139 : vector<8x128xf32>
    %c4_116 = arith.constant 4 : index
    %c0_117 = arith.constant 0 : index
    %c0_118 = arith.constant 0 : index
    %141 = vector.load %arg25[%c4_116, %c0_117, %c0_118] : memref<5x8x128xf32, #tpu.memory_space<vmem>>, vector<1x8x128xf32>
    %142 = vector.shape_cast %141 : vector<1x8x128xf32> to vector<8x128xf32>
    %c4_119 = arith.constant 4 : index
    %c0_120 = arith.constant 0 : index
    %c0_121 = arith.constant 0 : index
    %143 = vector.load %arg7[%c4_119, %c0_120, %c0_121] : memref<5x128x128xf32, #tpu.memory_space<vmem>>, vector<1x128x128xf32>
    %144 = vector.shape_cast %143 : vector<1x128x128xf32> to vector<128x128xf32>
    %cst_122 = arith.constant dense<0.000000e+00> : vector<8x128xf32>
    %145 = tpu.matmul %142, %144, %cst_122 {dimension_numbers = #tpu.dot_dimension_numbers<[1], [0], [0], [1], [0, 0, 1, 1], [], []>} : vector<8x128xf32>, vector<128x128xf32>, vector<8x128xf32> -> vector<8x128xf32>
    %146 = arith.addf %140, %145 : vector<8x128xf32>
    %c0_123 = arith.constant 0 : index
    %c0_124 = arith.constant 0 : index
    %147 = vector.load %arg8[%c0_123, %c0_124] : memref<1x128xf32, #tpu.memory_space<vmem>>, vector<1x128xf32>
    %148 = vector.broadcast %147 : vector<1x128xf32> to vector<8x128xf32>
    %149 = arith.addf %146, %148 : vector<8x128xf32>
    %cst_125 = arith.constant 0.000000e+00 : f32
    %150 = vector.broadcast %cst_125 : f32 to vector<8x128xf32>
    %151 = arith.maximumf %149, %150 : vector<8x128xf32>
    %cst_126 = arith.constant dense<0.000000e+00> : vector<128xf32>
    %152 = vector.multi_reduction <add>, %151, %cst_126 [0] : vector<8x128xf32> to vector<128xf32>
    %153 = vector.shape_cast %152 : vector<128xf32> to vector<1x128xf32>
    %154 = arith.mulf %151, %151 : vector<8x128xf32>
    %cst_127 = arith.constant dense<0.000000e+00> : vector<128xf32>
    %155 = vector.multi_reduction <add>, %154, %cst_127 [0] : vector<8x128xf32> to vector<128xf32>
    %156 = vector.shape_cast %155 : vector<128xf32> to vector<1x128xf32>
    %c0_128 = arith.constant 0 : index
    %c0_129 = arith.constant 0 : index
    %157 = vector.load %arg11[%c0_128, %c0_129] : memref<128x32xf32, #tpu.memory_space<vmem>>, vector<128x32xf32>
    %cst_130 = arith.constant dense<0.000000e+00> : vector<1x32xf32>
    %158 = tpu.matmul %153, %157, %cst_130 {dimension_numbers = #tpu.dot_dimension_numbers<[1], [0], [0], [1], [0, 0, 1, 1], [], []>} : vector<1x128xf32>, vector<128x32xf32>, vector<1x32xf32> -> vector<1x32xf32>
    %c0_131 = arith.constant 0 : index
    %c0_132 = arith.constant 0 : index
    %159 = vector.load %arg11[%c0_131, %c0_132] : memref<128x32xf32, #tpu.memory_space<vmem>>, vector<128x32xf32>
    %cst_133 = arith.constant dense<0.000000e+00> : vector<1x32xf32>
    %160 = tpu.matmul %156, %159, %cst_133 {dimension_numbers = #tpu.dot_dimension_numbers<[1], [0], [0], [1], [0, 0, 1, 1], [], []>} : vector<1x128xf32>, vector<128x32xf32>, vector<1x32xf32> -> vector<1x32xf32>
    %cst_134 = arith.constant 3.125000e-02 : f32
    %161 = vector.broadcast %cst_134 : f32 to vector<1x32xf32>
    %162 = arith.mulf %158, %161 : vector<1x32xf32>
    %cst_135 = arith.constant 3.125000e-02 : f32
    %163 = vector.broadcast %cst_135 : f32 to vector<1x32xf32>
    %164 = arith.mulf %160, %163 : vector<1x32xf32>
    %165 = arith.mulf %162, %162 : vector<1x32xf32>
    %166 = arith.subf %164, %165 : vector<1x32xf32>
    %c0_136 = arith.constant 0 : index
    %c0_137 = arith.constant 0 : index
    %167 = vector.load %arg9[%c0_136, %c0_137] : memref<1x32xf32, #tpu.memory_space<vmem>>, vector<1x32xf32>
    %cst_138 = arith.constant 9.99999974E-6 : f32
    %168 = vector.broadcast %cst_138 : f32 to vector<1x32xf32>
    %169 = arith.addf %166, %168 : vector<1x32xf32>
    %170 = math.rsqrt %169 : vector<1x32xf32>
    %171 = arith.mulf %167, %170 : vector<1x32xf32>
    %c0_139 = arith.constant 0 : index
    %c0_140 = arith.constant 0 : index
    %172 = vector.load %arg10[%c0_139, %c0_140] : memref<1x32xf32, #tpu.memory_space<vmem>>, vector<1x32xf32>
    %173 = arith.mulf %162, %171 : vector<1x32xf32>
    %174 = arith.subf %172, %173 : vector<1x32xf32>
    %c0_141 = arith.constant 0 : index
    %c0_142 = arith.constant 0 : index
    %175 = vector.load %arg12[%c0_141, %c0_142] : memref<32x128xf32, #tpu.memory_space<vmem>>, vector<32x128xf32>
    %cst_143 = arith.constant dense<0.000000e+00> : vector<1x128xf32>
    %176 = tpu.matmul %171, %175, %cst_143 {dimension_numbers = #tpu.dot_dimension_numbers<[1], [0], [0], [1], [0, 0, 1, 1], [], []>} : vector<1x32xf32>, vector<32x128xf32>, vector<1x128xf32> -> vector<1x128xf32>
    %c0_144 = arith.constant 0 : index
    %c0_145 = arith.constant 0 : index
    %177 = vector.load %arg12[%c0_144, %c0_145] : memref<32x128xf32, #tpu.memory_space<vmem>>, vector<32x128xf32>
    %cst_146 = arith.constant dense<0.000000e+00> : vector<1x128xf32>
    %178 = tpu.matmul %174, %177, %cst_146 {dimension_numbers = #tpu.dot_dimension_numbers<[1], [0], [0], [1], [0, 0, 1, 1], [], []>} : vector<1x32xf32>, vector<32x128xf32>, vector<1x128xf32> -> vector<1x128xf32>
    %179 = vector.broadcast %176 : vector<1x128xf32> to vector<8x128xf32>
    %180 = arith.mulf %151, %179 : vector<8x128xf32>
    %181 = vector.broadcast %178 : vector<1x128xf32> to vector<8x128xf32>
    %182 = arith.addf %180, %181 : vector<8x128xf32>
    %183 = vector.extract_strided_slice %182 {offsets = [0, 0], sizes = [2, 128], strides = [1, 1]} : vector<8x128xf32> to vector<2x128xf32>
    %c0_147 = arith.constant 0 : index
    %c0_148 = arith.constant 0 : index
    %c0_149 = arith.constant 0 : index
    %184 = vector.load %arg26[%c0_147, %c0_148, %c0_149] : memref<3x4x128xf32, #tpu.memory_space<vmem>>, vector<1x2x128xf32>
    %185 = vector.shape_cast %184 : vector<1x2x128xf32> to vector<2x128xf32>
    %186 = vector.shape_cast %183 : vector<2x128xf32> to vector<1x2x128xf32>
    tpu.vector_store %arg26[%c0_147, %c0_148, %c0_149], %186 {strides = array<i32>} : memref<3x4x128xf32, #tpu.memory_space<vmem>>, vector<1x2x128xf32>,
    %187 = vector.extract_strided_slice %182 {offsets = [4, 0], sizes = [2, 128], strides = [1, 1]} : vector<8x128xf32> to vector<2x128xf32>
    %c0_150 = arith.constant 0 : index
    %c2_151 = arith.constant 2 : index
    %c0_152 = arith.constant 0 : index
    %188 = vector.load %arg26[%c0_150, %c2_151, %c0_152] : memref<3x4x128xf32, #tpu.memory_space<vmem>>, vector<1x2x128xf32>
    %189 = vector.shape_cast %188 : vector<1x2x128xf32> to vector<2x128xf32>
    %190 = vector.shape_cast %187 : vector<2x128xf32> to vector<1x2x128xf32>
    tpu.vector_store %arg26[%c0_150, %c2_151, %c0_152], %190 {strides = array<i32>} : memref<3x4x128xf32, #tpu.memory_space<vmem>>, vector<1x2x128xf32>,
    %191 = vector.extract_strided_slice %182 {offsets = [1, 0], sizes = [2, 128], strides = [1, 1]} : vector<8x128xf32> to vector<2x128xf32>
    %c1_153 = arith.constant 1 : index
    %c0_154 = arith.constant 0 : index
    %c0_155 = arith.constant 0 : index
    %192 = vector.load %arg26[%c1_153, %c0_154, %c0_155] : memref<3x4x128xf32, #tpu.memory_space<vmem>>, vector<1x2x128xf32>
    %193 = vector.shape_cast %192 : vector<1x2x128xf32> to vector<2x128xf32>
    %194 = vector.shape_cast %191 : vector<2x128xf32> to vector<1x2x128xf32>
    tpu.vector_store %arg26[%c1_153, %c0_154, %c0_155], %194 {strides = array<i32>} : memref<3x4x128xf32, #tpu.memory_space<vmem>>, vector<1x2x128xf32>,
    %195 = vector.extract_strided_slice %182 {offsets = [5, 0], sizes = [2, 128], strides = [1, 1]} : vector<8x128xf32> to vector<2x128xf32>
    %c1_156 = arith.constant 1 : index
    %c2_157 = arith.constant 2 : index
    %c0_158 = arith.constant 0 : index
    %196 = vector.load %arg26[%c1_156, %c2_157, %c0_158] : memref<3x4x128xf32, #tpu.memory_space<vmem>>, vector<1x2x128xf32>
    %197 = vector.shape_cast %196 : vector<1x2x128xf32> to vector<2x128xf32>
    %198 = vector.shape_cast %195 : vector<2x128xf32> to vector<1x2x128xf32>
    tpu.vector_store %arg26[%c1_156, %c2_157, %c0_158], %198 {strides = array<i32>} : memref<3x4x128xf32, #tpu.memory_space<vmem>>, vector<1x2x128xf32>,
    %199 = vector.extract_strided_slice %182 {offsets = [2, 0], sizes = [2, 128], strides = [1, 1]} : vector<8x128xf32> to vector<2x128xf32>
    %c2_159 = arith.constant 2 : index
    %c0_160 = arith.constant 0 : index
    %c0_161 = arith.constant 0 : index
    %200 = vector.load %arg26[%c2_159, %c0_160, %c0_161] : memref<3x4x128xf32, #tpu.memory_space<vmem>>, vector<1x2x128xf32>
    %201 = vector.shape_cast %200 : vector<1x2x128xf32> to vector<2x128xf32>
    %202 = vector.shape_cast %199 : vector<2x128xf32> to vector<1x2x128xf32>
    tpu.vector_store %arg26[%c2_159, %c0_160, %c0_161], %202 {strides = array<i32>} : memref<3x4x128xf32, #tpu.memory_space<vmem>>, vector<1x2x128xf32>,
    %203 = vector.extract_strided_slice %182 {offsets = [6, 0], sizes = [2, 128], strides = [1, 1]} : vector<8x128xf32> to vector<2x128xf32>
    %c2_162 = arith.constant 2 : index
    %c2_163 = arith.constant 2 : index
    %c0_164 = arith.constant 0 : index
    %204 = vector.load %arg26[%c2_162, %c2_163, %c0_164] : memref<3x4x128xf32, #tpu.memory_space<vmem>>, vector<1x2x128xf32>
    %205 = vector.shape_cast %204 : vector<1x2x128xf32> to vector<2x128xf32>
    %206 = vector.shape_cast %203 : vector<2x128xf32> to vector<1x2x128xf32>
    tpu.vector_store %arg26[%c2_162, %c2_163, %c0_164], %206 {strides = array<i32>} : memref<3x4x128xf32, #tpu.memory_space<vmem>>, vector<1x2x128xf32>,
    %c0_165 = arith.constant 0 : index
    %c0_166 = arith.constant 0 : index
    %c0_167 = arith.constant 0 : index
    %207 = vector.load %arg26[%c0_165, %c0_166, %c0_167] : memref<3x4x128xf32, #tpu.memory_space<vmem>>, vector<1x4x128xf32>
    %208 = vector.shape_cast %207 : vector<1x4x128xf32> to vector<4x128xf32>
    %c0_168 = arith.constant 0 : index
    %c0_169 = arith.constant 0 : index
    %c0_170 = arith.constant 0 : index
    %209 = vector.load %arg13[%c0_168, %c0_169, %c0_170] : memref<3x128x128xf32, #tpu.memory_space<vmem>>, vector<1x128x128xf32>
    %210 = vector.shape_cast %209 : vector<1x128x128xf32> to vector<128x128xf32>
    %cst_171 = arith.constant dense<0.000000e+00> : vector<4x128xf32>
    %211 = tpu.matmul %208, %210, %cst_171 {dimension_numbers = #tpu.dot_dimension_numbers<[1], [0], [0], [1], [0, 0, 1, 1], [], []>} : vector<4x128xf32>, vector<128x128xf32>, vector<4x128xf32> -> vector<4x128xf32>
    %c1_172 = arith.constant 1 : index
    %c0_173 = arith.constant 0 : index
    %c0_174 = arith.constant 0 : index
    %212 = vector.load %arg26[%c1_172, %c0_173, %c0_174] : memref<3x4x128xf32, #tpu.memory_space<vmem>>, vector<1x4x128xf32>
    %213 = vector.shape_cast %212 : vector<1x4x128xf32> to vector<4x128xf32>
    %c1_175 = arith.constant 1 : index
    %c0_176 = arith.constant 0 : index
    %c0_177 = arith.constant 0 : index
    %214 = vector.load %arg13[%c1_175, %c0_176, %c0_177] : memref<3x128x128xf32, #tpu.memory_space<vmem>>, vector<1x128x128xf32>
    %215 = vector.shape_cast %214 : vector<1x128x128xf32> to vector<128x128xf32>
    %cst_178 = arith.constant dense<0.000000e+00> : vector<4x128xf32>
    %216 = tpu.matmul %213, %215, %cst_178 {dimension_numbers = #tpu.dot_dimension_numbers<[1], [0], [0], [1], [0, 0, 1, 1], [], []>} : vector<4x128xf32>, vector<128x128xf32>, vector<4x128xf32> -> vector<4x128xf32>
    %217 = arith.addf %211, %216 : vector<4x128xf32>
    %c2_179 = arith.constant 2 : index
    %c0_180 = arith.constant 0 : index
    %c0_181 = arith.constant 0 : index
    %218 = vector.load %arg26[%c2_179, %c0_180, %c0_181] : memref<3x4x128xf32, #tpu.memory_space<vmem>>, vector<1x4x128xf32>
    %219 = vector.shape_cast %218 : vector<1x4x128xf32> to vector<4x128xf32>
    %c2_182 = arith.constant 2 : index
    %c0_183 = arith.constant 0 : index
    %c0_184 = arith.constant 0 : index
    %220 = vector.load %arg13[%c2_182, %c0_183, %c0_184] : memref<3x128x128xf32, #tpu.memory_space<vmem>>, vector<1x128x128xf32>
    %221 = vector.shape_cast %220 : vector<1x128x128xf32> to vector<128x128xf32>
    %cst_185 = arith.constant dense<0.000000e+00> : vector<4x128xf32>
    %222 = tpu.matmul %219, %221, %cst_185 {dimension_numbers = #tpu.dot_dimension_numbers<[1], [0], [0], [1], [0, 0, 1, 1], [], []>} : vector<4x128xf32>, vector<128x128xf32>, vector<4x128xf32> -> vector<4x128xf32>
    %223 = arith.addf %217, %222 : vector<4x128xf32>
    %c0_186 = arith.constant 0 : index
    %c0_187 = arith.constant 0 : index
    %224 = vector.load %arg14[%c0_186, %c0_187] : memref<1x128xf32, #tpu.memory_space<vmem>>, vector<1x128xf32>
    %225 = vector.broadcast %224 : vector<1x128xf32> to vector<4x128xf32>
    %226 = arith.addf %223, %225 : vector<4x128xf32>
    %cst_188 = arith.constant 0.000000e+00 : f32
    %227 = vector.broadcast %cst_188 : f32 to vector<4x128xf32>
    %228 = arith.maximumf %226, %227 : vector<4x128xf32>
    %cst_189 = arith.constant dense<0.000000e+00> : vector<128xf32>
    %229 = vector.multi_reduction <add>, %228, %cst_189 [0] : vector<4x128xf32> to vector<128xf32>
    %230 = vector.shape_cast %229 : vector<128xf32> to vector<1x128xf32>
    %231 = arith.mulf %228, %228 : vector<4x128xf32>
    %cst_190 = arith.constant dense<0.000000e+00> : vector<128xf32>
    %232 = vector.multi_reduction <add>, %231, %cst_190 [0] : vector<4x128xf32> to vector<128xf32>
    %233 = vector.shape_cast %232 : vector<128xf32> to vector<1x128xf32>
    %c0_191 = arith.constant 0 : index
    %c0_192 = arith.constant 0 : index
    %234 = vector.load %arg17[%c0_191, %c0_192] : memref<128x64xf32, #tpu.memory_space<vmem>>, vector<128x64xf32>
    %cst_193 = arith.constant dense<0.000000e+00> : vector<1x64xf32>
    %235 = tpu.matmul %230, %234, %cst_193 {dimension_numbers = #tpu.dot_dimension_numbers<[1], [0], [0], [1], [0, 0, 1, 1], [], []>} : vector<1x128xf32>, vector<128x64xf32>, vector<1x64xf32> -> vector<1x64xf32>
    %c0_194 = arith.constant 0 : index
    %c0_195 = arith.constant 0 : index
    %236 = vector.load %arg17[%c0_194, %c0_195] : memref<128x64xf32, #tpu.memory_space<vmem>>, vector<128x64xf32>
    %cst_196 = arith.constant dense<0.000000e+00> : vector<1x64xf32>
    %237 = tpu.matmul %233, %236, %cst_196 {dimension_numbers = #tpu.dot_dimension_numbers<[1], [0], [0], [1], [0, 0, 1, 1], [], []>} : vector<1x128xf32>, vector<128x64xf32>, vector<1x64xf32> -> vector<1x64xf32>
    %cst_197 = arith.constant 1.250000e-01 : f32
    %238 = vector.broadcast %cst_197 : f32 to vector<1x64xf32>
    %239 = arith.mulf %235, %238 : vector<1x64xf32>
    %cst_198 = arith.constant 1.250000e-01 : f32
    %240 = vector.broadcast %cst_198 : f32 to vector<1x64xf32>
    %241 = arith.mulf %237, %240 : vector<1x64xf32>
    %242 = arith.mulf %239, %239 : vector<1x64xf32>
    %243 = arith.subf %241, %242 : vector<1x64xf32>
    %c0_199 = arith.constant 0 : index
    %c0_200 = arith.constant 0 : index
    %244 = vector.load %arg15[%c0_199, %c0_200] : memref<1x64xf32, #tpu.memory_space<vmem>>, vector<1x64xf32>
    %cst_201 = arith.constant 9.99999974E-6 : f32
    %245 = vector.broadcast %cst_201 : f32 to vector<1x64xf32>
    %246 = arith.addf %243, %245 : vector<1x64xf32>
    %247 = math.rsqrt %246 : vector<1x64xf32>
    %248 = arith.mulf %244, %247 : vector<1x64xf32>
    %c0_202 = arith.constant 0 : index
    %c0_203 = arith.constant 0 : index
    %249 = vector.load %arg16[%c0_202, %c0_203] : memref<1x64xf32, #tpu.memory_space<vmem>>, vector<1x64xf32>
    %250 = arith.mulf %239, %248 : vector<1x64xf32>
    %251 = arith.subf %249, %250 : vector<1x64xf32>
    %c0_204 = arith.constant 0 : index
    %c0_205 = arith.constant 0 : index
    %252 = vector.load %arg18[%c0_204, %c0_205] : memref<64x128xf32, #tpu.memory_space<vmem>>, vector<64x128xf32>
    %cst_206 = arith.constant dense<0.000000e+00> : vector<1x128xf32>
    %253 = tpu.matmul %248, %252, %cst_206 {dimension_numbers = #tpu.dot_dimension_numbers<[1], [0], [0], [1], [0, 0, 1, 1], [], []>} : vector<1x64xf32>, vector<64x128xf32>, vector<1x128xf32> -> vector<1x128xf32>
    %c0_207 = arith.constant 0 : index
    %c0_208 = arith.constant 0 : index
    %254 = vector.load %arg18[%c0_207, %c0_208] : memref<64x128xf32, #tpu.memory_space<vmem>>, vector<64x128xf32>
    %cst_209 = arith.constant dense<0.000000e+00> : vector<1x128xf32>
    %255 = tpu.matmul %251, %254, %cst_209 {dimension_numbers = #tpu.dot_dimension_numbers<[1], [0], [0], [1], [0, 0, 1, 1], [], []>} : vector<1x64xf32>, vector<64x128xf32>, vector<1x128xf32> -> vector<1x128xf32>
    %256 = vector.broadcast %253 : vector<1x128xf32> to vector<4x128xf32>
    %257 = arith.mulf %228, %256 : vector<4x128xf32>
    %258 = vector.broadcast %255 : vector<1x128xf32> to vector<4x128xf32>
    %259 = arith.addf %257, %258 : vector<4x128xf32>
    %260 = vector.extract_strided_slice %259 {offsets = [0, 0], sizes = [1, 128], strides = [1, 1]} : vector<4x128xf32> to vector<1x128xf32>
    %c0_210 = arith.constant 0 : index
    %c0_211 = arith.constant 0 : index
    %c0_212 = arith.constant 0 : index
    %261 = vector.load %arg27[%c0_210, %c0_211, %c0_212] : memref<2x2x128xf32, #tpu.memory_space<vmem>>, vector<1x1x128xf32>
    %262 = vector.shape_cast %261 : vector<1x1x128xf32> to vector<1x128xf32>
    %263 = vector.shape_cast %260 : vector<1x128xf32> to vector<1x1x128xf32>
    tpu.vector_store %arg27[%c0_210, %c0_211, %c0_212], %263 {strides = array<i32>} : memref<2x2x128xf32, #tpu.memory_space<vmem>>, vector<1x1x128xf32>,
    %264 = vector.extract_strided_slice %259 {offsets = [2, 0], sizes = [1, 128], strides = [1, 1]} : vector<4x128xf32> to vector<1x128xf32>
    %c0_213 = arith.constant 0 : index
    %c1_214 = arith.constant 1 : index
    %c0_215 = arith.constant 0 : index
    %265 = vector.load %arg27[%c0_213, %c1_214, %c0_215] : memref<2x2x128xf32, #tpu.memory_space<vmem>>, vector<1x1x128xf32>
    %266 = vector.shape_cast %265 : vector<1x1x128xf32> to vector<1x128xf32>
    %267 = vector.shape_cast %264 : vector<1x128xf32> to vector<1x1x128xf32>
    tpu.vector_store %arg27[%c0_213, %c1_214, %c0_215], %267 {strides = array<i32>} : memref<2x2x128xf32, #tpu.memory_space<vmem>>, vector<1x1x128xf32>,
    %268 = vector.extract_strided_slice %259 {offsets = [1, 0], sizes = [1, 128], strides = [1, 1]} : vector<4x128xf32> to vector<1x128xf32>
    %c1_216 = arith.constant 1 : index
    %c0_217 = arith.constant 0 : index
    %c0_218 = arith.constant 0 : index
    %269 = vector.load %arg27[%c1_216, %c0_217, %c0_218] : memref<2x2x128xf32, #tpu.memory_space<vmem>>, vector<1x1x128xf32>
    %270 = vector.shape_cast %269 : vector<1x1x128xf32> to vector<1x128xf32>
    %271 = vector.shape_cast %268 : vector<1x128xf32> to vector<1x1x128xf32>
    tpu.vector_store %arg27[%c1_216, %c0_217, %c0_218], %271 {strides = array<i32>} : memref<2x2x128xf32, #tpu.memory_space<vmem>>, vector<1x1x128xf32>,
    %272 = vector.extract_strided_slice %259 {offsets = [3, 0], sizes = [1, 128], strides = [1, 1]} : vector<4x128xf32> to vector<1x128xf32>
    %c1_219 = arith.constant 1 : index
    %c1_220 = arith.constant 1 : index
    %c0_221 = arith.constant 0 : index
    %273 = vector.load %arg27[%c1_219, %c1_220, %c0_221] : memref<2x2x128xf32, #tpu.memory_space<vmem>>, vector<1x1x128xf32>
    %274 = vector.shape_cast %273 : vector<1x1x128xf32> to vector<1x128xf32>
    %275 = vector.shape_cast %272 : vector<1x128xf32> to vector<1x1x128xf32>
    tpu.vector_store %arg27[%c1_219, %c1_220, %c0_221], %275 {strides = array<i32>} : memref<2x2x128xf32, #tpu.memory_space<vmem>>, vector<1x1x128xf32>,
    %c0_222 = arith.constant 0 : index
    %c0_223 = arith.constant 0 : index
    %c0_224 = arith.constant 0 : index
    %276 = vector.load %arg27[%c0_222, %c0_223, %c0_224] : memref<2x2x128xf32, #tpu.memory_space<vmem>>, vector<1x2x128xf32>
    %277 = vector.shape_cast %276 : vector<1x2x128xf32> to vector<2x128xf32>
    %c0_225 = arith.constant 0 : index
    %c0_226 = arith.constant 0 : index
    %c0_227 = arith.constant 0 : index
    %278 = vector.load %arg19[%c0_225, %c0_226, %c0_227] : memref<2x128x128xf32, #tpu.memory_space<vmem>>, vector<1x128x128xf32>
    %279 = vector.shape_cast %278 : vector<1x128x128xf32> to vector<128x128xf32>
    %cst_228 = arith.constant dense<0.000000e+00> : vector<2x128xf32>
    %280 = tpu.matmul %277, %279, %cst_228 {dimension_numbers = #tpu.dot_dimension_numbers<[1], [0], [0], [1], [0, 0, 1, 1], [], []>} : vector<2x128xf32>, vector<128x128xf32>, vector<2x128xf32> -> vector<2x128xf32>
    %c1_229 = arith.constant 1 : index
    %c0_230 = arith.constant 0 : index
    %c0_231 = arith.constant 0 : index
    %281 = vector.load %arg27[%c1_229, %c0_230, %c0_231] : memref<2x2x128xf32, #tpu.memory_space<vmem>>, vector<1x2x128xf32>
    %282 = vector.shape_cast %281 : vector<1x2x128xf32> to vector<2x128xf32>
    %c1_232 = arith.constant 1 : index
    %c0_233 = arith.constant 0 : index
    %c0_234 = arith.constant 0 : index
    %283 = vector.load %arg19[%c1_232, %c0_233, %c0_234] : memref<2x128x128xf32, #tpu.memory_space<vmem>>, vector<1x128x128xf32>
    %284 = vector.shape_cast %283 : vector<1x128x128xf32> to vector<128x128xf32>
    %cst_235 = arith.constant dense<0.000000e+00> : vector<2x128xf32>
    %285 = tpu.matmul %282, %284, %cst_235 {dimension_numbers = #tpu.dot_dimension_numbers<[1], [0], [0], [1], [0, 0, 1, 1], [], []>} : vector<2x128xf32>, vector<128x128xf32>, vector<2x128xf32> -> vector<2x128xf32>
    %286 = arith.addf %280, %285 : vector<2x128xf32>
    %c0_236 = arith.constant 0 : index
    %c0_237 = arith.constant 0 : index
    %287 = vector.load %arg20[%c0_236, %c0_237] : memref<1x128xf32, #tpu.memory_space<vmem>>, vector<1x128xf32>
    %288 = vector.broadcast %287 : vector<1x128xf32> to vector<2x128xf32>
    %289 = arith.addf %286, %288 : vector<2x128xf32>
    %cst_238 = arith.constant 0.000000e+00 : f32
    %290 = vector.broadcast %cst_238 : f32 to vector<2x128xf32>
    %291 = arith.maximumf %289, %290 : vector<2x128xf32>
    %c0_239 = arith.constant 0 : index
    %c0_240 = arith.constant 0 : index
    %292 = vector.load %arg21[%c0_239, %c0_240] : memref<128x32xf32, #tpu.memory_space<vmem>>, vector<128x32xf32>
    %cst_241 = arith.constant dense<0.000000e+00> : vector<2x32xf32>
    %293 = tpu.matmul %291, %292, %cst_241 {dimension_numbers = #tpu.dot_dimension_numbers<[1], [0], [0], [1], [0, 0, 1, 1], [], []>} : vector<2x128xf32>, vector<128x32xf32>, vector<2x32xf32> -> vector<2x32xf32>
    %c0_242 = arith.constant 0 : index
    %c0_243 = arith.constant 0 : index
    %294 = vector.load %arg22[%c0_242, %c0_243] : memref<1x32xf32, #tpu.memory_space<vmem>>, vector<1x32xf32>
    %295 = vector.broadcast %294 : vector<1x32xf32> to vector<2x32xf32>
    %296 = arith.addf %293, %295 : vector<2x32xf32>
    %c0_244 = arith.constant 0 : index
    %c0_245 = arith.constant 0 : index
    %297 = vector.load %arg23[%c0_244, %c0_245] : memref<2x32xf32, #tpu.memory_space<vmem>>, vector<2x32xf32>
    tpu.vector_store %arg23[%c0_244, %c0_245], %296 {strides = array<i32>} : memref<2x32xf32, #tpu.memory_space<vmem>>, vector<2x32xf32>,
    return
  }
}

</mosaic_0001>

<llo_original>
// kernel: forward.1
$region0: #{forward.1}
  #allocation0 [shape = 'u32[]', space=smem, size = 0x4, offset = 0x4, fixed_abs, tag = 'smem constant byte address 0x4 - core index']
  #allocation1 [shape = 'u32[144,128]{1,0:T(1,128)}', space=vmem, size = 0x12000, scoped, tag = 'internal scratch']
  #allocation2 [shape = 'f32[3,16,30]{2,1,0:T(8,128)}', space=vmem, size = 0x6000, scoped, tag = 'scratch operand']
  #allocation3 [shape = 'f32[5,8,128]{2,1,0:T(8,128)}', space=vmem, size = 0x5000, scoped, tag = 'scratch operand']
  #allocation4 [shape = 'f32[3,4,128]{2,1,0:T(4,128)}', space=vmem, size = 0x1800, scoped, tag = 'scratch operand']
  #allocation5 [shape = 'f32[2,2,128]{2,1,0:T(2,128)}', space=vmem, size = 0x800, scoped, tag = 'scratch operand']
  %s0 = inlined_call_operand.vmem [shape: f32[20,30], index: 0, kind: input, shape index: {}]
  %s1 = inlined_call_operand.hbm [shape: f32[3,30,128], index: 1, kind: input, shape index: {}]
  %s2 = inlined_call_operand.vmem [shape: f32[1,128], index: 2, kind: input, shape index: {}]
  %s3 = inlined_call_operand.vmem [shape: f32[1,16], index: 3, kind: input, shape index: {}]
  %s4 = inlined_call_operand.vmem [shape: f32[1,16], index: 4, kind: input, shape index: {}]
  %s5 = inlined_call_operand.hbm [shape: f32[128,16], index: 5, kind: input, shape index: {}]
  %s6 = inlined_call_operand.vmem [shape: f32[16,128], index: 6, kind: input, shape index: {}]
  %s7 = inlined_call_operand.hbm [shape: f32[5,128,128], index: 7, kind: input, shape index: {}]
  %s8 = inlined_call_operand.hbm [shape: f32[1,128], index: 8, kind: input, shape index: {}]
  %s9 = inlined_call_operand.vmem [shape: f32[1,32], index: 9, kind: input, shape index: {}]
  %s10 = inlined_call_operand.vmem [shape: f32[1,32], index: 10, kind: input, shape index: {}]
  %s11 = inlined_call_operand.hbm [shape: f32[128,32], index: 11, kind: input, shape index: {}]
  %s12 = inlined_call_operand.vmem [shape: f32[32,128], index: 12, kind: input, shape index: {}]
  %s13 = inlined_call_operand.hbm [shape: f32[3,128,128], index: 13, kind: input, shape index: {}]
  %s14 = inlined_call_operand.hbm [shape: f32[1,128], index: 14, kind: input, shape index: {}]
  %s15 = inlined_call_operand.vmem [shape: f32[1,64], index: 15, kind: input, shape index: {}]
  %s16 = inlined_call_operand.vmem [shape: f32[1,64], index: 16, kind: input, shape index: {}]
  %s17 = inlined_call_operand.hbm [shape: f32[128,64], index: 17, kind: input, shape index: {}]
  %s18 = inlined_call_operand.hbm [shape: f32[64,128], index: 18, kind: input, shape index: {}]
  %s19 = inlined_call_operand.vmem [shape: f32[2,128,128], index: 19, kind: input, shape index: {}]
  %s20 = inlined_call_operand.hbm [shape: f32[1,128], index: 20, kind: input, shape index: {}]
  %s21 = inlined_call_operand.hbm [shape: f32[128,32], index: 21, kind: input, shape index: {}]
  %s22 = inlined_call_operand.hbm [shape: f32[1,32], index: 22, kind: input, shape index: {}]
  %s23 = inlined_call_operand.hbm [shape: f32[2,32], index: 23, kind: output, shape index: {}]
  %s24 = sld [smem:[#allocation0]]
  $region150: #{forward.1} parent=0
    _
  %s26 = ssub.s32 1, %s24
  %s27 = scalar_select 0, %s26, %s24
  $region1: #{forward.1} parent=0
    #allocation6 [shape = 'u8[49152]{0}', space=vmem, size = 0xc000, scoped, tag = 'input window, operand 1, single buffered']
    #allocation7 [shape = 's32[1]{0}', space=sflag, size = 0x4, scoped, tag = 'scoped memory for forward.1']
    #allocation8 [shape = 's32[1]{0}', space=sflag, size = 0x4, scoped, tag = 'scoped memory for forward.1']
    #allocation9 [shape = 'u8[65536]{0}', space=vmem, size = 0x10000, scoped, tag = 'input window, operand 5, single buffered']
    #allocation10 [shape = 's32[1]{0}', space=sflag, size = 0x4, scoped, tag = 'scoped memory for forward.1']
    #allocation11 [shape = 'u8[327680]{0}', space=vmem, size = 0x50000, scoped, tag = 'input window, operand 7, single buffered']
    #allocation12 [shape = 'u8[512]{0}', space=vmem, size = 0x400, scoped, tag = 'input window, operand 8, single buffered']
    #allocation13 [shape = 's32[1]{0}', space=sflag, size = 0x4, scoped, tag = 'scoped memory for forward.1']
    #allocation14 [shape = 'u8[65536]{0}', space=vmem, size = 0x10000, scoped, tag = 'input window, operand 11, single buffered']
    #allocation15 [shape = 'u8[196608]{0}', space=vmem, size = 0x30000, scoped, tag = 'input window, operand 13, single buffered']
    #allocation16 [shape = 's32[1]{0}', space=sflag, size = 0x4, scoped, tag = 'scoped memory for forward.1']
    #allocation17 [shape = 'u8[512]{0}', space=vmem, size = 0x400, scoped, tag = 'input window, operand 14, single buffered']
    #allocation18 [shape = 'u8[65536]{0}', space=vmem, size = 0x10000, scoped, tag = 'input window, operand 17, single buffered']
    #allocation19 [shape = 's32[1]{0}', space=sflag, size = 0x4, scoped, tag = 'scoped memory for forward.1']
    #allocation20 [shape = 'u8[32768]{0}', space=vmem, size = 0x8000, scoped, tag = 'input window, operand 18, single buffered']
    #allocation21 [shape = 'u8[512]{0}', space=vmem, size = 0x400, scoped, tag = 'input window, operand 20, single buffered']
    #allocation22 [shape = 's32[1]{0}', space=sflag, size = 0x4, scoped, tag = 'scoped memory for forward.1']
    #allocation23 [shape = 'u8[65536]{0}', space=vmem, size = 0x10000, scoped, tag = 'input window, operand 21, single buffered']
    #allocation24 [shape = 'u8[512]{0}', space=vmem, size = 0x400, scoped, tag = 'input window, operand 22, single buffered']
    #allocation25 [shape = 's32[1]{0}', space=sflag, size = 0x4, scoped, tag = 'scoped memory for forward.1']
    #allocation26 [shape = 'u8[1024]{0}', space=vmem, size = 0x400, scoped, tag = 'output window, operand 0, single buffered']
    %28 = vsyncpa [#allocation7], 0
    %29 = vsyncpa [#allocation10], 0
    %30 = vsyncpa [#allocation13], 0
    %31 = vsyncpa [#allocation16], 0
    %32 = vsyncpa [#allocation19], 0
    %33 = vsyncpa [#allocation22], 0
    %34 = vsyncpa [#allocation25], 0
    %35 = vsyncpa [#allocation8], 0
    // Predicated region
    $region2: #{forward.1} parent=1 // pred_check
      _
    $region3: #{forward.1} parent=1 // pred_check_branch
      %37 = sbr.rel (0) target = $region5
    $region4: #{forward.1} parent=1 // pred_region
      _
    $region5: #{forward.1} parent=1 // pred_fallthru
      _
    // Predicated region
    $region6: #{forward.1} parent=1 // pred_check
      _
    $region7: #{forward.1} parent=1 // pred_check_branch
      %39 = sbr.rel (0) target = $region9
    $region8: #{forward.1} parent=1 // pred_region
      %s41 = ssub.s32 1536, 1536
      %42 = vsyncadd [#allocation7], %s41
      %s43 = sshll.u32 [#allocation6], 4
      %s44 = int_to_ptr.vmem [resolvable:$true] %s43
      %49 = dma.hbm_to_vmem [thread:$0]  %s1, 1536, %s44, [#allocation7], 128, 128, 8
    $region9: #{forward.1} parent=1 // pred_fallthru
      _
    // Predicated region
    $region10: #{forward.1} parent=1 // pred_check
      _
    $region11: #{forward.1} parent=1 // pred_check_branch
      %51 = sbr.rel (0) target = $region13
    $region12: #{forward.1} parent=1 // pred_region
      _
    $region13: #{forward.1} parent=1 // pred_fallthru
      _
    // Predicated region
    $region14: #{forward.1} parent=1 // pred_check
      _
    $region15: #{forward.1} parent=1 // pred_check_branch
      %53 = sbr.rel (0) target = $region17
    $region16: #{forward.1} parent=1 // pred_region
      _
    $region17: #{forward.1} parent=1 // pred_fallthru
      _
    // Predicated region
    $region18: #{forward.1} parent=1 // pred_check
      _
    $region19: #{forward.1} parent=1 // pred_check_branch
      %55 = sbr.rel (0) target = $region21
    $region20: #{forward.1} parent=1 // pred_region
      _
    $region21: #{forward.1} parent=1 // pred_fallthru
      _
    // Predicated region
    $region22: #{forward.1} parent=1 // pred_check
      _
    $region23: #{forward.1} parent=1 // pred_check_branch
      %57 = sbr.rel (0) target = $region25
    $region24: #{forward.1} parent=1 // pred_region
      %s59 = ssub.s32 2048, 2048
      %60 = vsyncadd [#allocation10], %s59
      %s61 = sshll.u32 [#allocation9], 4
      %s62 = int_to_ptr.vmem [resolvable:$true] %s61
      %67 = dma.hbm_to_vmem [thread:$0]  %s5, 2048, %s62, [#allocation10], 128, 128, 8
    $region25: #{forward.1} parent=1 // pred_fallthru
      _
    // Predicated region
    $region26: #{forward.1} parent=1 // pred_check
      _
    $region27: #{forward.1} parent=1 // pred_check_branch
      %69 = sbr.rel (0) target = $region29
    $region28: #{forward.1} parent=1 // pred_region
      _
    $region29: #{forward.1} parent=1 // pred_fallthru
      _
    // Predicated region
    $region30: #{forward.1} parent=1 // pred_check
      _
    $region31: #{forward.1} parent=1 // pred_check_branch
      %71 = sbr.rel (0) target = $region33
    $region32: #{forward.1} parent=1 // pred_region
      %s73 = ssub.s32 10240, 10240
      %74 = vsyncadd [#allocation10], %s73
      %s75 = sshll.u32 [#allocation11], 4
      %s76 = int_to_ptr.vmem [resolvable:$true] %s75
      %81 = dma.hbm_to_vmem [thread:$0]  %s7, 10240, %s76, [#allocation10], 128, 128, 8
    $region33: #{forward.1} parent=1 // pred_fallthru
      _
    // Predicated region
    $region34: #{forward.1} parent=1 // pred_check
      _
    $region35: #{forward.1} parent=1 // pred_check_branch
      %83 = sbr.rel (0) target = $region37
    $region36: #{forward.1} parent=1 // pred_region
      %s85 = ssub.s32 16, 16
      %86 = vsyncadd [#allocation13], %s85
      %s88 = sshll.u32 [#allocation12], 4
      %s89 = int_to_ptr.vmem [resolvable:$true] %s88
      %91 = dma.hbm_to_vmem [thread:$0]  %s8, 16, %s89, [#allocation13]
    $region37: #{forward.1} parent=1 // pred_fallthru
      _
    // Predicated region
    $region38: #{forward.1} parent=1 // pred_check
      _
    $region39: #{forward.1} parent=1 // pred_check_branch
      %93 = sbr.rel (0) target = $region41
    $region40: #{forward.1} parent=1 // pred_region
      _
    $region41: #{forward.1} parent=1 // pred_fallthru
      _
    // Predicated region
    $region42: #{forward.1} parent=1 // pred_check
      _
    $region43: #{forward.1} parent=1 // pred_check_branch
      %95 = sbr.rel (0) target = $region45
    $region44: #{forward.1} parent=1 // pred_region
      _
    $region45: #{forward.1} parent=1 // pred_fallthru
      _
    // Predicated region
    $region46: #{forward.1} parent=1 // pred_check
      _
    $region47: #{forward.1} parent=1 // pred_check_branch
      %97 = sbr.rel (0) target = $region49
    $region48: #{forward.1} parent=1 // pred_region
      %s99 = ssub.s32 2048, 2048
      %100 = vsyncadd [#allocation13], %s99
      %s101 = sshll.u32 [#allocation14], 4
      %s102 = int_to_ptr.vmem [resolvable:$true] %s101
      %107 = dma.hbm_to_vmem [thread:$0]  %s11, 2048, %s102, [#allocation13], 128, 128, 8
    $region49: #{forward.1} parent=1 // pred_fallthru
      _
    // Predicated region
    $region50: #{forward.1} parent=1 // pred_check
      _
    $region51: #{forward.1} parent=1 // pred_check_branch
      %109 = sbr.rel (0) target = $region53
    $region52: #{forward.1} parent=1 // pred_region
      _
    $region53: #{forward.1} parent=1 // pred_fallthru
      _
    // Predicated region
    $region54: #{forward.1} parent=1 // pred_check
      _
    $region55: #{forward.1} parent=1 // pred_check_branch
      %111 = sbr.rel (0) target = $region57
    $region56: #{forward.1} parent=1 // pred_region
      %s113 = ssub.s32 6144, 6144
      %114 = vsyncadd [#allocation16], %s113
      %s115 = sshll.u32 [#allocation15], 4
      %s116 = int_to_ptr.vmem [resolvable:$true] %s115
      %121 = dma.hbm_to_vmem [thread:$0]  %s13, 6144, %s116, [#allocation16], 128, 128, 8
    $region57: #{forward.1} parent=1 // pred_fallthru
      _
    // Predicated region
    $region58: #{forward.1} parent=1 // pred_check
      _
    $region59: #{forward.1} parent=1 // pred_check_branch
      %123 = sbr.rel (0) target = $region61
    $region60: #{forward.1} parent=1 // pred_region
      %s125 = ssub.s32 16, 16
      %126 = vsyncadd [#allocation16], %s125
      %s128 = sshll.u32 [#allocation17], 4
      %s129 = int_to_ptr.vmem [resolvable:$true] %s128
      %131 = dma.hbm_to_vmem [thread:$0]  %s14, 16, %s129, [#allocation16]
    $region61: #{forward.1} parent=1 // pred_fallthru
      _
    // Predicated region
    $region62: #{forward.1} parent=1 // pred_check
      _
    $region63: #{forward.1} parent=1 // pred_check_branch
      %133 = sbr.rel (0) target = $region65
    $region64: #{forward.1} parent=1 // pred_region
      _
    $region65: #{forward.1} parent=1 // pred_fallthru
      _
    // Predicated region
    $region66: #{forward.1} parent=1 // pred_check
      _
    $region67: #{forward.1} parent=1 // pred_check_branch
      %135 = sbr.rel (0) target = $region69
    $region68: #{forward.1} parent=1 // pred_region
      _
    $region69: #{forward.1} parent=1 // pred_fallthru
      _
    // Predicated region
    $region70: #{forward.1} parent=1 // pred_check
      _
    $region71: #{forward.1} parent=1 // pred_check_branch
      %137 = sbr.rel (0) target = $region73
    $region72: #{forward.1} parent=1 // pred_region
      %s139 = ssub.s32 2048, 2048
      %140 = vsyncadd [#allocation19], %s139
      %s141 = sshll.u32 [#allocation18], 4
      %s142 = int_to_ptr.vmem [resolvable:$true] %s141
      %147 = dma.hbm_to_vmem [thread:$0]  %s17, 2048, %s142, [#allocation19], 128, 128, 8
    $region73: #{forward.1} parent=1 // pred_fallthru
      _
    // Predicated region
    $region74: #{forward.1} parent=1 // pred_check
      _
    $region75: #{forward.1} parent=1 // pred_check_branch
      %149 = sbr.rel (0) target = $region77
    $region76: #{forward.1} parent=1 // pred_region
      %s151 = ssub.s32 1024, 1024
      %152 = vsyncadd [#allocation19], %s151
      %s153 = sshll.u32 [#allocation20], 4
      %s154 = int_to_ptr.vmem [resolvable:$true] %s153
      %159 = dma.hbm_to_vmem [thread:$0]  %s18, 1024, %s154, [#allocation19], 128, 128, 8
    $region77: #{forward.1} parent=1 // pred_fallthru
      _
    // Predicated region
    $region78: #{forward.1} parent=1 // pred_check
      _
    $region79: #{forward.1} parent=1 // pred_check_branch
      %161 = sbr.rel (0) target = $region81
    $region80: #{forward.1} parent=1 // pred_region
      _
    $region81: #{forward.1} parent=1 // pred_fallthru
      _
    // Predicated region
    $region82: #{forward.1} parent=1 // pred_check
      _
    $region83: #{forward.1} parent=1 // pred_check_branch
      %163 = sbr.rel (0) target = $region85
    $region84: #{forward.1} parent=1 // pred_region
      %s165 = ssub.s32 16, 16
      %166 = vsyncadd [#allocation22], %s165
      %s168 = sshll.u32 [#allocation21], 4
      %s169 = int_to_ptr.vmem [resolvable:$true] %s168
      %171 = dma.hbm_to_vmem [thread:$0]  %s20, 16, %s169, [#allocation22]
    $region85: #{forward.1} parent=1 // pred_fallthru
      _
    // Predicated region
    $region86: #{forward.1} parent=1 // pred_check
      _
    $region87: #{forward.1} parent=1 // pred_check_branch
      %173 = sbr.rel (0) target = $region89
    $region88: #{forward.1} parent=1 // pred_region
      %s175 = ssub.s32 2048, 2048
      %176 = vsyncadd [#allocation22], %s175
      %s177 = sshll.u32 [#allocation23], 4
      %s178 = int_to_ptr.vmem [resolvable:$true] %s177
      %183 = dma.hbm_to_vmem [thread:$0]  %s21, 2048, %s178, [#allocation22], 128, 128, 8
    $region89: #{forward.1} parent=1 // pred_fallthru
      _
    // Predicated region
    $region90: #{forward.1} parent=1 // pred_check
      _
    $region91: #{forward.1} parent=1 // pred_check_branch
      %185 = sbr.rel (0) target = $region93
    $region92: #{forward.1} parent=1 // pred_region
      %s187 = ssub.s32 16, 16
      %188 = vsyncadd [#allocation25], %s187
      %s190 = sshll.u32 [#allocation24], 4
      %s191 = int_to_ptr.vmem [resolvable:$true] %s190
      %193 = dma.hbm_to_vmem [thread:$0]  %s22, 16, %s191, [#allocation25]
    $region93: #{forward.1} parent=1 // pred_fallthru
      _
    // Predicated region
    $region94: #{forward.1} parent=1 // pred_check
      _
    $region95: #{forward.1} parent=1 // pred_check_branch
      %195 = sbr.rel (0) target = $region97
    $region96: #{forward.1} parent=1 // pred_region
      %196 = dma.done [#allocation7], 1536
    $region97: #{forward.1} parent=1 // pred_fallthru
      _
    // Predicated region
    $region98: #{forward.1} parent=1 // pred_check
      _
    $region99: #{forward.1} parent=1 // pred_check_branch
      %198 = sbr.rel (0) target = $region101
    $region100: #{forward.1} parent=1 // pred_region
      %199 = dma.done [#allocation10], 2048
    $region101: #{forward.1} parent=1 // pred_fallthru
      _
    // Predicated region
    $region102: #{forward.1} parent=1 // pred_check
      _
    $region103: #{forward.1} parent=1 // pred_check_branch
      %201 = sbr.rel (0) target = $region105
    $region104: #{forward.1} parent=1 // pred_region
      %202 = dma.done [#allocation10], 10240
    $region105: #{forward.1} parent=1 // pred_fallthru
      _
    // Predicated region
    $region106: #{forward.1} parent=1 // pred_check
      _
    $region107: #{forward.1} parent=1 // pred_check_branch
      %204 = sbr.rel (0) target = $region109
    $region108: #{forward.1} parent=1 // pred_region
      %205 = dma.done [#allocation13], 16
    $region109: #{forward.1} parent=1 // pred_fallthru
      _
    // Predicated region
    $region110: #{forward.1} parent=1 // pred_check
      _
    $region111: #{forward.1} parent=1 // pred_check_branch
      %207 = sbr.rel (0) target = $region113
    $region112: #{forward.1} parent=1 // pred_region
      %208 = dma.done [#allocation13], 2048
    $region113: #{forward.1} parent=1 // pred_fallthru
      _
    // Predicated region
    $region114: #{forward.1} parent=1 // pred_check
      _
    $region115: #{forward.1} parent=1 // pred_check_branch
      %210 = sbr.rel (0) target = $region117
    $region116: #{forward.1} parent=1 // pred_region
      %211 = dma.done [#allocation16], 6144
    $region117: #{forward.1} parent=1 // pred_fallthru
      _
    // Predicated region
    $region118: #{forward.1} parent=1 // pred_check
      _
    $region119: #{forward.1} parent=1 // pred_check_branch
      %213 = sbr.rel (0) target = $region121
    $region120: #{forward.1} parent=1 // pred_region
      %214 = dma.done [#allocation16], 16
    $region121: #{forward.1} parent=1 // pred_fallthru
      _
    // Predicated region
    $region122: #{forward.1} parent=1 // pred_check
      _
    $region123: #{forward.1} parent=1 // pred_check_branch
      %216 = sbr.rel (0) target = $region125
    $region124: #{forward.1} parent=1 // pred_region
      %217 = dma.done [#allocation19], 2048
    $region125: #{forward.1} parent=1 // pred_fallthru
      _
    // Predicated region
    $region126: #{forward.1} parent=1 // pred_check
      _
    $region127: #{forward.1} parent=1 // pred_check_branch
      %219 = sbr.rel (0) target = $region129
    $region128: #{forward.1} parent=1 // pred_region
      %220 = dma.done [#allocation19], 1024
    $region129: #{forward.1} parent=1 // pred_fallthru
      _
    // Predicated region
    $region130: #{forward.1} parent=1 // pred_check
      _
    $region131: #{forward.1} parent=1 // pred_check_branch
      %222 = sbr.rel (0) target = $region133
    $region132: #{forward.1} parent=1 // pred_region
      %223 = dma.done [#allocation22], 16
    $region133: #{forward.1} parent=1 // pred_fallthru
      _
    // Predicated region
    $region134: #{forward.1} parent=1 // pred_check
      _
    $region135: #{forward.1} parent=1 // pred_check_branch
      %225 = sbr.rel (0) target = $region137
    $region136: #{forward.1} parent=1 // pred_region
      %226 = dma.done [#allocation22], 2048
    $region137: #{forward.1} parent=1 // pred_fallthru
      _
    // Predicated region
    $region138: #{forward.1} parent=1 // pred_check
      _
    $region139: #{forward.1} parent=1 // pred_check_branch
      %228 = sbr.rel (0) target = $region141
    $region140: #{forward.1} parent=1 // pred_region
      %229 = dma.done [#allocation25], 16
    $region141: #{forward.1} parent=1 // pred_fallthru
      _
    %v230 = vld [vmem:[%s0] sm:$0xff]
    %v231 = vld [vmem:[%s0 + $0x8] sm:$0xff]
    %v232 = vld [vmem:[%s0 + $0x10] sm:$0xf]
    %vm233 = vcmask 244736
    %234 = vst.msk [vmem:[#allocation2] sm:$0xff] %vm233, %v230
    %vm235 = vcmask 244738
    %236 = vst.msk [vmem:[#allocation2 + $0x6] sm:$0xfc] %vm235, %v231
    %vm237 = vcmask 238592
    %238 = vst.msk [vmem:[#allocation2 + $0xe] sm:$0x3] %vm237, %v232
    %s239 = scalar_lea.vmem [#allocation2], 16
    %vm240 = vcmask 244737
    %241 = vst.msk [vmem:[%s239 - $0x1] sm:$0xfe] %vm240, %v230
    %vm242 = vcmask 237568
    %243 = vst.msk [vmem:[%s239 + $0x7] sm:$0x1] %vm242, %v231
    %vm244 = vcmask 244739
    %245 = vst.msk [vmem:[%s239 + $0x5] sm:$0xf8] %vm244, %v231
    %vm246 = vcmask 239616
    %247 = vst.msk [vmem:[%s239 + $0xd] sm:$0x7] %vm246, %v232
    %s248 = scalar_lea.vmem [#allocation2], 32
    %249 = vst.msk [vmem:[%s248 - $0x2] sm:$0xfc] %vm235, %v230
    %250 = vst.msk [vmem:[%s248 + $0x6] sm:$0x3] %vm237, %v231
    %vm251 = vcmask 244740
    %252 = vst.msk [vmem:[%s248 + $0x4] sm:$0xf0] %vm251, %v231
    %vm253 = vcmask 240640
    %254 = vst.msk [vmem:[%s248 + $0xc] sm:$0xf] %vm253, %v232
    %v255 = vld [vmem:[#allocation2] sm:$0xff]
    %v256 = vld [vmem:[#allocation2 + $0x8] sm:$0xff]
    %v257 = vld [vmem:[#allocation6] sm:$0xff]
    %v258 = vld [vmem:[#allocation6 + $0x8] sm:$0xff]
    %v259 = vld [vmem:[#allocation6 + $0x10] sm:$0xff]
    %v260 = vld [vmem:[#allocation6 + $0x18] sm:$0x3f]
    %v261 = vld [vmem:[%s239] sm:$0xff]
    %v262 = vld [vmem:[%s239 + $0x8] sm:$0xff]
    %s263 = scalar_lea.vmem [#allocation6], 32
    %v264 = vld [vmem:[%s263] sm:$0xff]
    %v265 = vld [vmem:[%s263 + $0x8] sm:$0xff]
    %v266 = vld [vmem:[%s263 + $0x10] sm:$0xff]
    %v267 = vld [vmem:[%s263 + $0x18] sm:$0x3f]
    %v269 = vsel %vm233, %v261, 0
    %v272 = vsel %vm233, %v262, 0
    %vm274 = vcmask 1045504
    %v276 = vsel %vm274, %v267, 0
    %278 = vmatprep.subr.mxu0 0.0
    %279 = vmatpush1.msra.mxu0 0.0
    %280 = vmatprep.subr.mxu0 0.0
    %281 = vmatpush1.msra.mxu0 0.0
    %282 = vmatprep.subr.mxu0 0.0
    %283 = vmatpush1.msra.mxu0 0.0
    %284 = vmatprep.subr.mxu0 0.0
    %285 = vmatpush1.msra.mxu0 0.0
    %286 = vmatprep.subr.mxu0 0.0
    %287 = vmatpush1.msra.mxu0 0.0
    %288 = vmatprep.subr.mxu0 0.0
    %289 = vmatpush1.msra.mxu0 0.0
    %290 = vmatprep.subr.mxu0 0.0
    %291 = vmatpush1.msra.mxu0 0.0
    %292 = vmatprep.subr.mxu0 0.0
    %293 = vmatpush1.msra.mxu0 0.0
    %294 = vmatprep.subr.mxu0 0.0
    %295 = vmatpush1.msra.mxu0 0.0
    %296 = vmatprep.subr.mxu0 0.0
    %297 = vmatpush1.msra.mxu0 0.0
    %298 = vmatprep.subr.mxu0 0.0
    %299 = vmatpush1.msra.mxu0 0.0
    %300 = vmatprep.subr.mxu0 0.0
    %301 = vmatpush1.msra.mxu0 0.0
    %302 = vmatprep.subr.mxu0 0.0
    %303 = vmatpush1.msra.mxu0 %v276
    %304 = vmatprep.subr.mxu0 0.0
    %305 = vmatpush1.msra.mxu0 %v266
    %306 = vmatprep.subr.mxu0 0.0
    %307 = vmatpush1.msra.mxu0 %v265
    %308 = vmatprep.subr.mxu0 0.0
    %309 = vmatpush1.msra.mxu0 %v264
    %310 = vmatprep.subr.mxu0 0.0
    %311 = vmatpush2.msra.mxu0 0.0
    %312 = vmatprep.subr.mxu0 0.0
    %313 = vmatpush2.msra.mxu0 0.0
    %314 = vmatprep.subr.mxu0 0.0
    %315 = vmatpush2.msra.mxu0 0.0
    %316 = vmatprep.subr.mxu0 0.0
    %317 = vmatpush2.msra.mxu0 0.0
    %318 = vmatprep.subr.mxu0 0.0
    %319 = vmatpush2.msra.mxu0 0.0
    %320 = vmatprep.subr.mxu0 0.0
    %321 = vmatpush2.msra.mxu0 0.0
    %322 = vmatprep.subr.mxu0 0.0
    %323 = vmatpush2.msra.mxu0 0.0
    %324 = vmatprep.subr.mxu0 0.0
    %325 = vmatpush2.msra.mxu0 0.0
    %326 = vmatprep.subr.mxu0 0.0
    %327 = vmatpush2.msra.mxu0 0.0
    %328 = vmatprep.subr.mxu0 0.0
    %329 = vmatpush2.msra.mxu0 0.0
    %330 = vmatprep.subr.mxu0 0.0
    %331 = vmatpush2.msra.mxu0 0.0
    %332 = vmatprep.subr.mxu0 0.0
    %333 = vmatpush2.msra.mxu0 0.0
    %334 = vmatprep.subr.mxu0 0.0
    %335 = vmatpush2.msra.mxu0 0.0
    %336 = vmatprep.subr.mxu0 0.0
    %337 = vmatpush2.msra.mxu0 0.0
    %338 = vmatprep.subr.mxu0 0.0
    %339 = vmatpush2.msra.mxu0 0.0
    %340 = vmatprep.subr.mxu0 0.0
    %341 = vmatpush2.msra.mxu0 0.0
    %342 = vmatprep.mubr.f32.mxu0 0.0
    %343 = vmatmul.mubr.f32.gmra.mxu0 %v269
    %v344 = vpop.f32.mrf.mxu0
    %v345 = vadd.f32 0.0, %v344
    %v346 = vpop.f32.mrf.mxu0
    %347 = vmatprep.mubr.f32.mxu0 0.0
    %348 = vmatmul.mubr.f32.gmra.mxu0 %v272
    %v349 = vpop.f32.mrf.mxu0
    %v350 = vadd.f32 0.0, %v349
    %v351 = vpop.f32.mrf.mxu0
    %352 = vdwg.mxu0
    %v354 = vsel %vm233, %v255, 0
    %v357 = vsel %vm233, %v256, 0
    %v360 = vsel %vm274, %v260, 0
    %362 = vmatprep.subr.mxu0 0.0
    %363 = vmatpush1.msra.mxu0 0.0
    %364 = vmatprep.subr.mxu0 0.0
    %365 = vmatpush1.msra.mxu0 0.0
    %366 = vmatprep.subr.mxu0 0.0
    %367 = vmatpush1.msra.mxu0 0.0
    %368 = vmatprep.subr.mxu0 0.0
    %369 = vmatpush1.msra.mxu0 0.0
    %370 = vmatprep.subr.mxu0 0.0
    %371 = vmatpush1.msra.mxu0 0.0
    %372 = vmatprep.subr.mxu0 0.0
    %373 = vmatpush1.msra.mxu0 0.0
    %374 = vmatprep.subr.mxu0 0.0
    %375 = vmatpush1.msra.mxu0 0.0
    %376 = vmatprep.subr.mxu0 0.0
    %377 = vmatpush1.msra.mxu0 0.0
    %378 = vmatprep.subr.mxu0 0.0
    %379 = vmatpush1.msra.mxu0 0.0
    %380 = vmatprep.subr.mxu0 0.0
    %381 = vmatpush1.msra.mxu0 0.0
    %382 = vmatprep.subr.mxu0 0.0
    %383 = vmatpush1.msra.mxu0 0.0
    %384 = vmatprep.subr.mxu0 0.0
    %385 = vmatpush1.msra.mxu0 0.0
    %386 = vmatprep.subr.mxu0 0.0
    %387 = vmatpush1.msra.mxu0 %v360
    %388 = vmatprep.subr.mxu0 0.0
    %389 = vmatpush1.msra.mxu0 %v259
    %390 = vmatprep.subr.mxu0 0.0
    %391 = vmatpush1.msra.mxu0 %v258
    %392 = vmatprep.subr.mxu0 0.0
    %393 = vmatpush1.msra.mxu0 %v257
    %394 = vmatprep.subr.mxu0 0.0
    %395 = vmatpush2.msra.mxu0 0.0
    %396 = vmatprep.subr.mxu0 0.0
    %397 = vmatpush2.msra.mxu0 0.0
    %398 = vmatprep.subr.mxu0 0.0
    %399 = vmatpush2.msra.mxu0 0.0
    %400 = vmatprep.subr.mxu0 0.0
    %401 = vmatpush2.msra.mxu0 0.0
    %402 = vmatprep.subr.mxu0 0.0
    %403 = vmatpush2.msra.mxu0 0.0
    %404 = vmatprep.subr.mxu0 0.0
    %405 = vmatpush2.msra.mxu0 0.0
    %406 = vmatprep.subr.mxu0 0.0
    %407 = vmatpush2.msra.mxu0 0.0
    %408 = vmatprep.subr.mxu0 0.0
    %409 = vmatpush2.msra.mxu0 0.0
    %410 = vmatprep.subr.mxu0 0.0
    %411 = vmatpush2.msra.mxu0 0.0
    %412 = vmatprep.subr.mxu0 0.0
    %413 = vmatpush2.msra.mxu0 0.0
    %414 = vmatprep.subr.mxu0 0.0
    %415 = vmatpush2.msra.mxu0 0.0
    %416 = vmatprep.subr.mxu0 0.0
    %417 = vmatpush2.msra.mxu0 0.0
    %418 = vmatprep.subr.mxu0 0.0
    %419 = vmatpush2.msra.mxu0 0.0
    %420 = vmatprep.subr.mxu0 0.0
    %421 = vmatpush2.msra.mxu0 0.0
    %422 = vmatprep.subr.mxu0 0.0
    %423 = vmatpush2.msra.mxu0 0.0
    %424 = vmatprep.subr.mxu0 0.0
    %425 = vmatpush2.msra.mxu0 0.0
    %426 = vmatprep.mubr.f32.mxu0 0.0
    %427 = vmatmul.mubr.f32.gmra.mxu0 %v354
    %v428 = vpop.f32.mrf.mxu0
    %v429 = vadd.f32 %v345, %v428
    %v430 = vpop.f32.mrf.mxu0
    %431 = vmatprep.mubr.f32.mxu0 0.0
    %432 = vmatmul.mubr.f32.gmra.mxu0 %v357
    %v433 = vpop.f32.mrf.mxu0
    %v434 = vadd.f32 %v350, %v433
    %v435 = vpop.f32.mrf.mxu0
    %436 = vdwg.mxu0
    %v437 = vld [vmem:[%s248] sm:$0xff]
    %v438 = vld [vmem:[%s248 + $0x8] sm:$0xff]
    %s439 = scalar_lea.vmem [#allocation6], 64
    %v440 = vld [vmem:[%s439] sm:$0xff]
    %v441 = vld [vmem:[%s439 + $0x8] sm:$0xff]
    %v442 = vld [vmem:[%s439 + $0x10] sm:$0xff]
    %v443 = vld [vmem:[%s439 + $0x18] sm:$0x3f]
    %v445 = vsel %vm233, %v437, 0
    %v448 = vsel %vm233, %v438, 0
    %v451 = vsel %vm274, %v443, 0
    %453 = vmatprep.subr.mxu0 0.0
    %454 = vmatpush1.msra.mxu0 0.0
    %455 = vmatprep.subr.mxu0 0.0
    %456 = vmatpush1.msra.mxu0 0.0
    %457 = vmatprep.subr.mxu0 0.0
    %458 = vmatpush1.msra.mxu0 0.0
    %459 = vmatprep.subr.mxu0 0.0
    %460 = vmatpush1.msra.mxu0 0.0
    %461 = vmatprep.subr.mxu0 0.0
    %462 = vmatpush1.msra.mxu0 0.0
    %463 = vmatprep.subr.mxu0 0.0
    %464 = vmatpush1.msra.mxu0 0.0
    %465 = vmatprep.subr.mxu0 0.0
    %466 = vmatpush1.msra.mxu0 0.0
    %467 = vmatprep.subr.mxu0 0.0
    %468 = vmatpush1.msra.mxu0 0.0
    %469 = vmatprep.subr.mxu0 0.0
    %470 = vmatpush1.msra.mxu0 0.0
    %471 = vmatprep.subr.mxu0 0.0
    %472 = vmatpush1.msra.mxu0 0.0
    %473 = vmatprep.subr.mxu0 0.0
    %474 = vmatpush1.msra.mxu0 0.0
    %475 = vmatprep.subr.mxu0 0.0
    %476 = vmatpush1.msra.mxu0 0.0
    %477 = vmatprep.subr.mxu0 0.0
    %478 = vmatpush1.msra.mxu0 %v451
    %479 = vmatprep.subr.mxu0 0.0
    %480 = vmatpush1.msra.mxu0 %v442
    %481 = vmatprep.subr.mxu0 0.0
    %482 = vmatpush1.msra.mxu0 %v441
    %483 = vmatprep.subr.mxu0 0.0
    %484 = vmatpush1.msra.mxu0 %v440
    %485 = vmatprep.subr.mxu0 0.0
    %486 = vmatpush2.msra.mxu0 0.0
    %487 = vmatprep.subr.mxu0 0.0
    %488 = vmatpush2.msra.mxu0 0.0
    %489 = vmatprep.subr.mxu0 0.0
    %490 = vmatpush2.msra.mxu0 0.0
    %491 = vmatprep.subr.mxu0 0.0
    %492 = vmatpush2.msra.mxu0 0.0
    %493 = vmatprep.subr.mxu0 0.0
    %494 = vmatpush2.msra.mxu0 0.0
    %495 = vmatprep.subr.mxu0 0.0
    %496 = vmatpush2.msra.mxu0 0.0
    %497 = vmatprep.subr.mxu0 0.0
    %498 = vmatpush2.msra.mxu0 0.0
    %499 = vmatprep.subr.mxu0 0.0
    %500 = vmatpush2.msra.mxu0 0.0
    %501 = vmatprep.subr.mxu0 0.0
    %502 = vmatpush2.msra.mxu0 0.0
    %503 = vmatprep.subr.mxu0 0.0
    %504 = vmatpush2.msra.mxu0 0.0
    %505 = vmatprep.subr.mxu0 0.0
    %506 = vmatpush2.msra.mxu0 0.0
    %507 = vmatprep.subr.mxu0 0.0
    %508 = vmatpush2.msra.mxu0 0.0
    %509 = vmatprep.subr.mxu0 0.0
    %510 = vmatpush2.msra.mxu0 0.0
    %511 = vmatprep.subr.mxu0 0.0
    %512 = vmatpush2.msra.mxu0 0.0
    %513 = vmatprep.subr.mxu0 0.0
    %514 = vmatpush2.msra.mxu0 0.0
    %515 = vmatprep.subr.mxu0 0.0
    %516 = vmatpush2.msra.mxu0 0.0
    %517 = vmatprep.mubr.f32.mxu0 0.0
    %518 = vmatmul.mubr.f32.gmra.mxu0 %v445
    %v519 = vpop.f32.mrf.mxu0
    %v520 = vadd.f32 0.0, %v519
    %v521 = vpop.f32.mrf.mxu0
    %522 = vmatprep.mubr.f32.mxu0 0.0
    %523 = vmatmul.mubr.f32.gmra.mxu0 %v448
    %v524 = vpop.f32.mrf.mxu0
    %v525 = vadd.f32 0.0, %v524
    %v526 = vpop.f32.mrf.mxu0
    %527 = vdwg.mxu0
    %v528 = vadd.f32 %v429, %v520
    %v529 = vadd.f32 %v434, %v525
    %v530 = vld [vmem:[%s2] sm:$0x1]
    %v532 = vlaneseq
    %v533 = vshrl.u32 %v532, 7
    %v534 = vsub.s32 0, %v533
    %v535 = vrot.slane %v530, %v534
    %v537 = vadd.f32 %v528, %v535
    %v538 = vadd.f32 %v529, %v535
    %v539 = vmax.f32 %v537, 0.0
    %v540 = vmax.f32 %v538, 0.0
    %v541 = vadd.f32 %v539, %v540
    %v542 = vrot.slane %v541, 4
    %v543 = vadd.f32 %v541, %v542
    %v544 = vrot.slane %v543, 2
    %v545 = vadd.f32 %v543, %v544
    %v546 = vrot.slane %v545, 1
    %v547 = vadd.f32 %v545, %v546
    %v548 = vmul.f32 %v539, %v539
    %v549 = vmul.f32 %v540, %v540
    %v550 = vadd.f32 %v548, %v549
    %v551 = vrot.slane %v550, 4
    %v552 = vadd.f32 %v550, %v551
    %v553 = vrot.slane %v552, 2
    %v554 = vadd.f32 %v552, %v553
    %v555 = vrot.slane %v554, 1
    %v556 = vadd.f32 %v554, %v555
    %v557 = vld [vmem:[#allocation9] sm:$0xff]
    %v558 = vld [vmem:[#allocation9 + $0x8] sm:$0xff]
    %v559 = vld [vmem:[#allocation9 + $0x10] sm:$0xff]
    %v560 = vld [vmem:[#allocation9 + $0x18] sm:$0xff]
    %v561 = vld [vmem:[#allocation9 + $0x20] sm:$0xff]
    %v562 = vld [vmem:[#allocation9 + $0x28] sm:$0xff]
    %v563 = vld [vmem:[#allocation9 + $0x30] sm:$0xff]
    %v564 = vld [vmem:[#allocation9 + $0x38] sm:$0xff]
    %v565 = vld [vmem:[#allocation9 + $0x40] sm:$0xff]
    %v566 = vld [vmem:[#allocation9 + $0x48] sm:$0xff]
    %v567 = vld [vmem:[#allocation9 + $0x50] sm:$0xff]
    %v568 = vld [vmem:[#allocation9 + $0x58] sm:$0xff]
    %v569 = vld [vmem:[#allocation9 + $0x60] sm:$0xff]
    %v570 = vld [vmem:[#allocation9 + $0x68] sm:$0xff]
    %v571 = vld [vmem:[#allocation9 + $0x70] sm:$0xff]
    %v572 = vld [vmem:[#allocation9 + $0x78] sm:$0xff]
    %573 = vmatprep.subr.mxu0 0.0
    %574 = vmatpush1.msra.mxu0 %v572
    %575 = vmatprep.subr.mxu0 0.0
    %576 = vmatpush1.msra.mxu0 %v571
    %577 = vmatprep.subr.mxu0 0.0
    %578 = vmatpush1.msra.mxu0 %v570
    %579 = vmatprep.subr.mxu0 0.0
    %580 = vmatpush1.msra.mxu0 %v569
    %581 = vmatprep.subr.mxu0 0.0
    %582 = vmatpush1.msra.mxu0 %v568
    %583 = vmatprep.subr.mxu0 0.0
    %584 = vmatpush1.msra.mxu0 %v567
    %585 = vmatprep.subr.mxu0 0.0
    %586 = vmatpush1.msra.mxu0 %v566
    %587 = vmatprep.subr.mxu0 0.0
    %588 = vmatpush1.msra.mxu0 %v565
    %589 = vmatprep.subr.mxu0 0.0
    %590 = vmatpush1.msra.mxu0 %v564
    %591 = vmatprep.subr.mxu0 0.0
    %592 = vmatpush1.msra.mxu0 %v563
    %593 = vmatprep.subr.mxu0 0.0
    %594 = vmatpush1.msra.mxu0 %v562
    %595 = vmatprep.subr.mxu0 0.0
    %596 = vmatpush1.msra.mxu0 %v561
    %597 = vmatprep.subr.mxu0 0.0
    %598 = vmatpush1.msra.mxu0 %v560
    %599 = vmatprep.subr.mxu0 0.0
    %600 = vmatpush1.msra.mxu0 %v559
    %601 = vmatprep.subr.mxu0 0.0
    %602 = vmatpush1.msra.mxu0 %v558
    %603 = vmatprep.subr.mxu0 0.0
    %604 = vmatpush1.msra.mxu0 %v557
    %605 = vmatprep.subr.mxu0 0.0
    %606 = vmatpush2.msra.mxu0 0.0
    %607 = vmatprep.subr.mxu0 0.0
    %608 = vmatpush2.msra.mxu0 0.0
    %609 = vmatprep.subr.mxu0 0.0
    %610 = vmatpush2.msra.mxu0 0.0
    %611 = vmatprep.subr.mxu0 0.0
    %612 = vmatpush2.msra.mxu0 0.0
    %613 = vmatprep.subr.mxu0 0.0
    %614 = vmatpush2.msra.mxu0 0.0
    %615 = vmatprep.subr.mxu0 0.0
    %616 = vmatpush2.msra.mxu0 0.0
    %617 = vmatprep.subr.mxu0 0.0
    %618 = vmatpush2.msra.mxu0 0.0
    %619 = vmatprep.subr.mxu0 0.0
    %620 = vmatpush2.msra.mxu0 0.0
    %621 = vmatprep.subr.mxu0 0.0
    %622 = vmatpush2.msra.mxu0 0.0
    %623 = vmatprep.subr.mxu0 0.0
    %624 = vmatpush2.msra.mxu0 0.0
    %625 = vmatprep.subr.mxu0 0.0
    %626 = vmatpush2.msra.mxu0 0.0
    %627 = vmatprep.subr.mxu0 0.0
    %628 = vmatpush2.msra.mxu0 0.0
    %629 = vmatprep.subr.mxu0 0.0
    %630 = vmatpush2.msra.mxu0 0.0
    %631 = vmatprep.subr.mxu0 0.0
    %632 = vmatpush2.msra.mxu0 0.0
    %633 = vmatprep.subr.mxu0 0.0
    %634 = vmatpush2.msra.mxu0 0.0
    %635 = vmatprep.subr.mxu0 0.0
    %636 = vmatpush2.msra.mxu0 0.0
    %637 = vmatprep.mubr.f32.mxu0 0.0
    %638 = vmatmul.mubr.f32.gmra.mxu0 %v547
    %v639 = vpop.f32.mrf.mxu0
    %v640 = vadd.f32 0.0, %v639
    %v641 = vpop.f32.mrf.mxu0
    %642 = vdwg.mxu0
    %643 = vmatprep.subr.mxu0 0.0
    %644 = vmatpush1.msra.mxu0 %v572
    %645 = vmatprep.subr.mxu0 0.0
    %646 = vmatpush1.msra.mxu0 %v571
    %647 = vmatprep.subr.mxu0 0.0
    %648 = vmatpush1.msra.mxu0 %v570
    %649 = vmatprep.subr.mxu0 0.0
    %650 = vmatpush1.msra.mxu0 %v569
    %651 = vmatprep.subr.mxu0 0.0
    %652 = vmatpush1.msra.mxu0 %v568
    %653 = vmatprep.subr.mxu0 0.0
    %654 = vmatpush1.msra.mxu0 %v567
    %655 = vmatprep.subr.mxu0 0.0
    %656 = vmatpush1.msra.mxu0 %v566
    %657 = vmatprep.subr.mxu0 0.0
    %658 = vmatpush1.msra.mxu0 %v565
    %659 = vmatprep.subr.mxu0 0.0
    %660 = vmatpush1.msra.mxu0 %v564
    %661 = vmatprep.subr.mxu0 0.0
    %662 = vmatpush1.msra.mxu0 %v563
    %663 = vmatprep.subr.mxu0 0.0
    %664 = vmatpush1.msra.mxu0 %v562
    %665 = vmatprep.subr.mxu0 0.0
    %666 = vmatpush1.msra.mxu0 %v561
    %667 = vmatprep.subr.mxu0 0.0
    %668 = vmatpush1.msra.mxu0 %v560
    %669 = vmatprep.subr.mxu0 0.0
    %670 = vmatpush1.msra.mxu0 %v559
    %671 = vmatprep.subr.mxu0 0.0
    %672 = vmatpush1.msra.mxu0 %v558
    %673 = vmatprep.subr.mxu0 0.0
    %674 = vmatpush1.msra.mxu0 %v557
    %675 = vmatprep.subr.mxu0 0.0
    %676 = vmatpush2.msra.mxu0 0.0
    %677 = vmatprep.subr.mxu0 0.0
    %678 = vmatpush2.msra.mxu0 0.0
    %679 = vmatprep.subr.mxu0 0.0
    %680 = vmatpush2.msra.mxu0 0.0
    %681 = vmatprep.subr.mxu0 0.0
    %682 = vmatpush2.msra.mxu0 0.0
    %683 = vmatprep.subr.mxu0 0.0
    %684 = vmatpush2.msra.mxu0 0.0
    %685 = vmatprep.subr.mxu0 0.0
    %686 = vmatpush2.msra.mxu0 0.0
    %687 = vmatprep.subr.mxu0 0.0
    %688 = vmatpush2.msra.mxu0 0.0
    %689 = vmatprep.subr.mxu0 0.0
    %690 = vmatpush2.msra.mxu0 0.0
    %691 = vmatprep.subr.mxu0 0.0
    %692 = vmatpush2.msra.mxu0 0.0
    %693 = vmatprep.subr.mxu0 0.0
    %694 = vmatpush2.msra.mxu0 0.0
    %695 = vmatprep.subr.mxu0 0.0
    %696 = vmatpush2.msra.mxu0 0.0
    %697 = vmatprep.subr.mxu0 0.0
    %698 = vmatpush2.msra.mxu0 0.0
    %699 = vmatprep.subr.mxu0 0.0
    %700 = vmatpush2.msra.mxu0 0.0
    %701 = vmatprep.subr.mxu0 0.0
    %702 = vmatpush2.msra.mxu0 0.0
    %703 = vmatprep.subr.mxu0 0.0
    %704 = vmatpush2.msra.mxu0 0.0
    %705 = vmatprep.subr.mxu0 0.0
    %706 = vmatpush2.msra.mxu0 0.0
    %707 = vmatprep.mubr.f32.mxu0 0.0
    %708 = vmatmul.mubr.f32.gmra.mxu0 %v556
    %v709 = vpop.f32.mrf.mxu0
    %v710 = vadd.f32 0.0, %v709
    %v711 = vpop.f32.mrf.mxu0
    %712 = vdwg.mxu0
    %v713 = vmul.f32 %v640, 0.0078125
    %v714 = vmul.f32 %v710, 0.0078125
    %v715 = vmul.f32 %v713, %v713
    %v716 = vsub.f32 %v714, %v715
    %v717 = vld [vmem:[%s3] sm:$0x1]
    %v718 = vadd.f32 %v716, 1e-05
    %v719 = vrsqrt.pop %v718
    %v720 = vmul.f32 %v717, %v719
    %v721 = vld [vmem:[%s4] sm:$0x1]
    %v722 = vmul.f32 %v713, %v720
    %v723 = vsub.f32 %v721, %v722
    %v724 = vld [vmem:[%s6] sm:$0xff]
    %v725 = vld [vmem:[%s6 + $0x8] sm:$0xff]
    %vm726 = vcmask 130048
    %v728 = vsel %vm726, %v720, 0
    %730 = vmatprep.subr.mxu0 0.0
    %731 = vmatpush1.msra.mxu0 0.0
    %732 = vmatprep.subr.mxu0 0.0
    %733 = vmatpush1.msra.mxu0 0.0
    %734 = vmatprep.subr.mxu0 0.0
    %735 = vmatpush1.msra.mxu0 0.0
    %736 = vmatprep.subr.mxu0 0.0
    %737 = vmatpush1.msra.mxu0 0.0
    %738 = vmatprep.subr.mxu0 0.0
    %739 = vmatpush1.msra.mxu0 0.0
    %740 = vmatprep.subr.mxu0 0.0
    %741 = vmatpush1.msra.mxu0 0.0
    %742 = vmatprep.subr.mxu0 0.0
    %743 = vmatpush1.msra.mxu0 0.0
    %744 = vmatprep.subr.mxu0 0.0
    %745 = vmatpush1.msra.mxu0 0.0
    %746 = vmatprep.subr.mxu0 0.0
    %747 = vmatpush1.msra.mxu0 0.0
    %748 = vmatprep.subr.mxu0 0.0
    %749 = vmatpush1.msra.mxu0 0.0
    %750 = vmatprep.subr.mxu0 0.0
    %751 = vmatpush1.msra.mxu0 0.0
    %752 = vmatprep.subr.mxu0 0.0
    %753 = vmatpush1.msra.mxu0 0.0
    %754 = vmatprep.subr.mxu0 0.0
    %755 = vmatpush1.msra.mxu0 0.0
    %756 = vmatprep.subr.mxu0 0.0
    %757 = vmatpush1.msra.mxu0 0.0
    %758 = vmatprep.subr.mxu0 0.0
    %759 = vmatpush1.msra.mxu0 %v725
    %760 = vmatprep.subr.mxu0 0.0
    %761 = vmatpush1.msra.mxu0 %v724
    %762 = vmatprep.subr.mxu0 0.0
    %763 = vmatpush2.msra.mxu0 0.0
    %764 = vmatprep.subr.mxu0 0.0
    %765 = vmatpush2.msra.mxu0 0.0
    %766 = vmatprep.subr.mxu0 0.0
    %767 = vmatpush2.msra.mxu0 0.0
    %768 = vmatprep.subr.mxu0 0.0
    %769 = vmatpush2.msra.mxu0 0.0
    %770 = vmatprep.subr.mxu0 0.0
    %771 = vmatpush2.msra.mxu0 0.0
    %772 = vmatprep.subr.mxu0 0.0
    %773 = vmatpush2.msra.mxu0 0.0
    %774 = vmatprep.subr.mxu0 0.0
    %775 = vmatpush2.msra.mxu0 0.0
    %776 = vmatprep.subr.mxu0 0.0
    %777 = vmatpush2.msra.mxu0 0.0
    %778 = vmatprep.subr.mxu0 0.0
    %779 = vmatpush2.msra.mxu0 0.0
    %780 = vmatprep.subr.mxu0 0.0
    %781 = vmatpush2.msra.mxu0 0.0
    %782 = vmatprep.subr.mxu0 0.0
    %783 = vmatpush2.msra.mxu0 0.0
    %784 = vmatprep.subr.mxu0 0.0
    %785 = vmatpush2.msra.mxu0 0.0
    %786 = vmatprep.subr.mxu0 0.0
    %787 = vmatpush2.msra.mxu0 0.0
    %788 = vmatprep.subr.mxu0 0.0
    %789 = vmatpush2.msra.mxu0 0.0
    %790 = vmatprep.subr.mxu0 0.0
    %791 = vmatpush2.msra.mxu0 0.0
    %792 = vmatprep.subr.mxu0 0.0
    %793 = vmatpush2.msra.mxu0 0.0
    %794 = vmatprep.mubr.f32.mxu0 0.0
    %795 = vmatmul.mubr.f32.gmra.mxu0 %v728
    %v796 = vpop.f32.mrf.mxu0
    %v797 = vadd.f32 0.0, %v796
    %v798 = vpop.f32.mrf.mxu0
    %799 = vdwg.mxu0
    %v801 = vsel %vm726, %v723, 0
    %803 = vmatprep.subr.mxu0 0.0
    %804 = vmatpush1.msra.mxu0 0.0
    %805 = vmatprep.subr.mxu0 0.0
    %806 = vmatpush1.msra.mxu0 0.0
    %807 = vmatprep.subr.mxu0 0.0
    %808 = vmatpush1.msra.mxu0 0.0
    %809 = vmatprep.subr.mxu0 0.0
    %810 = vmatpush1.msra.mxu0 0.0
    %811 = vmatprep.subr.mxu0 0.0
    %812 = vmatpush1.msra.mxu0 0.0
    %813 = vmatprep.subr.mxu0 0.0
    %814 = vmatpush1.msra.mxu0 0.0
    %815 = vmatprep.subr.mxu0 0.0
    %816 = vmatpush1.msra.mxu0 0.0
    %817 = vmatprep.subr.mxu0 0.0
    %818 = vmatpush1.msra.mxu0 0.0
    %819 = vmatprep.subr.mxu0 0.0
    %820 = vmatpush1.msra.mxu0 0.0
    %821 = vmatprep.subr.mxu0 0.0
    %822 = vmatpush1.msra.mxu0 0.0
    %823 = vmatprep.subr.mxu0 0.0
    %824 = vmatpush1.msra.mxu0 0.0
    %825 = vmatprep.subr.mxu0 0.0
    %826 = vmatpush1.msra.mxu0 0.0
    %827 = vmatprep.subr.mxu0 0.0
    %828 = vmatpush1.msra.mxu0 0.0
    %829 = vmatprep.subr.mxu0 0.0
    %830 = vmatpush1.msra.mxu0 0.0
    %831 = vmatprep.subr.mxu0 0.0
    %832 = vmatpush1.msra.mxu0 %v725
    %833 = vmatprep.subr.mxu0 0.0
    %834 = vmatpush1.msra.mxu0 %v724
    %835 = vmatprep.subr.mxu0 0.0
    %836 = vmatpush2.msra.mxu0 0.0
    %837 = vmatprep.subr.mxu0 0.0
    %838 = vmatpush2.msra.mxu0 0.0
    %839 = vmatprep.subr.mxu0 0.0
    %840 = vmatpush2.msra.mxu0 0.0
    %841 = vmatprep.subr.mxu0 0.0
    %842 = vmatpush2.msra.mxu0 0.0
    %843 = vmatprep.subr.mxu0 0.0
    %844 = vmatpush2.msra.mxu0 0.0
    %845 = vmatprep.subr.mxu0 0.0
    %846 = vmatpush2.msra.mxu0 0.0
    %847 = vmatprep.subr.mxu0 0.0
    %848 = vmatpush2.msra.mxu0 0.0
    %849 = vmatprep.subr.mxu0 0.0
    %850 = vmatpush2.msra.mxu0 0.0
    %851 = vmatprep.subr.mxu0 0.0
    %852 = vmatpush2.msra.mxu0 0.0
    %853 = vmatprep.subr.mxu0 0.0
    %854 = vmatpush2.msra.mxu0 0.0
    %855 = vmatprep.subr.mxu0 0.0
    %856 = vmatpush2.msra.mxu0 0.0
    %857 = vmatprep.subr.mxu0 0.0
    %858 = vmatpush2.msra.mxu0 0.0
    %859 = vmatprep.subr.mxu0 0.0
    %860 = vmatpush2.msra.mxu0 0.0
    %861 = vmatprep.subr.mxu0 0.0
    %862 = vmatpush2.msra.mxu0 0.0
    %863 = vmatprep.subr.mxu0 0.0
    %864 = vmatpush2.msra.mxu0 0.0
    %865 = vmatprep.subr.mxu0 0.0
    %866 = vmatpush2.msra.mxu0 0.0
    %867 = vmatprep.mubr.f32.mxu0 0.0
    %868 = vmatmul.mubr.f32.gmra.mxu0 %v801
    %v869 = vpop.f32.mrf.mxu0
    %v870 = vadd.f32 0.0, %v869
    %v871 = vpop.f32.mrf.mxu0
    %872 = vdwg.mxu0
    %v873 = vlaneseq
    %v874 = vshrl.u32 %v873, 7
    %v875 = vsub.s32 0, %v874
    %v876 = vrot.slane %v797, %v875
    %v877 = vmul.f32 %v539, %v876
    %v878 = vmul.f32 %v540, %v876
    %v879 = vlaneseq
    %v880 = vshrl.u32 %v879, 7
    %v881 = vsub.s32 0, %v880
    %v882 = vrot.slane %v870, %v881
    %v883 = vadd.f32 %v877, %v882
    %v884 = vadd.f32 %v878, %v882
    %885 = vst [vmem:[#allocation3] sm:$0xf] %v883
    %886 = vst [vmem:[#allocation3 + $0x4] sm:$0xf] %v884
    %s887 = scalar_lea.vmem [#allocation3], 8
    %888 = vst [vmem:[%s887 - $0x1] sm:$0x1e] %v883
    %889 = vst [vmem:[%s887 + $0x3] sm:$0x1e] %v884
    %s890 = scalar_lea.vmem [#allocation3], 16
    %891 = vst [vmem:[%s890 - $0x2] sm:$0x3c] %v883
    %892 = vst [vmem:[%s890 + $0x2] sm:$0x3c] %v884
    %s893 = scalar_lea.vmem [#allocation3], 24
    %894 = vst [vmem:[%s893 - $0x3] sm:$0x78] %v883
    %895 = vst [vmem:[%s893 + $0x1] sm:$0x78] %v884
    %s896 = scalar_lea.vmem [#allocation3], 32
    %897 = vst [vmem:[%s896 - $0x4] sm:$0xf0] %v883
    %898 = vst [vmem:[%s896] sm:$0xf0] %v884
    %v899 = vld [vmem:[#allocation3] sm:$0xff]
    %v900 = vld [vmem:[#allocation11] sm:$0xff]
    %v901 = vld [vmem:[#allocation11 + $0x8] sm:$0xff]
    %v902 = vld [vmem:[#allocation11 + $0x10] sm:$0xff]
    %v903 = vld [vmem:[#allocation11 + $0x18] sm:$0xff]
    %v904 = vld [vmem:[#allocation11 + $0x20] sm:$0xff]
    %v905 = vld [vmem:[#allocation11 + $0x28] sm:$0xff]
    %v906 = vld [vmem:[#allocation11 + $0x30] sm:$0xff]
    %v907 = vld [vmem:[#allocation11 + $0x38] sm:$0xff]
    %v908 = vld [vmem:[#allocation11 + $0x40] sm:$0xff]
    %v909 = vld [vmem:[#allocation11 + $0x48] sm:$0xff]
    %v910 = vld [vmem:[#allocation11 + $0x50] sm:$0xff]
    %v911 = vld [vmem:[#allocation11 + $0x58] sm:$0xff]
    %v912 = vld [vmem:[#allocation11 + $0x60] sm:$0xff]
    %v913 = vld [vmem:[#allocation11 + $0x68] sm:$0xff]
    %v914 = vld [vmem:[#allocation11 + $0x70] sm:$0xff]
    %v915 = vld [vmem:[#allocation11 + $0x78] sm:$0xff]
    %v916 = vld [vmem:[%s887] sm:$0xff]
    %s917 = scalar_lea.vmem [#allocation11], 128
    %v918 = vld [vmem:[%s917] sm:$0xff]
    %v919 = vld [vmem:[%s917 + $0x8] sm:$0xff]
    %v920 = vld [vmem:[%s917 + $0x10] sm:$0xff]
    %v921 = vld [vmem:[%s917 + $0x18] sm:$0xff]
    %v922 = vld [vmem:[%s917 + $0x20] sm:$0xff]
    %v923 = vld [vmem:[%s917 + $0x28] sm:$0xff]
    %v924 = vld [vmem:[%s917 + $0x30] sm:$0xff]
    %v925 = vld [vmem:[%s917 + $0x38] sm:$0xff]
    %v926 = vld [vmem:[%s917 + $0x40] sm:$0xff]
    %v927 = vld [vmem:[%s917 + $0x48] sm:$0xff]
    %v928 = vld [vmem:[%s917 + $0x50] sm:$0xff]
    %v929 = vld [vmem:[%s917 + $0x58] sm:$0xff]
    %v930 = vld [vmem:[%s917 + $0x60] sm:$0xff]
    %v931 = vld [vmem:[%s917 + $0x68] sm:$0xff]
    %v932 = vld [vmem:[%s917 + $0x70] sm:$0xff]
    %v933 = vld [vmem:[%s917 + $0x78] sm:$0xff]
    %934 = vmatprep.subr.mxu0 0.0
    %935 = vmatpush1.msra.mxu0 %v933
    %936 = vmatprep.subr.mxu0 0.0
    %937 = vmatpush1.msra.mxu0 %v932
    %938 = vmatprep.subr.mxu0 0.0
    %939 = vmatpush1.msra.mxu0 %v931
    %940 = vmatprep.subr.mxu0 0.0
    %941 = vmatpush1.msra.mxu0 %v930
    %942 = vmatprep.subr.mxu0 0.0
    %943 = vmatpush1.msra.mxu0 %v929
    %944 = vmatprep.subr.mxu0 0.0
    %945 = vmatpush1.msra.mxu0 %v928
    %946 = vmatprep.subr.mxu0 0.0
    %947 = vmatpush1.msra.mxu0 %v927
    %948 = vmatprep.subr.mxu0 0.0
    %949 = vmatpush1.msra.mxu0 %v926
    %950 = vmatprep.subr.mxu0 0.0
    %951 = vmatpush1.msra.mxu0 %v925
    %952 = vmatprep.subr.mxu0 0.0
    %953 = vmatpush1.msra.mxu0 %v924
    %954 = vmatprep.subr.mxu0 0.0
    %955 = vmatpush1.msra.mxu0 %v923
    %956 = vmatprep.subr.mxu0 0.0
    %957 = vmatpush1.msra.mxu0 %v922
    %958 = vmatprep.subr.mxu0 0.0
    %959 = vmatpush1.msra.mxu0 %v921
    %960 = vmatprep.subr.mxu0 0.0
    %961 = vmatpush1.msra.mxu0 %v920
    %962 = vmatprep.subr.mxu0 0.0
    %963 = vmatpush1.msra.mxu0 %v919
    %964 = vmatprep.subr.mxu0 0.0
    %965 = vmatpush1.msra.mxu0 %v918
    %966 = vmatprep.subr.mxu0 0.0
    %967 = vmatpush2.msra.mxu0 0.0
    %968 = vmatprep.subr.mxu0 0.0
    %969 = vmatpush2.msra.mxu0 0.0
    %970 = vmatprep.subr.mxu0 0.0
    %971 = vmatpush2.msra.mxu0 0.0
    %972 = vmatprep.subr.mxu0 0.0
    %973 = vmatpush2.msra.mxu0 0.0
    %974 = vmatprep.subr.mxu0 0.0
    %975 = vmatpush2.msra.mxu0 0.0
    %976 = vmatprep.subr.mxu0 0.0
    %977 = vmatpush2.msra.mxu0 0.0
    %978 = vmatprep.subr.mxu0 0.0
    %979 = vmatpush2.msra.mxu0 0.0
    %980 = vmatprep.subr.mxu0 0.0
    %981 = vmatpush2.msra.mxu0 0.0
    %982 = vmatprep.subr.mxu0 0.0
    %983 = vmatpush2.msra.mxu0 0.0
    %984 = vmatprep.subr.mxu0 0.0
    %985 = vmatpush2.msra.mxu0 0.0
    %986 = vmatprep.subr.mxu0 0.0
    %987 = vmatpush2.msra.mxu0 0.0
    %988 = vmatprep.subr.mxu0 0.0
    %989 = vmatpush2.msra.mxu0 0.0
    %990 = vmatprep.subr.mxu0 0.0
    %991 = vmatpush2.msra.mxu0 0.0
    %992 = vmatprep.subr.mxu0 0.0
    %993 = vmatpush2.msra.mxu0 0.0
    %994 = vmatprep.subr.mxu0 0.0
    %995 = vmatpush2.msra.mxu0 0.0
    %996 = vmatprep.subr.mxu0 0.0
    %997 = vmatpush2.msra.mxu0 0.0
    %998 = vmatprep.mubr.f32.mxu0 0.0
    %999 = vmatmul.mubr.f32.gmra.mxu0 %v916
    %v1000 = vpop.f32.mrf.mxu0
    %v1001 = vadd.f32 0.0, %v1000
    %v1002 = vpop.f32.mrf.mxu0
    %1003 = vdwg.mxu0
    %1004 = vmatprep.subr.mxu0 0.0
    %1005 = vmatpush1.msra.mxu0 %v915
    %1006 = vmatprep.subr.mxu0 0.0
    %1007 = vmatpush1.msra.mxu0 %v914
    %1008 = vmatprep.subr.mxu0 0.0
    %1009 = vmatpush1.msra.mxu0 %v913
    %1010 = vmatprep.subr.mxu0 0.0
    %1011 = vmatpush1.msra.mxu0 %v912
    %1012 = vmatprep.subr.mxu0 0.0
    %1013 = vmatpush1.msra.mxu0 %v911
    %1014 = vmatprep.subr.mxu0 0.0
    %1015 = vmatpush1.msra.mxu0 %v910
    %1016 = vmatprep.subr.mxu0 0.0
    %1017 = vmatpush1.msra.mxu0 %v909
    %1018 = vmatprep.subr.mxu0 0.0
    %1019 = vmatpush1.msra.mxu0 %v908
    %1020 = vmatprep.subr.mxu0 0.0
    %1021 = vmatpush1.msra.mxu0 %v907
    %1022 = vmatprep.subr.mxu0 0.0
    %1023 = vmatpush1.msra.mxu0 %v906
    %1024 = vmatprep.subr.mxu0 0.0
    %1025 = vmatpush1.msra.mxu0 %v905
    %1026 = vmatprep.subr.mxu0 0.0
    %1027 = vmatpush1.msra.mxu0 %v904
    %1028 = vmatprep.subr.mxu0 0.0
    %1029 = vmatpush1.msra.mxu0 %v903
    %1030 = vmatprep.subr.mxu0 0.0
    %1031 = vmatpush1.msra.mxu0 %v902
    %1032 = vmatprep.subr.mxu0 0.0
    %1033 = vmatpush1.msra.mxu0 %v901
    %1034 = vmatprep.subr.mxu0 0.0
    %1035 = vmatpush1.msra.mxu0 %v900
    %1036 = vmatprep.subr.mxu0 0.0
    %1037 = vmatpush2.msra.mxu0 0.0
    %1038 = vmatprep.subr.mxu0 0.0
    %1039 = vmatpush2.msra.mxu0 0.0
    %1040 = vmatprep.subr.mxu0 0.0
    %1041 = vmatpush2.msra.mxu0 0.0
    %1042 = vmatprep.subr.mxu0 0.0
    %1043 = vmatpush2.msra.mxu0 0.0
    %1044 = vmatprep.subr.mxu0 0.0
    %1045 = vmatpush2.msra.mxu0 0.0
    %1046 = vmatprep.subr.mxu0 0.0
    %1047 = vmatpush2.msra.mxu0 0.0
    %1048 = vmatprep.subr.mxu0 0.0
    %1049 = vmatpush2.msra.mxu0 0.0
    %1050 = vmatprep.subr.mxu0 0.0
    %1051 = vmatpush2.msra.mxu0 0.0
    %1052 = vmatprep.subr.mxu0 0.0
    %1053 = vmatpush2.msra.mxu0 0.0
    %1054 = vmatprep.subr.mxu0 0.0
    %1055 = vmatpush2.msra.mxu0 0.0
    %1056 = vmatprep.subr.mxu0 0.0
    %1057 = vmatpush2.msra.mxu0 0.0
    %1058 = vmatprep.subr.mxu0 0.0
    %1059 = vmatpush2.msra.mxu0 0.0
    %1060 = vmatprep.subr.mxu0 0.0
    %1061 = vmatpush2.msra.mxu0 0.0
    %1062 = vmatprep.subr.mxu0 0.0
    %1063 = vmatpush2.msra.mxu0 0.0
    %1064 = vmatprep.subr.mxu0 0.0
    %1065 = vmatpush2.msra.mxu0 0.0
    %1066 = vmatprep.subr.mxu0 0.0
    %1067 = vmatpush2.msra.mxu0 0.0
    %1068 = vmatprep.mubr.f32.mxu0 0.0
    %1069 = vmatmul.mubr.f32.gmra.mxu0 %v899
    %v1070 = vpop.f32.mrf.mxu0
    %v1071 = vadd.f32 %v1001, %v1070
    %v1072 = vpop.f32.mrf.mxu0
    %1073 = vdwg.mxu0
    %v1074 = vld [vmem:[%s890] sm:$0xff]
    %s1075 = scalar_lea.vmem [#allocation11], 256
    %v1076 = vld [vmem:[%s1075] sm:$0xff]
    %v1077 = vld [vmem:[%s1075 + $0x8] sm:$0xff]
    %v1078 = vld [vmem:[%s1075 + $0x10] sm:$0xff]
    %v1079 = vld [vmem:[%s1075 + $0x18] sm:$0xff]
    %v1080 = vld [vmem:[%s1075 + $0x20] sm:$0xff]
    %v1081 = vld [vmem:[%s1075 + $0x28] sm:$0xff]
    %v1082 = vld [vmem:[%s1075 + $0x30] sm:$0xff]
    %v1083 = vld [vmem:[%s1075 + $0x38] sm:$0xff]
    %v1084 = vld [vmem:[%s1075 + $0x40] sm:$0xff]
    %v1085 = vld [vmem:[%s1075 + $0x48] sm:$0xff]
    %v1086 = vld [vmem:[%s1075 + $0x50] sm:$0xff]
    %v1087 = vld [vmem:[%s1075 + $0x58] sm:$0xff]
    %v1088 = vld [vmem:[%s1075 + $0x60] sm:$0xff]
    %v1089 = vld [vmem:[%s1075 + $0x68] sm:$0xff]
    %v1090 = vld [vmem:[%s1075 + $0x70] sm:$0xff]
    %v1091 = vld [vmem:[%s1075 + $0x78] sm:$0xff]
    %1092 = vmatprep.subr.mxu0 0.0
    %1093 = vmatpush1.msra.mxu0 %v1091
    %1094 = vmatprep.subr.mxu0 0.0
    %1095 = vmatpush1.msra.mxu0 %v1090
    %1096 = vmatprep.subr.mxu0 0.0
    %1097 = vmatpush1.msra.mxu0 %v1089
    %1098 = vmatprep.subr.mxu0 0.0
    %1099 = vmatpush1.msra.mxu0 %v1088
    %1100 = vmatprep.subr.mxu0 0.0
    %1101 = vmatpush1.msra.mxu0 %v1087
    %1102 = vmatprep.subr.mxu0 0.0
    %1103 = vmatpush1.msra.mxu0 %v1086
    %1104 = vmatprep.subr.mxu0 0.0
    %1105 = vmatpush1.msra.mxu0 %v1085
    %1106 = vmatprep.subr.mxu0 0.0
    %1107 = vmatpush1.msra.mxu0 %v1084
    %1108 = vmatprep.subr.mxu0 0.0
    %1109 = vmatpush1.msra.mxu0 %v1083
    %1110 = vmatprep.subr.mxu0 0.0
    %1111 = vmatpush1.msra.mxu0 %v1082
    %1112 = vmatprep.subr.mxu0 0.0
    %1113 = vmatpush1.msra.mxu0 %v1081
    %1114 = vmatprep.subr.mxu0 0.0
    %1115 = vmatpush1.msra.mxu0 %v1080
    %1116 = vmatprep.subr.mxu0 0.0
    %1117 = vmatpush1.msra.mxu0 %v1079
    %1118 = vmatprep.subr.mxu0 0.0
    %1119 = vmatpush1.msra.mxu0 %v1078
    %1120 = vmatprep.subr.mxu0 0.0
    %1121 = vmatpush1.msra.mxu0 %v1077
    %1122 = vmatprep.subr.mxu0 0.0
    %1123 = vmatpush1.msra.mxu0 %v1076
    %1124 = vmatprep.subr.mxu0 0.0
    %1125 = vmatpush2.msra.mxu0 0.0
    %1126 = vmatprep.subr.mxu0 0.0
    %1127 = vmatpush2.msra.mxu0 0.0
    %1128 = vmatprep.subr.mxu0 0.0
    %1129 = vmatpush2.msra.mxu0 0.0
    %1130 = vmatprep.subr.mxu0 0.0
    %1131 = vmatpush2.msra.mxu0 0.0
    %1132 = vmatprep.subr.mxu0 0.0
    %1133 = vmatpush2.msra.mxu0 0.0
    %1134 = vmatprep.subr.mxu0 0.0
    %1135 = vmatpush2.msra.mxu0 0.0
    %1136 = vmatprep.subr.mxu0 0.0
    %1137 = vmatpush2.msra.mxu0 0.0
    %1138 = vmatprep.subr.mxu0 0.0
    %1139 = vmatpush2.msra.mxu0 0.0
    %1140 = vmatprep.subr.mxu0 0.0
    %1141 = vmatpush2.msra.mxu0 0.0
    %1142 = vmatprep.subr.mxu0 0.0
    %1143 = vmatpush2.msra.mxu0 0.0
    %1144 = vmatprep.subr.mxu0 0.0
    %1145 = vmatpush2.msra.mxu0 0.0
    %1146 = vmatprep.subr.mxu0 0.0
    %1147 = vmatpush2.msra.mxu0 0.0
    %1148 = vmatprep.subr.mxu0 0.0
    %1149 = vmatpush2.msra.mxu0 0.0
    %1150 = vmatprep.subr.mxu0 0.0
    %1151 = vmatpush2.msra.mxu0 0.0
    %1152 = vmatprep.subr.mxu0 0.0
    %1153 = vmatpush2.msra.mxu0 0.0
    %1154 = vmatprep.subr.mxu0 0.0
    %1155 = vmatpush2.msra.mxu0 0.0
    %1156 = vmatprep.mubr.f32.mxu0 0.0
    %1157 = vmatmul.mubr.f32.gmra.mxu0 %v1074
    %v1158 = vpop.f32.mrf.mxu0
    %v1159 = vadd.f32 0.0, %v1158
    %v1160 = vpop.f32.mrf.mxu0
    %1161 = vdwg.mxu0
    %v1162 = vadd.f32 %v1071, %v1159
    %v1163 = vld [vmem:[%s893] sm:$0xff]
    %s1164 = scalar_lea.vmem [#allocation11], 384
    %v1165 = vld [vmem:[%s1164] sm:$0xff]
    %v1166 = vld [vmem:[%s1164 + $0x8] sm:$0xff]
    %v1167 = vld [vmem:[%s1164 + $0x10] sm:$0xff]
    %v1168 = vld [vmem:[%s1164 + $0x18] sm:$0xff]
    %v1169 = vld [vmem:[%s1164 + $0x20] sm:$0xff]
    %v1170 = vld [vmem:[%s1164 + $0x28] sm:$0xff]
    %v1171 = vld [vmem:[%s1164 + $0x30] sm:$0xff]
    %v1172 = vld [vmem:[%s1164 + $0x38] sm:$0xff]
    %v1173 = vld [vmem:[%s1164 + $0x40] sm:$0xff]
    %v1174 = vld [vmem:[%s1164 + $0x48] sm:$0xff]
    %v1175 = vld [vmem:[%s1164 + $0x50] sm:$0xff]
    %v1176 = vld [vmem:[%s1164 + $0x58] sm:$0xff]
    %v1177 = vld [vmem:[%s1164 + $0x60] sm:$0xff]
    %v1178 = vld [vmem:[%s1164 + $0x68] sm:$0xff]
    %v1179 = vld [vmem:[%s1164 + $0x70] sm:$0xff]
    %v1180 = vld [vmem:[%s1164 + $0x78] sm:$0xff]
    %1181 = vmatprep.subr.mxu0 0.0
    %1182 = vmatpush1.msra.mxu0 %v1180
    %1183 = vmatprep.subr.mxu0 0.0
    %1184 = vmatpush1.msra.mxu0 %v1179
    %1185 = vmatprep.subr.mxu0 0.0
    %1186 = vmatpush1.msra.mxu0 %v1178
    %1187 = vmatprep.subr.mxu0 0.0
    %1188 = vmatpush1.msra.mxu0 %v1177
    %1189 = vmatprep.subr.mxu0 0.0
    %1190 = vmatpush1.msra.mxu0 %v1176
    %1191 = vmatprep.subr.mxu0 0.0
    %1192 = vmatpush1.msra.mxu0 %v1175
    %1193 = vmatprep.subr.mxu0 0.0
    %1194 = vmatpush1.msra.mxu0 %v1174
    %1195 = vmatprep.subr.mxu0 0.0
    %1196 = vmatpush1.msra.mxu0 %v1173
    %1197 = vmatprep.subr.mxu0 0.0
    %1198 = vmatpush1.msra.mxu0 %v1172
    %1199 = vmatprep.subr.mxu0 0.0
    %1200 = vmatpush1.msra.mxu0 %v1171
    %1201 = vmatprep.subr.mxu0 0.0
    %1202 = vmatpush1.msra.mxu0 %v1170
    %1203 = vmatprep.subr.mxu0 0.0
    %1204 = vmatpush1.msra.mxu0 %v1169
    %1205 = vmatprep.subr.mxu0 0.0
    %1206 = vmatpush1.msra.mxu0 %v1168
    %1207 = vmatprep.subr.mxu0 0.0
    %1208 = vmatpush1.msra.mxu0 %v1167
    %1209 = vmatprep.subr.mxu0 0.0
    %1210 = vmatpush1.msra.mxu0 %v1166
    %1211 = vmatprep.subr.mxu0 0.0
    %1212 = vmatpush1.msra.mxu0 %v1165
    %1213 = vmatprep.subr.mxu0 0.0
    %1214 = vmatpush2.msra.mxu0 0.0
    %1215 = vmatprep.subr.mxu0 0.0
    %1216 = vmatpush2.msra.mxu0 0.0
    %1217 = vmatprep.subr.mxu0 0.0
    %1218 = vmatpush2.msra.mxu0 0.0
    %1219 = vmatprep.subr.mxu0 0.0
    %1220 = vmatpush2.msra.mxu0 0.0
    %1221 = vmatprep.subr.mxu0 0.0
    %1222 = vmatpush2.msra.mxu0 0.0
    %1223 = vmatprep.subr.mxu0 0.0
    %1224 = vmatpush2.msra.mxu0 0.0
    %1225 = vmatprep.subr.mxu0 0.0
    %1226 = vmatpush2.msra.mxu0 0.0
    %1227 = vmatprep.subr.mxu0 0.0
    %1228 = vmatpush2.msra.mxu0 0.0
    %1229 = vmatprep.subr.mxu0 0.0
    %1230 = vmatpush2.msra.mxu0 0.0
    %1231 = vmatprep.subr.mxu0 0.0
    %1232 = vmatpush2.msra.mxu0 0.0
    %1233 = vmatprep.subr.mxu0 0.0
    %1234 = vmatpush2.msra.mxu0 0.0
    %1235 = vmatprep.subr.mxu0 0.0
    %1236 = vmatpush2.msra.mxu0 0.0
    %1237 = vmatprep.subr.mxu0 0.0
    %1238 = vmatpush2.msra.mxu0 0.0
    %1239 = vmatprep.subr.mxu0 0.0
    %1240 = vmatpush2.msra.mxu0 0.0
    %1241 = vmatprep.subr.mxu0 0.0
    %1242 = vmatpush2.msra.mxu0 0.0
    %1243 = vmatprep.subr.mxu0 0.0
    %1244 = vmatpush2.msra.mxu0 0.0
    %1245 = vmatprep.mubr.f32.mxu0 0.0
    %1246 = vmatmul.mubr.f32.gmra.mxu0 %v1163
    %v1247 = vpop.f32.mrf.mxu0
    %v1248 = vadd.f32 0.0, %v1247
    %v1249 = vpop.f32.mrf.mxu0
    %1250 = vdwg.mxu0
    %v1251 = vadd.f32 %v1162, %v1248
    %v1252 = vld [vmem:[%s896] sm:$0xff]
    %s1253 = scalar_lea.vmem [#allocation11], 512
    %v1254 = vld [vmem:[%s1253] sm:$0xff]
    %v1255 = vld [vmem:[%s1253 + $0x8] sm:$0xff]
    %v1256 = vld [vmem:[%s1253 + $0x10] sm:$0xff]
    %v1257 = vld [vmem:[%s1253 + $0x18] sm:$0xff]
    %v1258 = vld [vmem:[%s1253 + $0x20] sm:$0xff]
    %v1259 = vld [vmem:[%s1253 + $0x28] sm:$0xff]
    %v1260 = vld [vmem:[%s1253 + $0x30] sm:$0xff]
    %v1261 = vld [vmem:[%s1253 + $0x38] sm:$0xff]
    %v1262 = vld [vmem:[%s1253 + $0x40] sm:$0xff]
    %v1263 = vld [vmem:[%s1253 + $0x48] sm:$0xff]
    %v1264 = vld [vmem:[%s1253 + $0x50] sm:$0xff]
    %v1265 = vld [vmem:[%s1253 + $0x58] sm:$0xff]
    %v1266 = vld [vmem:[%s1253 + $0x60] sm:$0xff]
    %v1267 = vld [vmem:[%s1253 + $0x68] sm:$0xff]
    %v1268 = vld [vmem:[%s1253 + $0x70] sm:$0xff]
    %v1269 = vld [vmem:[%s1253 + $0x78] sm:$0xff]
    %1270 = vmatprep.subr.mxu0 0.0
    %1271 = vmatpush1.msra.mxu0 %v1269
    %1272 = vmatprep.subr.mxu0 0.0
    %1273 = vmatpush1.msra.mxu0 %v1268
    %1274 = vmatprep.subr.mxu0 0.0
    %1275 = vmatpush1.msra.mxu0 %v1267
    %1276 = vmatprep.subr.mxu0 0.0
    %1277 = vmatpush1.msra.mxu0 %v1266
    %1278 = vmatprep.subr.mxu0 0.0
    %1279 = vmatpush1.msra.mxu0 %v1265
    %1280 = vmatprep.subr.mxu0 0.0
    %1281 = vmatpush1.msra.mxu0 %v1264
    %1282 = vmatprep.subr.mxu0 0.0
    %1283 = vmatpush1.msra.mxu0 %v1263
    %1284 = vmatprep.subr.mxu0 0.0
    %1285 = vmatpush1.msra.mxu0 %v1262
    %1286 = vmatprep.subr.mxu0 0.0
    %1287 = vmatpush1.msra.mxu0 %v1261
    %1288 = vmatprep.subr.mxu0 0.0
    %1289 = vmatpush1.msra.mxu0 %v1260
    %1290 = vmatprep.subr.mxu0 0.0
    %1291 = vmatpush1.msra.mxu0 %v1259
    %1292 = vmatprep.subr.mxu0 0.0
    %1293 = vmatpush1.msra.mxu0 %v1258
    %1294 = vmatprep.subr.mxu0 0.0
    %1295 = vmatpush1.msra.mxu0 %v1257
    %1296 = vmatprep.subr.mxu0 0.0
    %1297 = vmatpush1.msra.mxu0 %v1256
    %1298 = vmatprep.subr.mxu0 0.0
    %1299 = vmatpush1.msra.mxu0 %v1255
    %1300 = vmatprep.subr.mxu0 0.0
    %1301 = vmatpush1.msra.mxu0 %v1254
    %1302 = vmatprep.subr.mxu0 0.0
    %1303 = vmatpush2.msra.mxu0 0.0
    %1304 = vmatprep.subr.mxu0 0.0
    %1305 = vmatpush2.msra.mxu0 0.0
    %1306 = vmatprep.subr.mxu0 0.0
    %1307 = vmatpush2.msra.mxu0 0.0
    %1308 = vmatprep.subr.mxu0 0.0
    %1309 = vmatpush2.msra.mxu0 0.0
    %1310 = vmatprep.subr.mxu0 0.0
    %1311 = vmatpush2.msra.mxu0 0.0
    %1312 = vmatprep.subr.mxu0 0.0
    %1313 = vmatpush2.msra.mxu0 0.0
    %1314 = vmatprep.subr.mxu0 0.0
    %1315 = vmatpush2.msra.mxu0 0.0
    %1316 = vmatprep.subr.mxu0 0.0
    %1317 = vmatpush2.msra.mxu0 0.0
    %1318 = vmatprep.subr.mxu0 0.0
    %1319 = vmatpush2.msra.mxu0 0.0
    %1320 = vmatprep.subr.mxu0 0.0
    %1321 = vmatpush2.msra.mxu0 0.0
    %1322 = vmatprep.subr.mxu0 0.0
    %1323 = vmatpush2.msra.mxu0 0.0
    %1324 = vmatprep.subr.mxu0 0.0
    %1325 = vmatpush2.msra.mxu0 0.0
    %1326 = vmatprep.subr.mxu0 0.0
    %1327 = vmatpush2.msra.mxu0 0.0
    %1328 = vmatprep.subr.mxu0 0.0
    %1329 = vmatpush2.msra.mxu0 0.0
    %1330 = vmatprep.subr.mxu0 0.0
    %1331 = vmatpush2.msra.mxu0 0.0
    %1332 = vmatprep.subr.mxu0 0.0
    %1333 = vmatpush2.msra.mxu0 0.0
    %1334 = vmatprep.mubr.f32.mxu0 0.0
    %1335 = vmatmul.mubr.f32.gmra.mxu0 %v1252
    %v1336 = vpop.f32.mrf.mxu0
    %v1337 = vadd.f32 0.0, %v1336
    %v1338 = vpop.f32.mrf.mxu0
    %1339 = vdwg.mxu0
    %v1340 = vadd.f32 %v1251, %v1337
    %v1341 = vld [vmem:[#allocation12] sm:$0x1]
    %v1343 = vlaneseq
    %v1344 = vshrl.u32 %v1343, 7
    %v1345 = vsub.s32 0, %v1344
    %v1346 = vrot.slane %v1341, %v1345
    %v1348 = vadd.f32 %v1340, %v1346
    %v1349 = vmax.f32 %v1348, 0.0
    %v1350 = vrot.slane %v1349, 4
    %v1351 = vadd.f32 %v1349, %v1350
    %v1352 = vrot.slane %v1351, 2
    %v1353 = vadd.f32 %v1351, %v1352
    %v1354 = vrot.slane %v1353, 1
    %v1355 = vadd.f32 %v1353, %v1354
    %v1356 = vmul.f32 %v1349, %v1349
    %v1357 = vrot.slane %v1356, 4
    %v1358 = vadd.f32 %v1356, %v1357
    %v1359 = vrot.slane %v1358, 2
    %v1360 = vadd.f32 %v1358, %v1359
    %v1361 = vrot.slane %v1360, 1
    %v1362 = vadd.f32 %v1360, %v1361
    %v1363 = vld [vmem:[#allocation14] sm:$0xff]
    %v1364 = vld [vmem:[#allocation14 + $0x8] sm:$0xff]
    %v1365 = vld [vmem:[#allocation14 + $0x10] sm:$0xff]
    %v1366 = vld [vmem:[#allocation14 + $0x18] sm:$0xff]
    %v1367 = vld [vmem:[#allocation14 + $0x20] sm:$0xff]
    %v1368 = vld [vmem:[#allocation14 + $0x28] sm:$0xff]
    %v1369 = vld [vmem:[#allocation14 + $0x30] sm:$0xff]
    %v1370 = vld [vmem:[#allocation14 + $0x38] sm:$0xff]
    %v1371 = vld [vmem:[#allocation14 + $0x40] sm:$0xff]
    %v1372 = vld [vmem:[#allocation14 + $0x48] sm:$0xff]
    %v1373 = vld [vmem:[#allocation14 + $0x50] sm:$0xff]
    %v1374 = vld [vmem:[#allocation14 + $0x58] sm:$0xff]
    %v1375 = vld [vmem:[#allocation14 + $0x60] sm:$0xff]
    %v1376 = vld [vmem:[#allocation14 + $0x68] sm:$0xff]
    %v1377 = vld [vmem:[#allocation14 + $0x70] sm:$0xff]
    %v1378 = vld [vmem:[#allocation14 + $0x78] sm:$0xff]
    %1379 = vmatprep.subr.mxu0 0.0
    %1380 = vmatpush1.msra.mxu0 %v1378
    %1381 = vmatprep.subr.mxu0 0.0
    %1382 = vmatpush1.msra.mxu0 %v1377
    %1383 = vmatprep.subr.mxu0 0.0
    %1384 = vmatpush1.msra.mxu0 %v1376
    %1385 = vmatprep.subr.mxu0 0.0
    %1386 = vmatpush1.msra.mxu0 %v1375
    %1387 = vmatprep.subr.mxu0 0.0
    %1388 = vmatpush1.msra.mxu0 %v1374
    %1389 = vmatprep.subr.mxu0 0.0
    %1390 = vmatpush1.msra.mxu0 %v1373
    %1391 = vmatprep.subr.mxu0 0.0
    %1392 = vmatpush1.msra.mxu0 %v1372
    %1393 = vmatprep.subr.mxu0 0.0
    %1394 = vmatpush1.msra.mxu0 %v1371
    %1395 = vmatprep.subr.mxu0 0.0
    %1396 = vmatpush1.msra.mxu0 %v1370
    %1397 = vmatprep.subr.mxu0 0.0
    %1398 = vmatpush1.msra.mxu0 %v1369
    %1399 = vmatprep.subr.mxu0 0.0
    %1400 = vmatpush1.msra.mxu0 %v1368
    %1401 = vmatprep.subr.mxu0 0.0
    %1402 = vmatpush1.msra.mxu0 %v1367
    %1403 = vmatprep.subr.mxu0 0.0
    %1404 = vmatpush1.msra.mxu0 %v1366
    %1405 = vmatprep.subr.mxu0 0.0
    %1406 = vmatpush1.msra.mxu0 %v1365
    %1407 = vmatprep.subr.mxu0 0.0
    %1408 = vmatpush1.msra.mxu0 %v1364
    %1409 = vmatprep.subr.mxu0 0.0
    %1410 = vmatpush1.msra.mxu0 %v1363
    %1411 = vmatprep.subr.mxu0 0.0
    %1412 = vmatpush2.msra.mxu0 0.0
    %1413 = vmatprep.subr.mxu0 0.0
    %1414 = vmatpush2.msra.mxu0 0.0
    %1415 = vmatprep.subr.mxu0 0.0
    %1416 = vmatpush2.msra.mxu0 0.0
    %1417 = vmatprep.subr.mxu0 0.0
    %1418 = vmatpush2.msra.mxu0 0.0
    %1419 = vmatprep.subr.mxu0 0.0
    %1420 = vmatpush2.msra.mxu0 0.0
    %1421 = vmatprep.subr.mxu0 0.0
    %1422 = vmatpush2.msra.mxu0 0.0
    %1423 = vmatprep.subr.mxu0 0.0
    %1424 = vmatpush2.msra.mxu0 0.0
    %1425 = vmatprep.subr.mxu0 0.0
    %1426 = vmatpush2.msra.mxu0 0.0
    %1427 = vmatprep.subr.mxu0 0.0
    %1428 = vmatpush2.msra.mxu0 0.0
    %1429 = vmatprep.subr.mxu0 0.0
    %1430 = vmatpush2.msra.mxu0 0.0
    %1431 = vmatprep.subr.mxu0 0.0
    %1432 = vmatpush2.msra.mxu0 0.0
    %1433 = vmatprep.subr.mxu0 0.0
    %1434 = vmatpush2.msra.mxu0 0.0
    %1435 = vmatprep.subr.mxu0 0.0
    %1436 = vmatpush2.msra.mxu0 0.0
    %1437 = vmatprep.subr.mxu0 0.0
    %1438 = vmatpush2.msra.mxu0 0.0
    %1439 = vmatprep.subr.mxu0 0.0
    %1440 = vmatpush2.msra.mxu0 0.0
    %1441 = vmatprep.subr.mxu0 0.0
    %1442 = vmatpush2.msra.mxu0 0.0
    %1443 = vmatprep.mubr.f32.mxu0 0.0
    %1444 = vmatmul.mubr.f32.gmra.mxu0 %v1355
    %v1445 = vpop.f32.mrf.mxu0
    %v1446 = vadd.f32 0.0, %v1445
    %v1447 = vpop.f32.mrf.mxu0
    %1448 = vdwg.mxu0
    %1449 = vmatprep.subr.mxu0 0.0
    %1450 = vmatpush1.msra.mxu0 %v1378
    %1451 = vmatprep.subr.mxu0 0.0
    %1452 = vmatpush1.msra.mxu0 %v1377
    %1453 = vmatprep.subr.mxu0 0.0
    %1454 = vmatpush1.msra.mxu0 %v1376
    %1455 = vmatprep.subr.mxu0 0.0
    %1456 = vmatpush1.msra.mxu0 %v1375
    %1457 = vmatprep.subr.mxu0 0.0
    %1458 = vmatpush1.msra.mxu0 %v1374
    %1459 = vmatprep.subr.mxu0 0.0
    %1460 = vmatpush1.msra.mxu0 %v1373
    %1461 = vmatprep.subr.mxu0 0.0
    %1462 = vmatpush1.msra.mxu0 %v1372
    %1463 = vmatprep.subr.mxu0 0.0
    %1464 = vmatpush1.msra.mxu0 %v1371
    %1465 = vmatprep.subr.mxu0 0.0
    %1466 = vmatpush1.msra.mxu0 %v1370
    %1467 = vmatprep.subr.mxu0 0.0
    %1468 = vmatpush1.msra.mxu0 %v1369
    %1469 = vmatprep.subr.mxu0 0.0
    %1470 = vmatpush1.msra.mxu0 %v1368
    %1471 = vmatprep.subr.mxu0 0.0
    %1472 = vmatpush1.msra.mxu0 %v1367
    %1473 = vmatprep.subr.mxu0 0.0
    %1474 = vmatpush1.msra.mxu0 %v1366
    %1475 = vmatprep.subr.mxu0 0.0
    %1476 = vmatpush1.msra.mxu0 %v1365
    %1477 = vmatprep.subr.mxu0 0.0
    %1478 = vmatpush1.msra.mxu0 %v1364
    %1479 = vmatprep.subr.mxu0 0.0
    %1480 = vmatpush1.msra.mxu0 %v1363
    %1481 = vmatprep.subr.mxu0 0.0
    %1482 = vmatpush2.msra.mxu0 0.0
    %1483 = vmatprep.subr.mxu0 0.0
    %1484 = vmatpush2.msra.mxu0 0.0
    %1485 = vmatprep.subr.mxu0 0.0
    %1486 = vmatpush2.msra.mxu0 0.0
    %1487 = vmatprep.subr.mxu0 0.0
    %1488 = vmatpush2.msra.mxu0 0.0
    %1489 = vmatprep.subr.mxu0 0.0
    %1490 = vmatpush2.msra.mxu0 0.0
    %1491 = vmatprep.subr.mxu0 0.0
    %1492 = vmatpush2.msra.mxu0 0.0
    %1493 = vmatprep.subr.mxu0 0.0
    %1494 = vmatpush2.msra.mxu0 0.0
    %1495 = vmatprep.subr.mxu0 0.0
    %1496 = vmatpush2.msra.mxu0 0.0
    %1497 = vmatprep.subr.mxu0 0.0
    %1498 = vmatpush2.msra.mxu0 0.0
    %1499 = vmatprep.subr.mxu0 0.0
    %1500 = vmatpush2.msra.mxu0 0.0
    %1501 = vmatprep.subr.mxu0 0.0
    %1502 = vmatpush2.msra.mxu0 0.0
    %1503 = vmatprep.subr.mxu0 0.0
    %1504 = vmatpush2.msra.mxu0 0.0
    %1505 = vmatprep.subr.mxu0 0.0
    %1506 = vmatpush2.msra.mxu0 0.0
    %1507 = vmatprep.subr.mxu0 0.0
    %1508 = vmatpush2.msra.mxu0 0.0
    %1509 = vmatprep.subr.mxu0 0.0
    %1510 = vmatpush2.msra.mxu0 0.0
    %1511 = vmatprep.subr.mxu0 0.0
    %1512 = vmatpush2.msra.mxu0 0.0
    %1513 = vmatprep.mubr.f32.mxu0 0.0
    %1514 = vmatmul.mubr.f32.gmra.mxu0 %v1362
    %v1515 = vpop.f32.mrf.mxu0
    %v1516 = vadd.f32 0.0, %v1515
    %v1517 = vpop.f32.mrf.mxu0
    %1518 = vdwg.mxu0
    %v1519 = vmul.f32 %v1446, 0.03125
    %v1520 = vmul.f32 %v1516, 0.03125
    %v1521 = vmul.f32 %v1519, %v1519
    %v1522 = vsub.f32 %v1520, %v1521
    %v1523 = vld [vmem:[%s9] sm:$0x1]
    %v1524 = vadd.f32 %v1522, 1e-05
    %v1525 = vrsqrt.pop %v1524
    %v1526 = vmul.f32 %v1523, %v1525
    %v1527 = vld [vmem:[%s10] sm:$0x1]
    %v1528 = vmul.f32 %v1519, %v1526
    %v1529 = vsub.f32 %v1527, %v1528
    %v1530 = vld [vmem:[%s12] sm:$0xff]
    %v1531 = vld [vmem:[%s12 + $0x8] sm:$0xff]
    %v1532 = vld [vmem:[%s12 + $0x10] sm:$0xff]
    %v1533 = vld [vmem:[%s12 + $0x18] sm:$0xff]
    %vm1534 = vcmask 261120
    %v1536 = vsel %vm1534, %v1526, 0
    %1538 = vmatprep.subr.mxu0 0.0
    %1539 = vmatpush1.msra.mxu0 0.0
    %1540 = vmatprep.subr.mxu0 0.0
    %1541 = vmatpush1.msra.mxu0 0.0
    %1542 = vmatprep.subr.mxu0 0.0
    %1543 = vmatpush1.msra.mxu0 0.0
    %1544 = vmatprep.subr.mxu0 0.0
    %1545 = vmatpush1.msra.mxu0 0.0
    %1546 = vmatprep.subr.mxu0 0.0
    %1547 = vmatpush1.msra.mxu0 0.0
    %1548 = vmatprep.subr.mxu0 0.0
    %1549 = vmatpush1.msra.mxu0 0.0
    %1550 = vmatprep.subr.mxu0 0.0
    %1551 = vmatpush1.msra.mxu0 0.0
    %1552 = vmatprep.subr.mxu0 0.0
    %1553 = vmatpush1.msra.mxu0 0.0
    %1554 = vmatprep.subr.mxu0 0.0
    %1555 = vmatpush1.msra.mxu0 0.0
    %1556 = vmatprep.subr.mxu0 0.0
    %1557 = vmatpush1.msra.mxu0 0.0
    %1558 = vmatprep.subr.mxu0 0.0
    %1559 = vmatpush1.msra.mxu0 0.0
    %1560 = vmatprep.subr.mxu0 0.0
    %1561 = vmatpush1.msra.mxu0 0.0
    %1562 = vmatprep.subr.mxu0 0.0
    %1563 = vmatpush1.msra.mxu0 %v1533
    %1564 = vmatprep.subr.mxu0 0.0
    %1565 = vmatpush1.msra.mxu0 %v1532
    %1566 = vmatprep.subr.mxu0 0.0
    %1567 = vmatpush1.msra.mxu0 %v1531
    %1568 = vmatprep.subr.mxu0 0.0
    %1569 = vmatpush1.msra.mxu0 %v1530
    %1570 = vmatprep.subr.mxu0 0.0
    %1571 = vmatpush2.msra.mxu0 0.0
    %1572 = vmatprep.subr.mxu0 0.0
    %1573 = vmatpush2.msra.mxu0 0.0
    %1574 = vmatprep.subr.mxu0 0.0
    %1575 = vmatpush2.msra.mxu0 0.0
    %1576 = vmatprep.subr.mxu0 0.0
    %1577 = vmatpush2.msra.mxu0 0.0
    %1578 = vmatprep.subr.mxu0 0.0
    %1579 = vmatpush2.msra.mxu0 0.0
    %1580 = vmatprep.subr.mxu0 0.0
    %1581 = vmatpush2.msra.mxu0 0.0
    %1582 = vmatprep.subr.mxu0 0.0
    %1583 = vmatpush2.msra.mxu0 0.0
    %1584 = vmatprep.subr.mxu0 0.0
    %1585 = vmatpush2.msra.mxu0 0.0
    %1586 = vmatprep.subr.mxu0 0.0
    %1587 = vmatpush2.msra.mxu0 0.0
    %1588 = vmatprep.subr.mxu0 0.0
    %1589 = vmatpush2.msra.mxu0 0.0
    %1590 = vmatprep.subr.mxu0 0.0
    %1591 = vmatpush2.msra.mxu0 0.0
    %1592 = vmatprep.subr.mxu0 0.0
    %1593 = vmatpush2.msra.mxu0 0.0
    %1594 = vmatprep.subr.mxu0 0.0
    %1595 = vmatpush2.msra.mxu0 0.0
    %1596 = vmatprep.subr.mxu0 0.0
    %1597 = vmatpush2.msra.mxu0 0.0
    %1598 = vmatprep.subr.mxu0 0.0
    %1599 = vmatpush2.msra.mxu0 0.0
    %1600 = vmatprep.subr.mxu0 0.0
    %1601 = vmatpush2.msra.mxu0 0.0
    %1602 = vmatprep.mubr.f32.mxu0 0.0
    %1603 = vmatmul.mubr.f32.gmra.mxu0 %v1536
    %v1604 = vpop.f32.mrf.mxu0
    %v1605 = vadd.f32 0.0, %v1604
    %v1606 = vpop.f32.mrf.mxu0
    %1607 = vdwg.mxu0
    %v1609 = vsel %vm1534, %v1529, 0
    %1611 = vmatprep.subr.mxu0 0.0
    %1612 = vmatpush1.msra.mxu0 0.0
    %1613 = vmatprep.subr.mxu0 0.0
    %1614 = vmatpush1.msra.mxu0 0.0
    %1615 = vmatprep.subr.mxu0 0.0
    %1616 = vmatpush1.msra.mxu0 0.0
    %1617 = vmatprep.subr.mxu0 0.0
    %1618 = vmatpush1.msra.mxu0 0.0
    %1619 = vmatprep.subr.mxu0 0.0
    %1620 = vmatpush1.msra.mxu0 0.0
    %1621 = vmatprep.subr.mxu0 0.0
    %1622 = vmatpush1.msra.mxu0 0.0
    %1623 = vmatprep.subr.mxu0 0.0
    %1624 = vmatpush1.msra.mxu0 0.0
    %1625 = vmatprep.subr.mxu0 0.0
    %1626 = vmatpush1.msra.mxu0 0.0
    %1627 = vmatprep.subr.mxu0 0.0
    %1628 = vmatpush1.msra.mxu0 0.0
    %1629 = vmatprep.subr.mxu0 0.0
    %1630 = vmatpush1.msra.mxu0 0.0
    %1631 = vmatprep.subr.mxu0 0.0
    %1632 = vmatpush1.msra.mxu0 0.0
    %1633 = vmatprep.subr.mxu0 0.0
    %1634 = vmatpush1.msra.mxu0 0.0
    %1635 = vmatprep.subr.mxu0 0.0
    %1636 = vmatpush1.msra.mxu0 %v1533
    %1637 = vmatprep.subr.mxu0 0.0
    %1638 = vmatpush1.msra.mxu0 %v1532
    %1639 = vmatprep.subr.mxu0 0.0
    %1640 = vmatpush1.msra.mxu0 %v1531
    %1641 = vmatprep.subr.mxu0 0.0
    %1642 = vmatpush1.msra.mxu0 %v1530
    %1643 = vmatprep.subr.mxu0 0.0
    %1644 = vmatpush2.msra.mxu0 0.0
    %1645 = vmatprep.subr.mxu0 0.0
    %1646 = vmatpush2.msra.mxu0 0.0
    %1647 = vmatprep.subr.mxu0 0.0
    %1648 = vmatpush2.msra.mxu0 0.0
    %1649 = vmatprep.subr.mxu0 0.0
    %1650 = vmatpush2.msra.mxu0 0.0
    %1651 = vmatprep.subr.mxu0 0.0
    %1652 = vmatpush2.msra.mxu0 0.0
    %1653 = vmatprep.subr.mxu0 0.0
    %1654 = vmatpush2.msra.mxu0 0.0
    %1655 = vmatprep.subr.mxu0 0.0
    %1656 = vmatpush2.msra.mxu0 0.0
    %1657 = vmatprep.subr.mxu0 0.0
    %1658 = vmatpush2.msra.mxu0 0.0
    %1659 = vmatprep.subr.mxu0 0.0
    %1660 = vmatpush2.msra.mxu0 0.0
    %1661 = vmatprep.subr.mxu0 0.0
    %1662 = vmatpush2.msra.mxu0 0.0
    %1663 = vmatprep.subr.mxu0 0.0
    %1664 = vmatpush2.msra.mxu0 0.0
    %1665 = vmatprep.subr.mxu0 0.0
    %1666 = vmatpush2.msra.mxu0 0.0
    %1667 = vmatprep.subr.mxu0 0.0
    %1668 = vmatpush2.msra.mxu0 0.0
    %1669 = vmatprep.subr.mxu0 0.0
    %1670 = vmatpush2.msra.mxu0 0.0
    %1671 = vmatprep.subr.mxu0 0.0
    %1672 = vmatpush2.msra.mxu0 0.0
    %1673 = vmatprep.subr.mxu0 0.0
    %1674 = vmatpush2.msra.mxu0 0.0
    %1675 = vmatprep.mubr.f32.mxu0 0.0
    %1676 = vmatmul.mubr.f32.gmra.mxu0 %v1609
    %v1677 = vpop.f32.mrf.mxu0
    %v1678 = vadd.f32 0.0, %v1677
    %v1679 = vpop.f32.mrf.mxu0
    %1680 = vdwg.mxu0
    %v1681 = vlaneseq
    %v1682 = vshrl.u32 %v1681, 7
    %v1683 = vsub.s32 0, %v1682
    %v1684 = vrot.slane %v1605, %v1683
    %v1685 = vmul.f32 %v1349, %v1684
    %v1686 = vlaneseq
    %v1687 = vshrl.u32 %v1686, 7
    %v1688 = vsub.s32 0, %v1687
    %v1689 = vrot.slane %v1678, %v1688
    %v1690 = vadd.f32 %v1685, %v1689
    %1691 = vst [vmem:[#allocation4] sm:$0x3] %v1690
    %1692 = vst [vmem:[#allocation4 - $0x2] sm:$0x30] %v1690
    %s1693 = scalar_lea.vmem [#allocation4], 4
    %1694 = vst [vmem:[%s1693 - $0x1] sm:$0x6] %v1690
    %1695 = vst [vmem:[%s1693 - $0x3] sm:$0x60] %v1690
    %s1696 = scalar_lea.vmem [#allocation4], 8
    %1697 = vst [vmem:[%s1696 - $0x2] sm:$0xc] %v1690
    %1698 = vst [vmem:[%s1696 - $0x4] sm:$0xc0] %v1690
    %v1699 = vld [vmem:[#allocation4] sm:$0xf]
    %v1700 = vld [vmem:[#allocation15] sm:$0xff]
    %v1701 = vld [vmem:[#allocation15 + $0x8] sm:$0xff]
    %v1702 = vld [vmem:[#allocation15 + $0x10] sm:$0xff]
    %v1703 = vld [vmem:[#allocation15 + $0x18] sm:$0xff]
    %v1704 = vld [vmem:[#allocation15 + $0x20] sm:$0xff]
    %v1705 = vld [vmem:[#allocation15 + $0x28] sm:$0xff]
    %v1706 = vld [vmem:[#allocation15 + $0x30] sm:$0xff]
    %v1707 = vld [vmem:[#allocation15 + $0x38] sm:$0xff]
    %v1708 = vld [vmem:[#allocation15 + $0x40] sm:$0xff]
    %v1709 = vld [vmem:[#allocation15 + $0x48] sm:$0xff]
    %v1710 = vld [vmem:[#allocation15 + $0x50] sm:$0xff]
    %v1711 = vld [vmem:[#allocation15 + $0x58] sm:$0xff]
    %v1712 = vld [vmem:[#allocation15 + $0x60] sm:$0xff]
    %v1713 = vld [vmem:[#allocation15 + $0x68] sm:$0xff]
    %v1714 = vld [vmem:[#allocation15 + $0x70] sm:$0xff]
    %v1715 = vld [vmem:[#allocation15 + $0x78] sm:$0xff]
    %v1716 = vld [vmem:[%s1693] sm:$0xf]
    %s1717 = scalar_lea.vmem [#allocation15], 128
    %v1718 = vld [vmem:[%s1717] sm:$0xff]
    %v1719 = vld [vmem:[%s1717 + $0x8] sm:$0xff]
    %v1720 = vld [vmem:[%s1717 + $0x10] sm:$0xff]
    %v1721 = vld [vmem:[%s1717 + $0x18] sm:$0xff]
    %v1722 = vld [vmem:[%s1717 + $0x20] sm:$0xff]
    %v1723 = vld [vmem:[%s1717 + $0x28] sm:$0xff]
    %v1724 = vld [vmem:[%s1717 + $0x30] sm:$0xff]
    %v1725 = vld [vmem:[%s1717 + $0x38] sm:$0xff]
    %v1726 = vld [vmem:[%s1717 + $0x40] sm:$0xff]
    %v1727 = vld [vmem:[%s1717 + $0x48] sm:$0xff]
    %v1728 = vld [vmem:[%s1717 + $0x50] sm:$0xff]
    %v1729 = vld [vmem:[%s1717 + $0x58] sm:$0xff]
    %v1730 = vld [vmem:[%s1717 + $0x60] sm:$0xff]
    %v1731 = vld [vmem:[%s1717 + $0x68] sm:$0xff]
    %v1732 = vld [vmem:[%s1717 + $0x70] sm:$0xff]
    %v1733 = vld [vmem:[%s1717 + $0x78] sm:$0xff]
    %1734 = vmatprep.subr.mxu0 0.0
    %1735 = vmatpush1.msra.mxu0 %v1733
    %1736 = vmatprep.subr.mxu0 0.0
    %1737 = vmatpush1.msra.mxu0 %v1732
    %1738 = vmatprep.subr.mxu0 0.0
    %1739 = vmatpush1.msra.mxu0 %v1731
    %1740 = vmatprep.subr.mxu0 0.0
    %1741 = vmatpush1.msra.mxu0 %v1730
    %1742 = vmatprep.subr.mxu0 0.0
    %1743 = vmatpush1.msra.mxu0 %v1729
    %1744 = vmatprep.subr.mxu0 0.0
    %1745 = vmatpush1.msra.mxu0 %v1728
    %1746 = vmatprep.subr.mxu0 0.0
    %1747 = vmatpush1.msra.mxu0 %v1727
    %1748 = vmatprep.subr.mxu0 0.0
    %1749 = vmatpush1.msra.mxu0 %v1726
    %1750 = vmatprep.subr.mxu0 0.0
    %1751 = vmatpush1.msra.mxu0 %v1725
    %1752 = vmatprep.subr.mxu0 0.0
    %1753 = vmatpush1.msra.mxu0 %v1724
    %1754 = vmatprep.subr.mxu0 0.0
    %1755 = vmatpush1.msra.mxu0 %v1723
    %1756 = vmatprep.subr.mxu0 0.0
    %1757 = vmatpush1.msra.mxu0 %v1722
    %1758 = vmatprep.subr.mxu0 0.0
    %1759 = vmatpush1.msra.mxu0 %v1721
    %1760 = vmatprep.subr.mxu0 0.0
    %1761 = vmatpush1.msra.mxu0 %v1720
    %1762 = vmatprep.subr.mxu0 0.0
    %1763 = vmatpush1.msra.mxu0 %v1719
    %1764 = vmatprep.subr.mxu0 0.0
    %1765 = vmatpush1.msra.mxu0 %v1718
    %1766 = vmatprep.subr.mxu0 0.0
    %1767 = vmatpush2.msra.mxu0 0.0
    %1768 = vmatprep.subr.mxu0 0.0
    %1769 = vmatpush2.msra.mxu0 0.0
    %1770 = vmatprep.subr.mxu0 0.0
    %1771 = vmatpush2.msra.mxu0 0.0
    %1772 = vmatprep.subr.mxu0 0.0
    %1773 = vmatpush2.msra.mxu0 0.0
    %1774 = vmatprep.subr.mxu0 0.0
    %1775 = vmatpush2.msra.mxu0 0.0
    %1776 = vmatprep.subr.mxu0 0.0
    %1777 = vmatpush2.msra.mxu0 0.0
    %1778 = vmatprep.subr.mxu0 0.0
    %1779 = vmatpush2.msra.mxu0 0.0
    %1780 = vmatprep.subr.mxu0 0.0
    %1781 = vmatpush2.msra.mxu0 0.0
    %1782 = vmatprep.subr.mxu0 0.0
    %1783 = vmatpush2.msra.mxu0 0.0
    %1784 = vmatprep.subr.mxu0 0.0
    %1785 = vmatpush2.msra.mxu0 0.0
    %1786 = vmatprep.subr.mxu0 0.0
    %1787 = vmatpush2.msra.mxu0 0.0
    %1788 = vmatprep.subr.mxu0 0.0
    %1789 = vmatpush2.msra.mxu0 0.0
    %1790 = vmatprep.subr.mxu0 0.0
    %1791 = vmatpush2.msra.mxu0 0.0
    %1792 = vmatprep.subr.mxu0 0.0
    %1793 = vmatpush2.msra.mxu0 0.0
    %1794 = vmatprep.subr.mxu0 0.0
    %1795 = vmatpush2.msra.mxu0 0.0
    %1796 = vmatprep.subr.mxu0 0.0
    %1797 = vmatpush2.msra.mxu0 0.0
    %1798 = vmatprep.mubr.f32.mxu0 0.0
    %1799 = vmatmul.mubr.f32.gmra.mxu0 %v1716
    %v1800 = vpop.f32.mrf.mxu0
    %v1801 = vadd.f32 0.0, %v1800
    %v1802 = vpop.f32.mrf.mxu0
    %1803 = vdwg.mxu0
    %1804 = vmatprep.subr.mxu0 0.0
    %1805 = vmatpush1.msra.mxu0 %v1715
    %1806 = vmatprep.subr.mxu0 0.0
    %1807 = vmatpush1.msra.mxu0 %v1714
    %1808 = vmatprep.subr.mxu0 0.0
    %1809 = vmatpush1.msra.mxu0 %v1713
    %1810 = vmatprep.subr.mxu0 0.0
    %1811 = vmatpush1.msra.mxu0 %v1712
    %1812 = vmatprep.subr.mxu0 0.0
    %1813 = vmatpush1.msra.mxu0 %v1711
    %1814 = vmatprep.subr.mxu0 0.0
    %1815 = vmatpush1.msra.mxu0 %v1710
    %1816 = vmatprep.subr.mxu0 0.0
    %1817 = vmatpush1.msra.mxu0 %v1709
    %1818 = vmatprep.subr.mxu0 0.0
    %1819 = vmatpush1.msra.mxu0 %v1708
    %1820 = vmatprep.subr.mxu0 0.0
    %1821 = vmatpush1.msra.mxu0 %v1707
    %1822 = vmatprep.subr.mxu0 0.0
    %1823 = vmatpush1.msra.mxu0 %v1706
    %1824 = vmatprep.subr.mxu0 0.0
    %1825 = vmatpush1.msra.mxu0 %v1705
    %1826 = vmatprep.subr.mxu0 0.0
    %1827 = vmatpush1.msra.mxu0 %v1704
    %1828 = vmatprep.subr.mxu0 0.0
    %1829 = vmatpush1.msra.mxu0 %v1703
    %1830 = vmatprep.subr.mxu0 0.0
    %1831 = vmatpush1.msra.mxu0 %v1702
    %1832 = vmatprep.subr.mxu0 0.0
    %1833 = vmatpush1.msra.mxu0 %v1701
    %1834 = vmatprep.subr.mxu0 0.0
    %1835 = vmatpush1.msra.mxu0 %v1700
    %1836 = vmatprep.subr.mxu0 0.0
    %1837 = vmatpush2.msra.mxu0 0.0
    %1838 = vmatprep.subr.mxu0 0.0
    %1839 = vmatpush2.msra.mxu0 0.0
    %1840 = vmatprep.subr.mxu0 0.0
    %1841 = vmatpush2.msra.mxu0 0.0
    %1842 = vmatprep.subr.mxu0 0.0
    %1843 = vmatpush2.msra.mxu0 0.0
    %1844 = vmatprep.subr.mxu0 0.0
    %1845 = vmatpush2.msra.mxu0 0.0
    %1846 = vmatprep.subr.mxu0 0.0
    %1847 = vmatpush2.msra.mxu0 0.0
    %1848 = vmatprep.subr.mxu0 0.0
    %1849 = vmatpush2.msra.mxu0 0.0
    %1850 = vmatprep.subr.mxu0 0.0
    %1851 = vmatpush2.msra.mxu0 0.0
    %1852 = vmatprep.subr.mxu0 0.0
    %1853 = vmatpush2.msra.mxu0 0.0
    %1854 = vmatprep.subr.mxu0 0.0
    %1855 = vmatpush2.msra.mxu0 0.0
    %1856 = vmatprep.subr.mxu0 0.0
    %1857 = vmatpush2.msra.mxu0 0.0
    %1858 = vmatprep.subr.mxu0 0.0
    %1859 = vmatpush2.msra.mxu0 0.0
    %1860 = vmatprep.subr.mxu0 0.0
    %1861 = vmatpush2.msra.mxu0 0.0
    %1862 = vmatprep.subr.mxu0 0.0
    %1863 = vmatpush2.msra.mxu0 0.0
    %1864 = vmatprep.subr.mxu0 0.0
    %1865 = vmatpush2.msra.mxu0 0.0
    %1866 = vmatprep.subr.mxu0 0.0
    %1867 = vmatpush2.msra.mxu0 0.0
    %1868 = vmatprep.mubr.f32.mxu0 0.0
    %1869 = vmatmul.mubr.f32.gmra.mxu0 %v1699
    %v1870 = vpop.f32.mrf.mxu0
    %v1871 = vadd.f32 %v1801, %v1870
    %v1872 = vpop.f32.mrf.mxu0
    %1873 = vdwg.mxu0
    %v1874 = vld [vmem:[%s1696] sm:$0xf]
    %s1875 = scalar_lea.vmem [#allocation15], 256
    %v1876 = vld [vmem:[%s1875] sm:$0xff]
    %v1877 = vld [vmem:[%s1875 + $0x8] sm:$0xff]
    %v1878 = vld [vmem:[%s1875 + $0x10] sm:$0xff]
    %v1879 = vld [vmem:[%s1875 + $0x18] sm:$0xff]
    %v1880 = vld [vmem:[%s1875 + $0x20] sm:$0xff]
    %v1881 = vld [vmem:[%s1875 + $0x28] sm:$0xff]
    %v1882 = vld [vmem:[%s1875 + $0x30] sm:$0xff]
    %v1883 = vld [vmem:[%s1875 + $0x38] sm:$0xff]
    %v1884 = vld [vmem:[%s1875 + $0x40] sm:$0xff]
    %v1885 = vld [vmem:[%s1875 + $0x48] sm:$0xff]
    %v1886 = vld [vmem:[%s1875 + $0x50] sm:$0xff]
    %v1887 = vld [vmem:[%s1875 + $0x58] sm:$0xff]
    %v1888 = vld [vmem:[%s1875 + $0x60] sm:$0xff]
    %v1889 = vld [vmem:[%s1875 + $0x68] sm:$0xff]
    %v1890 = vld [vmem:[%s1875 + $0x70] sm:$0xff]
    %v1891 = vld [vmem:[%s1875 + $0x78] sm:$0xff]
    %1892 = vmatprep.subr.mxu0 0.0
    %1893 = vmatpush1.msra.mxu0 %v1891
    %1894 = vmatprep.subr.mxu0 0.0
    %1895 = vmatpush1.msra.mxu0 %v1890
    %1896 = vmatprep.subr.mxu0 0.0
    %1897 = vmatpush1.msra.mxu0 %v1889
    %1898 = vmatprep.subr.mxu0 0.0
    %1899 = vmatpush1.msra.mxu0 %v1888
    %1900 = vmatprep.subr.mxu0 0.0
    %1901 = vmatpush1.msra.mxu0 %v1887
    %1902 = vmatprep.subr.mxu0 0.0
    %1903 = vmatpush1.msra.mxu0 %v1886
    %1904 = vmatprep.subr.mxu0 0.0
    %1905 = vmatpush1.msra.mxu0 %v1885
    %1906 = vmatprep.subr.mxu0 0.0
    %1907 = vmatpush1.msra.mxu0 %v1884
    %1908 = vmatprep.subr.mxu0 0.0
    %1909 = vmatpush1.msra.mxu0 %v1883
    %1910 = vmatprep.subr.mxu0 0.0
    %1911 = vmatpush1.msra.mxu0 %v1882
    %1912 = vmatprep.subr.mxu0 0.0
    %1913 = vmatpush1.msra.mxu0 %v1881
    %1914 = vmatprep.subr.mxu0 0.0
    %1915 = vmatpush1.msra.mxu0 %v1880
    %1916 = vmatprep.subr.mxu0 0.0
    %1917 = vmatpush1.msra.mxu0 %v1879
    %1918 = vmatprep.subr.mxu0 0.0
    %1919 = vmatpush1.msra.mxu0 %v1878
    %1920 = vmatprep.subr.mxu0 0.0
    %1921 = vmatpush1.msra.mxu0 %v1877
    %1922 = vmatprep.subr.mxu0 0.0
    %1923 = vmatpush1.msra.mxu0 %v1876
    %1924 = vmatprep.subr.mxu0 0.0
    %1925 = vmatpush2.msra.mxu0 0.0
    %1926 = vmatprep.subr.mxu0 0.0
    %1927 = vmatpush2.msra.mxu0 0.0
    %1928 = vmatprep.subr.mxu0 0.0
    %1929 = vmatpush2.msra.mxu0 0.0
    %1930 = vmatprep.subr.mxu0 0.0
    %1931 = vmatpush2.msra.mxu0 0.0
    %1932 = vmatprep.subr.mxu0 0.0
    %1933 = vmatpush2.msra.mxu0 0.0
    %1934 = vmatprep.subr.mxu0 0.0
    %1935 = vmatpush2.msra.mxu0 0.0
    %1936 = vmatprep.subr.mxu0 0.0
    %1937 = vmatpush2.msra.mxu0 0.0
    %1938 = vmatprep.subr.mxu0 0.0
    %1939 = vmatpush2.msra.mxu0 0.0
    %1940 = vmatprep.subr.mxu0 0.0
    %1941 = vmatpush2.msra.mxu0 0.0
    %1942 = vmatprep.subr.mxu0 0.0
    %1943 = vmatpush2.msra.mxu0 0.0
    %1944 = vmatprep.subr.mxu0 0.0
    %1945 = vmatpush2.msra.mxu0 0.0
    %1946 = vmatprep.subr.mxu0 0.0
    %1947 = vmatpush2.msra.mxu0 0.0
    %1948 = vmatprep.subr.mxu0 0.0
    %1949 = vmatpush2.msra.mxu0 0.0
    %1950 = vmatprep.subr.mxu0 0.0
    %1951 = vmatpush2.msra.mxu0 0.0
    %1952 = vmatprep.subr.mxu0 0.0
    %1953 = vmatpush2.msra.mxu0 0.0
    %1954 = vmatprep.subr.mxu0 0.0
    %1955 = vmatpush2.msra.mxu0 0.0
    %1956 = vmatprep.mubr.f32.mxu0 0.0
    %1957 = vmatmul.mubr.f32.gmra.mxu0 %v1874
    %v1958 = vpop.f32.mrf.mxu0
    %v1959 = vadd.f32 0.0, %v1958
    %v1960 = vpop.f32.mrf.mxu0
    %1961 = vdwg.mxu0
    %v1962 = vadd.f32 %v1871, %v1959
    %v1963 = vld [vmem:[#allocation17] sm:$0x1]
    %v1965 = vlaneseq
    %v1966 = vshrl.u32 %v1965, 7
    %v1967 = vsub.s32 0, %v1966
    %v1968 = vrot.slane %v1963, %v1967
    %v1970 = vadd.f32 %v1962, %v1968
    %v1971 = vmax.f32 %v1970, 0.0
    %vm1972 = vcmask 1043456
    %v1973 = vsel %vm1972, %v1971, 0.0
    %v1974 = vrot.slane %v1973, 4
    %v1975 = vadd.f32 %v1973, %v1974
    %v1976 = vrot.slane %v1975, 2
    %v1977 = vadd.f32 %v1975, %v1976
    %v1978 = vrot.slane %v1977, 1
    %v1979 = vadd.f32 %v1977, %v1978
    %v1980 = vmul.f32 %v1971, %v1971
    %v1981 = vsel %vm1972, %v1980, 0.0
    %v1982 = vrot.slane %v1981, 4
    %v1983 = vadd.f32 %v1981, %v1982
    %v1984 = vrot.slane %v1983, 2
    %v1985 = vadd.f32 %v1983, %v1984
    %v1986 = vrot.slane %v1985, 1
    %v1987 = vadd.f32 %v1985, %v1986
    %v1988 = vld [vmem:[#allocation18] sm:$0xff]
    %v1989 = vld [vmem:[#allocation18 + $0x8] sm:$0xff]
    %v1990 = vld [vmem:[#allocation18 + $0x10] sm:$0xff]
    %v1991 = vld [vmem:[#allocation18 + $0x18] sm:$0xff]
    %v1992 = vld [vmem:[#allocation18 + $0x20] sm:$0xff]
    %v1993 = vld [vmem:[#allocation18 + $0x28] sm:$0xff]
    %v1994 = vld [vmem:[#allocation18 + $0x30] sm:$0xff]
    %v1995 = vld [vmem:[#allocation18 + $0x38] sm:$0xff]
    %v1996 = vld [vmem:[#allocation18 + $0x40] sm:$0xff]
    %v1997 = vld [vmem:[#allocation18 + $0x48] sm:$0xff]
    %v1998 = vld [vmem:[#allocation18 + $0x50] sm:$0xff]
    %v1999 = vld [vmem:[#allocation18 + $0x58] sm:$0xff]
    %v2000 = vld [vmem:[#allocation18 + $0x60] sm:$0xff]
    %v2001 = vld [vmem:[#allocation18 + $0x68] sm:$0xff]
    %v2002 = vld [vmem:[#allocation18 + $0x70] sm:$0xff]
    %v2003 = vld [vmem:[#allocation18 + $0x78] sm:$0xff]
    %2004 = vmatprep.subr.mxu0 0.0
    %2005 = vmatpush1.msra.mxu0 %v2003
    %2006 = vmatprep.subr.mxu0 0.0
    %2007 = vmatpush1.msra.mxu0 %v2002
    %2008 = vmatprep.subr.mxu0 0.0
    %2009 = vmatpush1.msra.mxu0 %v2001
    %2010 = vmatprep.subr.mxu0 0.0
    %2011 = vmatpush1.msra.mxu0 %v2000
    %2012 = vmatprep.subr.mxu0 0.0
    %2013 = vmatpush1.msra.mxu0 %v1999
    %2014 = vmatprep.subr.mxu0 0.0
    %2015 = vmatpush1.msra.mxu0 %v1998
    %2016 = vmatprep.subr.mxu0 0.0
    %2017 = vmatpush1.msra.mxu0 %v1997
    %2018 = vmatprep.subr.mxu0 0.0
    %2019 = vmatpush1.msra.mxu0 %v1996
    %2020 = vmatprep.subr.mxu0 0.0
    %2021 = vmatpush1.msra.mxu0 %v1995
    %2022 = vmatprep.subr.mxu0 0.0
    %2023 = vmatpush1.msra.mxu0 %v1994
    %2024 = vmatprep.subr.mxu0 0.0
    %2025 = vmatpush1.msra.mxu0 %v1993
    %2026 = vmatprep.subr.mxu0 0.0
    %2027 = vmatpush1.msra.mxu0 %v1992
    %2028 = vmatprep.subr.mxu0 0.0
    %2029 = vmatpush1.msra.mxu0 %v1991
    %2030 = vmatprep.subr.mxu0 0.0
    %2031 = vmatpush1.msra.mxu0 %v1990
    %2032 = vmatprep.subr.mxu0 0.0
    %2033 = vmatpush1.msra.mxu0 %v1989
    %2034 = vmatprep.subr.mxu0 0.0
    %2035 = vmatpush1.msra.mxu0 %v1988
    %2036 = vmatprep.subr.mxu0 0.0
    %2037 = vmatpush2.msra.mxu0 0.0
    %2038 = vmatprep.subr.mxu0 0.0
    %2039 = vmatpush2.msra.mxu0 0.0
    %2040 = vmatprep.subr.mxu0 0.0
    %2041 = vmatpush2.msra.mxu0 0.0
    %2042 = vmatprep.subr.mxu0 0.0
    %2043 = vmatpush2.msra.mxu0 0.0
    %2044 = vmatprep.subr.mxu0 0.0
    %2045 = vmatpush2.msra.mxu0 0.0
    %2046 = vmatprep.subr.mxu0 0.0
    %2047 = vmatpush2.msra.mxu0 0.0
    %2048 = vmatprep.subr.mxu0 0.0
    %2049 = vmatpush2.msra.mxu0 0.0
    %2050 = vmatprep.subr.mxu0 0.0
    %2051 = vmatpush2.msra.mxu0 0.0
    %2052 = vmatprep.subr.mxu0 0.0
    %2053 = vmatpush2.msra.mxu0 0.0
    %2054 = vmatprep.subr.mxu0 0.0
    %2055 = vmatpush2.msra.mxu0 0.0
    %2056 = vmatprep.subr.mxu0 0.0
    %2057 = vmatpush2.msra.mxu0 0.0
    %2058 = vmatprep.subr.mxu0 0.0
    %2059 = vmatpush2.msra.mxu0 0.0
    %2060 = vmatprep.subr.mxu0 0.0
    %2061 = vmatpush2.msra.mxu0 0.0
    %2062 = vmatprep.subr.mxu0 0.0
    %2063 = vmatpush2.msra.mxu0 0.0
    %2064 = vmatprep.subr.mxu0 0.0
    %2065 = vmatpush2.msra.mxu0 0.0
    %2066 = vmatprep.subr.mxu0 0.0
    %2067 = vmatpush2.msra.mxu0 0.0
    %2068 = vmatprep.mubr.f32.mxu0 0.0
    %2069 = vmatmul.mubr.f32.gmra.mxu0 %v1979
    %v2070 = vpop.f32.mrf.mxu0
    %v2071 = vadd.f32 0.0, %v2070
    %v2072 = vpop.f32.mrf.mxu0
    %2073 = vdwg.mxu0
    %2074 = vmatprep.subr.mxu0 0.0
    %2075 = vmatpush1.msra.mxu0 %v2003
    %2076 = vmatprep.subr.mxu0 0.0
    %2077 = vmatpush1.msra.mxu0 %v2002
    %2078 = vmatprep.subr.mxu0 0.0
    %2079 = vmatpush1.msra.mxu0 %v2001
    %2080 = vmatprep.subr.mxu0 0.0
    %2081 = vmatpush1.msra.mxu0 %v2000
    %2082 = vmatprep.subr.mxu0 0.0
    %2083 = vmatpush1.msra.mxu0 %v1999
    %2084 = vmatprep.subr.mxu0 0.0
    %2085 = vmatpush1.msra.mxu0 %v1998
    %2086 = vmatprep.subr.mxu0 0.0
    %2087 = vmatpush1.msra.mxu0 %v1997
    %2088 = vmatprep.subr.mxu0 0.0
    %2089 = vmatpush1.msra.mxu0 %v1996
    %2090 = vmatprep.subr.mxu0 0.0
    %2091 = vmatpush1.msra.mxu0 %v1995
    %2092 = vmatprep.subr.mxu0 0.0
    %2093 = vmatpush1.msra.mxu0 %v1994
    %2094 = vmatprep.subr.mxu0 0.0
    %2095 = vmatpush1.msra.mxu0 %v1993
    %2096 = vmatprep.subr.mxu0 0.0
    %2097 = vmatpush1.msra.mxu0 %v1992
    %2098 = vmatprep.subr.mxu0 0.0
    %2099 = vmatpush1.msra.mxu0 %v1991
    %2100 = vmatprep.subr.mxu0 0.0
    %2101 = vmatpush1.msra.mxu0 %v1990
    %2102 = vmatprep.subr.mxu0 0.0
    %2103 = vmatpush1.msra.mxu0 %v1989
    %2104 = vmatprep.subr.mxu0 0.0
    %2105 = vmatpush1.msra.mxu0 %v1988
    %2106 = vmatprep.subr.mxu0 0.0
    %2107 = vmatpush2.msra.mxu0 0.0
    %2108 = vmatprep.subr.mxu0 0.0
    %2109 = vmatpush2.msra.mxu0 0.0
    %2110 = vmatprep.subr.mxu0 0.0
    %2111 = vmatpush2.msra.mxu0 0.0
    %2112 = vmatprep.subr.mxu0 0.0
    %2113 = vmatpush2.msra.mxu0 0.0
    %2114 = vmatprep.subr.mxu0 0.0
    %2115 = vmatpush2.msra.mxu0 0.0
    %2116 = vmatprep.subr.mxu0 0.0
    %2117 = vmatpush2.msra.mxu0 0.0
    %2118 = vmatprep.subr.mxu0 0.0
    %2119 = vmatpush2.msra.mxu0 0.0
    %2120 = vmatprep.subr.mxu0 0.0
    %2121 = vmatpush2.msra.mxu0 0.0
    %2122 = vmatprep.subr.mxu0 0.0
    %2123 = vmatpush2.msra.mxu0 0.0
    %2124 = vmatprep.subr.mxu0 0.0
    %2125 = vmatpush2.msra.mxu0 0.0
    %2126 = vmatprep.subr.mxu0 0.0
    %2127 = vmatpush2.msra.mxu0 0.0
    %2128 = vmatprep.subr.mxu0 0.0
    %2129 = vmatpush2.msra.mxu0 0.0
    %2130 = vmatprep.subr.mxu0 0.0
    %2131 = vmatpush2.msra.mxu0 0.0
    %2132 = vmatprep.subr.mxu0 0.0
    %2133 = vmatpush2.msra.mxu0 0.0
    %2134 = vmatprep.subr.mxu0 0.0
    %2135 = vmatpush2.msra.mxu0 0.0
    %2136 = vmatprep.subr.mxu0 0.0
    %2137 = vmatpush2.msra.mxu0 0.0
    %2138 = vmatprep.mubr.f32.mxu0 0.0
    %2139 = vmatmul.mubr.f32.gmra.mxu0 %v1987
    %v2140 = vpop.f32.mrf.mxu0
    %v2141 = vadd.f32 0.0, %v2140
    %v2142 = vpop.f32.mrf.mxu0
    %2143 = vdwg.mxu0
    %v2144 = vmul.f32 %v2071, 0.125
    %v2145 = vmul.f32 %v2141, 0.125
    %v2146 = vmul.f32 %v2144, %v2144
    %v2147 = vsub.f32 %v2145, %v2146
    %v2148 = vld [vmem:[%s15] sm:$0x1]
    %v2149 = vadd.f32 %v2147, 1e-05
    %v2150 = vrsqrt.pop %v2149
    %v2151 = vmul.f32 %v2148, %v2150
    %v2152 = vld [vmem:[%s16] sm:$0x1]
    %v2153 = vmul.f32 %v2144, %v2151
    %v2154 = vsub.f32 %v2152, %v2153
    %v2155 = vld [vmem:[#allocation20] sm:$0xff]
    %v2156 = vld [vmem:[#allocation20 + $0x8] sm:$0xff]
    %v2157 = vld [vmem:[#allocation20 + $0x10] sm:$0xff]
    %v2158 = vld [vmem:[#allocation20 + $0x18] sm:$0xff]
    %v2159 = vld [vmem:[#allocation20 + $0x20] sm:$0xff]
    %v2160 = vld [vmem:[#allocation20 + $0x28] sm:$0xff]
    %v2161 = vld [vmem:[#allocation20 + $0x30] sm:$0xff]
    %v2162 = vld [vmem:[#allocation20 + $0x38] sm:$0xff]
    %vm2163 = vcmask 523264
    %v2165 = vsel %vm2163, %v2151, 0
    %2167 = vmatprep.subr.mxu0 0.0
    %2168 = vmatpush1.msra.mxu0 0.0
    %2169 = vmatprep.subr.mxu0 0.0
    %2170 = vmatpush1.msra.mxu0 0.0
    %2171 = vmatprep.subr.mxu0 0.0
    %2172 = vmatpush1.msra.mxu0 0.0
    %2173 = vmatprep.subr.mxu0 0.0
    %2174 = vmatpush1.msra.mxu0 0.0
    %2175 = vmatprep.subr.mxu0 0.0
    %2176 = vmatpush1.msra.mxu0 0.0
    %2177 = vmatprep.subr.mxu0 0.0
    %2178 = vmatpush1.msra.mxu0 0.0
    %2179 = vmatprep.subr.mxu0 0.0
    %2180 = vmatpush1.msra.mxu0 0.0
    %2181 = vmatprep.subr.mxu0 0.0
    %2182 = vmatpush1.msra.mxu0 0.0
    %2183 = vmatprep.subr.mxu0 0.0
    %2184 = vmatpush1.msra.mxu0 %v2162
    %2185 = vmatprep.subr.mxu0 0.0
    %2186 = vmatpush1.msra.mxu0 %v2161
    %2187 = vmatprep.subr.mxu0 0.0
    %2188 = vmatpush1.msra.mxu0 %v2160
    %2189 = vmatprep.subr.mxu0 0.0
    %2190 = vmatpush1.msra.mxu0 %v2159
    %2191 = vmatprep.subr.mxu0 0.0
    %2192 = vmatpush1.msra.mxu0 %v2158
    %2193 = vmatprep.subr.mxu0 0.0
    %2194 = vmatpush1.msra.mxu0 %v2157
    %2195 = vmatprep.subr.mxu0 0.0
    %2196 = vmatpush1.msra.mxu0 %v2156
    %2197 = vmatprep.subr.mxu0 0.0
    %2198 = vmatpush1.msra.mxu0 %v2155
    %2199 = vmatprep.subr.mxu0 0.0
    %2200 = vmatpush2.msra.mxu0 0.0
    %2201 = vmatprep.subr.mxu0 0.0
    %2202 = vmatpush2.msra.mxu0 0.0
    %2203 = vmatprep.subr.mxu0 0.0
    %2204 = vmatpush2.msra.mxu0 0.0
    %2205 = vmatprep.subr.mxu0 0.0
    %2206 = vmatpush2.msra.mxu0 0.0
    %2207 = vmatprep.subr.mxu0 0.0
    %2208 = vmatpush2.msra.mxu0 0.0
    %2209 = vmatprep.subr.mxu0 0.0
    %2210 = vmatpush2.msra.mxu0 0.0
    %2211 = vmatprep.subr.mxu0 0.0
    %2212 = vmatpush2.msra.mxu0 0.0
    %2213 = vmatprep.subr.mxu0 0.0
    %2214 = vmatpush2.msra.mxu0 0.0
    %2215 = vmatprep.subr.mxu0 0.0
    %2216 = vmatpush2.msra.mxu0 0.0
    %2217 = vmatprep.subr.mxu0 0.0
    %2218 = vmatpush2.msra.mxu0 0.0
    %2219 = vmatprep.subr.mxu0 0.0
    %2220 = vmatpush2.msra.mxu0 0.0
    %2221 = vmatprep.subr.mxu0 0.0
    %2222 = vmatpush2.msra.mxu0 0.0
    %2223 = vmatprep.subr.mxu0 0.0
    %2224 = vmatpush2.msra.mxu0 0.0
    %2225 = vmatprep.subr.mxu0 0.0
    %2226 = vmatpush2.msra.mxu0 0.0
    %2227 = vmatprep.subr.mxu0 0.0
    %2228 = vmatpush2.msra.mxu0 0.0
    %2229 = vmatprep.subr.mxu0 0.0
    %2230 = vmatpush2.msra.mxu0 0.0
    %2231 = vmatprep.mubr.f32.mxu0 0.0
    %2232 = vmatmul.mubr.f32.gmra.mxu0 %v2165
    %v2233 = vpop.f32.mrf.mxu0
    %v2234 = vadd.f32 0.0, %v2233
    %v2235 = vpop.f32.mrf.mxu0
    %2236 = vdwg.mxu0
    %v2238 = vsel %vm2163, %v2154, 0
    %2240 = vmatprep.subr.mxu0 0.0
    %2241 = vmatpush1.msra.mxu0 0.0
    %2242 = vmatprep.subr.mxu0 0.0
    %2243 = vmatpush1.msra.mxu0 0.0
    %2244 = vmatprep.subr.mxu0 0.0
    %2245 = vmatpush1.msra.mxu0 0.0
    %2246 = vmatprep.subr.mxu0 0.0
    %2247 = vmatpush1.msra.mxu0 0.0
    %2248 = vmatprep.subr.mxu0 0.0
    %2249 = vmatpush1.msra.mxu0 0.0
    %2250 = vmatprep.subr.mxu0 0.0
    %2251 = vmatpush1.msra.mxu0 0.0
    %2252 = vmatprep.subr.mxu0 0.0
    %2253 = vmatpush1.msra.mxu0 0.0
    %2254 = vmatprep.subr.mxu0 0.0
    %2255 = vmatpush1.msra.mxu0 0.0
    %2256 = vmatprep.subr.mxu0 0.0
    %2257 = vmatpush1.msra.mxu0 %v2162
    %2258 = vmatprep.subr.mxu0 0.0
    %2259 = vmatpush1.msra.mxu0 %v2161
    %2260 = vmatprep.subr.mxu0 0.0
    %2261 = vmatpush1.msra.mxu0 %v2160
    %2262 = vmatprep.subr.mxu0 0.0
    %2263 = vmatpush1.msra.mxu0 %v2159
    %2264 = vmatprep.subr.mxu0 0.0
    %2265 = vmatpush1.msra.mxu0 %v2158
    %2266 = vmatprep.subr.mxu0 0.0
    %2267 = vmatpush1.msra.mxu0 %v2157
    %2268 = vmatprep.subr.mxu0 0.0
    %2269 = vmatpush1.msra.mxu0 %v2156
    %2270 = vmatprep.subr.mxu0 0.0
    %2271 = vmatpush1.msra.mxu0 %v2155
    %2272 = vmatprep.subr.mxu0 0.0
    %2273 = vmatpush2.msra.mxu0 0.0
    %2274 = vmatprep.subr.mxu0 0.0
    %2275 = vmatpush2.msra.mxu0 0.0
    %2276 = vmatprep.subr.mxu0 0.0
    %2277 = vmatpush2.msra.mxu0 0.0
    %2278 = vmatprep.subr.mxu0 0.0
    %2279 = vmatpush2.msra.mxu0 0.0
    %2280 = vmatprep.subr.mxu0 0.0
    %2281 = vmatpush2.msra.mxu0 0.0
    %2282 = vmatprep.subr.mxu0 0.0
    %2283 = vmatpush2.msra.mxu0 0.0
    %2284 = vmatprep.subr.mxu0 0.0
    %2285 = vmatpush2.msra.mxu0 0.0
    %2286 = vmatprep.subr.mxu0 0.0
    %2287 = vmatpush2.msra.mxu0 0.0
    %2288 = vmatprep.subr.mxu0 0.0
    %2289 = vmatpush2.msra.mxu0 0.0
    %2290 = vmatprep.subr.mxu0 0.0
    %2291 = vmatpush2.msra.mxu0 0.0
    %2292 = vmatprep.subr.mxu0 0.0
    %2293 = vmatpush2.msra.mxu0 0.0
    %2294 = vmatprep.subr.mxu0 0.0
    %2295 = vmatpush2.msra.mxu0 0.0
    %2296 = vmatprep.subr.mxu0 0.0
    %2297 = vmatpush2.msra.mxu0 0.0
    %2298 = vmatprep.subr.mxu0 0.0
    %2299 = vmatpush2.msra.mxu0 0.0
    %2300 = vmatprep.subr.mxu0 0.0
    %2301 = vmatpush2.msra.mxu0 0.0
    %2302 = vmatprep.subr.mxu0 0.0
    %2303 = vmatpush2.msra.mxu0 0.0
    %2304 = vmatprep.mubr.f32.mxu0 0.0
    %2305 = vmatmul.mubr.f32.gmra.mxu0 %v2238
    %v2306 = vpop.f32.mrf.mxu0
    %v2307 = vadd.f32 0.0, %v2306
    %v2308 = vpop.f32.mrf.mxu0
    %2309 = vdwg.mxu0
    %v2310 = vlaneseq
    %v2311 = vshrl.u32 %v2310, 7
    %v2312 = vsub.s32 0, %v2311
    %v2313 = vrot.slane %v2234, %v2312
    %v2314 = vmul.f32 %v1971, %v2313
    %v2315 = vlaneseq
    %v2316 = vshrl.u32 %v2315, 7
    %v2317 = vsub.s32 0, %v2316
    %v2318 = vrot.slane %v2307, %v2317
    %v2319 = vadd.f32 %v2314, %v2318
    %2320 = vst [vmem:[#allocation5] sm:$0x1] %v2319
    %2321 = vst [vmem:[#allocation5 - $0x1] sm:$0x4] %v2319
    %s2322 = scalar_lea.vmem [#allocation5], 2
    %2323 = vst [vmem:[%s2322 - $0x1] sm:$0x2] %v2319
    %2324 = vst [vmem:[%s2322 - $0x2] sm:$0x8] %v2319
    %v2325 = vld [vmem:[#allocation5] sm:$0x3]
    %v2326 = vld [vmem:[%s19] sm:$0xff]
    %v2327 = vld [vmem:[%s19 + $0x8] sm:$0xff]
    %v2328 = vld [vmem:[%s19 + $0x10] sm:$0xff]
    %v2329 = vld [vmem:[%s19 + $0x18] sm:$0xff]
    %v2330 = vld [vmem:[%s19 + $0x20] sm:$0xff]
    %v2331 = vld [vmem:[%s19 + $0x28] sm:$0xff]
    %v2332 = vld [vmem:[%s19 + $0x30] sm:$0xff]
    %v2333 = vld [vmem:[%s19 + $0x38] sm:$0xff]
    %v2334 = vld [vmem:[%s19 + $0x40] sm:$0xff]
    %v2335 = vld [vmem:[%s19 + $0x48] sm:$0xff]
    %v2336 = vld [vmem:[%s19 + $0x50] sm:$0xff]
    %v2337 = vld [vmem:[%s19 + $0x58] sm:$0xff]
    %v2338 = vld [vmem:[%s19 + $0x60] sm:$0xff]
    %v2339 = vld [vmem:[%s19 + $0x68] sm:$0xff]
    %v2340 = vld [vmem:[%s19 + $0x70] sm:$0xff]
    %v2341 = vld [vmem:[%s19 + $0x78] sm:$0xff]
    %v2342 = vld [vmem:[%s2322] sm:$0x3]
    %s2343 = scalar_lea.vmem %s19, 128
    %v2344 = vld [vmem:[%s2343] sm:$0xff]
    %v2345 = vld [vmem:[%s2343 + $0x8] sm:$0xff]
    %v2346 = vld [vmem:[%s2343 + $0x10] sm:$0xff]
    %v2347 = vld [vmem:[%s2343 + $0x18] sm:$0xff]
    %v2348 = vld [vmem:[%s2343 + $0x20] sm:$0xff]
    %v2349 = vld [vmem:[%s2343 + $0x28] sm:$0xff]
    %v2350 = vld [vmem:[%s2343 + $0x30] sm:$0xff]
    %v2351 = vld [vmem:[%s2343 + $0x38] sm:$0xff]
    %v2352 = vld [vmem:[%s2343 + $0x40] sm:$0xff]
    %v2353 = vld [vmem:[%s2343 + $0x48] sm:$0xff]
    %v2354 = vld [vmem:[%s2343 + $0x50] sm:$0xff]
    %v2355 = vld [vmem:[%s2343 + $0x58] sm:$0xff]
    %v2356 = vld [vmem:[%s2343 + $0x60] sm:$0xff]
    %v2357 = vld [vmem:[%s2343 + $0x68] sm:$0xff]
    %v2358 = vld [vmem:[%s2343 + $0x70] sm:$0xff]
    %v2359 = vld [vmem:[%s2343 + $0x78] sm:$0xff]
    %2360 = vmatprep.subr.mxu0 0.0
    %2361 = vmatpush1.msra.mxu0 %v2359
    %2362 = vmatprep.subr.mxu0 0.0
    %2363 = vmatpush1.msra.mxu0 %v2358
    %2364 = vmatprep.subr.mxu0 0.0
    %2365 = vmatpush1.msra.mxu0 %v2357
    %2366 = vmatprep.subr.mxu0 0.0
    %2367 = vmatpush1.msra.mxu0 %v2356
    %2368 = vmatprep.subr.mxu0 0.0
    %2369 = vmatpush1.msra.mxu0 %v2355
    %2370 = vmatprep.subr.mxu0 0.0
    %2371 = vmatpush1.msra.mxu0 %v2354
    %2372 = vmatprep.subr.mxu0 0.0
    %2373 = vmatpush1.msra.mxu0 %v2353
    %2374 = vmatprep.subr.mxu0 0.0
    %2375 = vmatpush1.msra.mxu0 %v2352
    %2376 = vmatprep.subr.mxu0 0.0
    %2377 = vmatpush1.msra.mxu0 %v2351
    %2378 = vmatprep.subr.mxu0 0.0
    %2379 = vmatpush1.msra.mxu0 %v2350
    %2380 = vmatprep.subr.mxu0 0.0
    %2381 = vmatpush1.msra.mxu0 %v2349
    %2382 = vmatprep.subr.mxu0 0.0
    %2383 = vmatpush1.msra.mxu0 %v2348
    %2384 = vmatprep.subr.mxu0 0.0
    %2385 = vmatpush1.msra.mxu0 %v2347
    %2386 = vmatprep.subr.mxu0 0.0
    %2387 = vmatpush1.msra.mxu0 %v2346
    %2388 = vmatprep.subr.mxu0 0.0
    %2389 = vmatpush1.msra.mxu0 %v2345
    %2390 = vmatprep.subr.mxu0 0.0
    %2391 = vmatpush1.msra.mxu0 %v2344
    %2392 = vmatprep.subr.mxu0 0.0
    %2393 = vmatpush2.msra.mxu0 0.0
    %2394 = vmatprep.subr.mxu0 0.0
    %2395 = vmatpush2.msra.mxu0 0.0
    %2396 = vmatprep.subr.mxu0 0.0
    %2397 = vmatpush2.msra.mxu0 0.0
    %2398 = vmatprep.subr.mxu0 0.0
    %2399 = vmatpush2.msra.mxu0 0.0
    %2400 = vmatprep.subr.mxu0 0.0
    %2401 = vmatpush2.msra.mxu0 0.0
    %2402 = vmatprep.subr.mxu0 0.0
    %2403 = vmatpush2.msra.mxu0 0.0
    %2404 = vmatprep.subr.mxu0 0.0
    %2405 = vmatpush2.msra.mxu0 0.0
    %2406 = vmatprep.subr.mxu0 0.0
    %2407 = vmatpush2.msra.mxu0 0.0
    %2408 = vmatprep.subr.mxu0 0.0
    %2409 = vmatpush2.msra.mxu0 0.0
    %2410 = vmatprep.subr.mxu0 0.0
    %2411 = vmatpush2.msra.mxu0 0.0
    %2412 = vmatprep.subr.mxu0 0.0
    %2413 = vmatpush2.msra.mxu0 0.0
    %2414 = vmatprep.subr.mxu0 0.0
    %2415 = vmatpush2.msra.mxu0 0.0
    %2416 = vmatprep.subr.mxu0 0.0
    %2417 = vmatpush2.msra.mxu0 0.0
    %2418 = vmatprep.subr.mxu0 0.0
    %2419 = vmatpush2.msra.mxu0 0.0
    %2420 = vmatprep.subr.mxu0 0.0
    %2421 = vmatpush2.msra.mxu0 0.0
    %2422 = vmatprep.subr.mxu0 0.0
    %2423 = vmatpush2.msra.mxu0 0.0
    %2424 = vmatprep.mubr.f32.mxu0 0.0
    %2425 = vmatmul.mubr.f32.gmra.mxu0 %v2342
    %v2426 = vpop.f32.mrf.mxu0
    %v2427 = vadd.f32 0.0, %v2426
    %v2428 = vpop.f32.mrf.mxu0
    %2429 = vdwg.mxu0
    %2430 = vmatprep.subr.mxu0 0.0
    %2431 = vmatpush1.msra.mxu0 %v2341
    %2432 = vmatprep.subr.mxu0 0.0
    %2433 = vmatpush1.msra.mxu0 %v2340
    %2434 = vmatprep.subr.mxu0 0.0
    %2435 = vmatpush1.msra.mxu0 %v2339
    %2436 = vmatprep.subr.mxu0 0.0
    %2437 = vmatpush1.msra.mxu0 %v2338
    %2438 = vmatprep.subr.mxu0 0.0
    %2439 = vmatpush1.msra.mxu0 %v2337
    %2440 = vmatprep.subr.mxu0 0.0
    %2441 = vmatpush1.msra.mxu0 %v2336
    %2442 = vmatprep.subr.mxu0 0.0
    %2443 = vmatpush1.msra.mxu0 %v2335
    %2444 = vmatprep.subr.mxu0 0.0
    %2445 = vmatpush1.msra.mxu0 %v2334
    %2446 = vmatprep.subr.mxu0 0.0
    %2447 = vmatpush1.msra.mxu0 %v2333
    %2448 = vmatprep.subr.mxu0 0.0
    %2449 = vmatpush1.msra.mxu0 %v2332
    %2450 = vmatprep.subr.mxu0 0.0
    %2451 = vmatpush1.msra.mxu0 %v2331
    %2452 = vmatprep.subr.mxu0 0.0
    %2453 = vmatpush1.msra.mxu0 %v2330
    %2454 = vmatprep.subr.mxu0 0.0
    %2455 = vmatpush1.msra.mxu0 %v2329
    %2456 = vmatprep.subr.mxu0 0.0
    %2457 = vmatpush1.msra.mxu0 %v2328
    %2458 = vmatprep.subr.mxu0 0.0
    %2459 = vmatpush1.msra.mxu0 %v2327
    %2460 = vmatprep.subr.mxu0 0.0
    %2461 = vmatpush1.msra.mxu0 %v2326
    %2462 = vmatprep.subr.mxu0 0.0
    %2463 = vmatpush2.msra.mxu0 0.0
    %2464 = vmatprep.subr.mxu0 0.0
    %2465 = vmatpush2.msra.mxu0 0.0
    %2466 = vmatprep.subr.mxu0 0.0
    %2467 = vmatpush2.msra.mxu0 0.0
    %2468 = vmatprep.subr.mxu0 0.0
    %2469 = vmatpush2.msra.mxu0 0.0
    %2470 = vmatprep.subr.mxu0 0.0
    %2471 = vmatpush2.msra.mxu0 0.0
    %2472 = vmatprep.subr.mxu0 0.0
    %2473 = vmatpush2.msra.mxu0 0.0
    %2474 = vmatprep.subr.mxu0 0.0
    %2475 = vmatpush2.msra.mxu0 0.0
    %2476 = vmatprep.subr.mxu0 0.0
    %2477 = vmatpush2.msra.mxu0 0.0
    %2478 = vmatprep.subr.mxu0 0.0
    %2479 = vmatpush2.msra.mxu0 0.0
    %2480 = vmatprep.subr.mxu0 0.0
    %2481 = vmatpush2.msra.mxu0 0.0
    %2482 = vmatprep.subr.mxu0 0.0
    %2483 = vmatpush2.msra.mxu0 0.0
    %2484 = vmatprep.subr.mxu0 0.0
    %2485 = vmatpush2.msra.mxu0 0.0
    %2486 = vmatprep.subr.mxu0 0.0
    %2487 = vmatpush2.msra.mxu0 0.0
    %2488 = vmatprep.subr.mxu0 0.0
    %2489 = vmatpush2.msra.mxu0 0.0
    %2490 = vmatprep.subr.mxu0 0.0
    %2491 = vmatpush2.msra.mxu0 0.0
    %2492 = vmatprep.subr.mxu0 0.0
    %2493 = vmatpush2.msra.mxu0 0.0
    %2494 = vmatprep.mubr.f32.mxu0 0.0
    %2495 = vmatmul.mubr.f32.gmra.mxu0 %v2325
    %v2496 = vpop.f32.mrf.mxu0
    %v2497 = vadd.f32 %v2427, %v2496
    %v2498 = vpop.f32.mrf.mxu0
    %2499 = vdwg.mxu0
    %v2500 = vld [vmem:[#allocation21] sm:$0x1]
    %v2502 = vlaneseq
    %v2503 = vshrl.u32 %v2502, 7
    %v2504 = vsub.s32 0, %v2503
    %v2505 = vrot.slane %v2500, %v2504
    %v2507 = vadd.f32 %v2497, %v2505
    %v2508 = vmax.f32 %v2507, 0.0
    %v2509 = vld [vmem:[#allocation23] sm:$0xff]
    %v2510 = vld [vmem:[#allocation23 + $0x8] sm:$0xff]
    %v2511 = vld [vmem:[#allocation23 + $0x10] sm:$0xff]
    %v2512 = vld [vmem:[#allocation23 + $0x18] sm:$0xff]
    %v2513 = vld [vmem:[#allocation23 + $0x20] sm:$0xff]
    %v2514 = vld [vmem:[#allocation23 + $0x28] sm:$0xff]
    %v2515 = vld [vmem:[#allocation23 + $0x30] sm:$0xff]
    %v2516 = vld [vmem:[#allocation23 + $0x38] sm:$0xff]
    %v2517 = vld [vmem:[#allocation23 + $0x40] sm:$0xff]
    %v2518 = vld [vmem:[#allocation23 + $0x48] sm:$0xff]
    %v2519 = vld [vmem:[#allocation23 + $0x50] sm:$0xff]
    %v2520 = vld [vmem:[#allocation23 + $0x58] sm:$0xff]
    %v2521 = vld [vmem:[#allocation23 + $0x60] sm:$0xff]
    %v2522 = vld [vmem:[#allocation23 + $0x68] sm:$0xff]
    %v2523 = vld [vmem:[#allocation23 + $0x70] sm:$0xff]
    %v2524 = vld [vmem:[#allocation23 + $0x78] sm:$0xff]
    %v2525 = vld [vmem:[#allocation24] sm:$0x1]
    %v2527 = vlaneseq
    %v2528 = vshrl.u32 %v2527, 7
    %v2529 = vsub.s32 0, %v2528
    %v2530 = vrot.slane %v2525, %v2529
    %2532 = vmatprep.subr.mxu0 0.0
    %2533 = vmatpush1.msra.mxu0 %v2524
    %2534 = vmatprep.subr.mxu0 0.0
    %2535 = vmatpush1.msra.mxu0 %v2523
    %2536 = vmatprep.subr.mxu0 0.0
    %2537 = vmatpush1.msra.mxu0 %v2522
    %2538 = vmatprep.subr.mxu0 0.0
    %2539 = vmatpush1.msra.mxu0 %v2521
    %2540 = vmatprep.subr.mxu0 0.0
    %2541 = vmatpush1.msra.mxu0 %v2520
    %2542 = vmatprep.subr.mxu0 0.0
    %2543 = vmatpush1.msra.mxu0 %v2519
    %2544 = vmatprep.subr.mxu0 0.0
    %2545 = vmatpush1.msra.mxu0 %v2518
    %2546 = vmatprep.subr.mxu0 0.0
    %2547 = vmatpush1.msra.mxu0 %v2517
    %2548 = vmatprep.subr.mxu0 0.0
    %2549 = vmatpush1.msra.mxu0 %v2516
    %2550 = vmatprep.subr.mxu0 0.0
    %2551 = vmatpush1.msra.mxu0 %v2515
    %2552 = vmatprep.subr.mxu0 0.0
    %2553 = vmatpush1.msra.mxu0 %v2514
    %2554 = vmatprep.subr.mxu0 0.0
    %2555 = vmatpush1.msra.mxu0 %v2513
    %2556 = vmatprep.subr.mxu0 0.0
    %2557 = vmatpush1.msra.mxu0 %v2512
    %2558 = vmatprep.subr.mxu0 0.0
    %2559 = vmatpush1.msra.mxu0 %v2511
    %2560 = vmatprep.subr.mxu0 0.0
    %2561 = vmatpush1.msra.mxu0 %v2510
    %2562 = vmatprep.subr.mxu0 0.0
    %2563 = vmatpush1.msra.mxu0 %v2509
    %2564 = vmatprep.subr.mxu0 0.0
    %2565 = vmatpush2.msra.mxu0 0.0
    %2566 = vmatprep.subr.mxu0 0.0
    %2567 = vmatpush2.msra.mxu0 0.0
    %2568 = vmatprep.subr.mxu0 0.0
    %2569 = vmatpush2.msra.mxu0 0.0
    %2570 = vmatprep.subr.mxu0 0.0
    %2571 = vmatpush2.msra.mxu0 0.0
    %2572 = vmatprep.subr.mxu0 0.0
    %2573 = vmatpush2.msra.mxu0 0.0
    %2574 = vmatprep.subr.mxu0 0.0
    %2575 = vmatpush2.msra.mxu0 0.0
    %2576 = vmatprep.subr.mxu0 0.0
    %2577 = vmatpush2.msra.mxu0 0.0
    %2578 = vmatprep.subr.mxu0 0.0
    %2579 = vmatpush2.msra.mxu0 0.0
    %2580 = vmatprep.subr.mxu0 0.0
    %2581 = vmatpush2.msra.mxu0 0.0
    %2582 = vmatprep.subr.mxu0 0.0
    %2583 = vmatpush2.msra.mxu0 0.0
    %2584 = vmatprep.subr.mxu0 0.0
    %2585 = vmatpush2.msra.mxu0 0.0
    %2586 = vmatprep.subr.mxu0 0.0
    %2587 = vmatpush2.msra.mxu0 0.0
    %2588 = vmatprep.subr.mxu0 0.0
    %2589 = vmatpush2.msra.mxu0 0.0
    %2590 = vmatprep.subr.mxu0 0.0
    %2591 = vmatpush2.msra.mxu0 0.0
    %2592 = vmatprep.subr.mxu0 0.0
    %2593 = vmatpush2.msra.mxu0 0.0
    %2594 = vmatprep.subr.mxu0 0.0
    %2595 = vmatpush2.msra.mxu0 0.0
    %2596 = vmatprep.mubr.f32.mxu0 0.0
    %2597 = vmatmul.mubr.f32.gmra.mxu0 %v2508
    %v2598 = vpop.f32.mrf.mxu0
    %v2599 = vadd.f32 %v2530, %v2598
    %v2600 = vpop.f32.mrf.mxu0
    %2601 = vdwg.mxu0
    %vm2602 = vcmask 254976
    %2603 = vst.msk [vmem:[#allocation26] sm:$0x3] %vm2602, %v2599
    // Predicated region
    $region142: #{forward.1} parent=1 // pred_check
      _
    $region143: #{forward.1} parent=1 // pred_check_branch
      %2605 = sbr.rel (0) target = $region145
    $region144: #{forward.1} parent=1 // pred_region
      %s2607 = ssub.s32 32, 32
      %2608 = vsyncadd [#allocation8], %s2607
      %s2610 = sshll.u32 [#allocation26], 4
      %s2611 = int_to_ptr.vmem [resolvable:$true] %s2610
      %2613 = dma.vmem_to_hbm [thread:$0]  %s2611, 32, %s23, [#allocation8]
    $region145: #{forward.1} parent=1 // pred_fallthru
      _
    // Predicated region
    $region146: #{forward.1} parent=1 // pred_check
      _
    $region147: #{forward.1} parent=1 // pred_check_branch
      %2615 = sbr.rel (0) target = $region149
    $region148: #{forward.1} parent=1 // pred_region
      %2616 = dma.done [#allocation8], 32
    $region149: #{forward.1} parent=1 // pred_fallthru
      _
    %2617 = vsyncpa [#allocation7], 1
    %2618 = vsyncpa [#allocation10], 1
    %2619 = vsyncpa [#allocation13], 1
    %2620 = vsyncpa [#allocation16], 1
    %2621 = vsyncpa [#allocation19], 1
    %2622 = vsyncpa [#allocation22], 1
    %2623 = vsyncpa [#allocation25], 1
    %2624 = vsyncpa [#allocation8], 1

</llo_original>
